<compile_context>
chip_gen: v7x
topology: tpu7x:2x2x1
jax: 0.10.0
libtpu: 0.0.40
codegen_flags: <defaults>
</compile_context>

<pallas_src>
import jax
import jax.numpy as jnp
from jax import lax
from jax.experimental import pallas as pl
from jax.experimental.pallas import tpu as pltpu  # noqa: F401  (TPU backend)


def _make_kernel(N, H, W, Cin, Cout):
    H2, W2 = H // 2, W // 2
    rows = N * H * W2  # conv rows per w-parity, ordered (n, h, w2)

    def kernel(x_ref, w_ref, b_ref, o_ref):
        # x_ref: (2, N, H+2, W2+1, Cin)  padded NHWC input, W split by parity (w = 2*j + q)
        # w_ref: (9, Cin, Cout)          HWIO weights, taps flattened t = ky*3 + kx
        # b_ref: (1, Cout)
        # o_ref: (N, H2, W2, Cout)
        tap_cache = {}

        def tap(ky, q, b2):
            key = (ky, q, b2)
            if key not in tap_cache:
                # all-static slices; leading-dim slicing is free, the b2 in
                # {0,1} offset is a small sublane shift.
                t = x_ref[q:q + 1, :, ky:ky + H, b2:b2 + W2, :]  # (1,N,H,W2,Cin)
                # tile-aligned merge (W2 == one f32 sublane tile) -> no relayout
                tap_cache[key] = t.reshape(rows, Cin)
            return tap_cache[key]

        w_cache = {}

        def w_tap(t):
            if t not in w_cache:
                w_cache[t] = w_ref[t:t + 1, :, :].reshape(Cin, Cout)
            return w_cache[t]

        # Conv accumulated separately per output w-parity so that the stage-1
        # 2x2 pool (over w) is a plain elementwise max (no relayout).
        pooled_w = None
        for dw in (0, 1):
            acc = jnp.zeros((rows, Cout), jnp.float32)
            for ky in range(3):
                for kx in range(3):
                    q, b2 = (dw + kx) % 2, (dw + kx) // 2
                    acc = acc + jnp.dot(tap(ky, q, b2), w_tap(ky * 3 + kx),
                                        preferred_element_type=jnp.float32)
            pooled_w = acc if pooled_w is None else jnp.maximum(pooled_w, acc)

        # Stage-2 pool over h: adjacent h rows are adjacent W2-row (= one f32
        # sublane tile) blocks, so this reshape is tile-aligned.
        s = pooled_w.reshape(N * H2, 2, W2, Cout)
        p = jnp.maximum(s[:, 0], s[:, 1])                       # (N*H2, W2, Cout)

        # Bias + ReLU after pooling (commutes since ReLU(x+b) is monotone in x).
        p = jnp.maximum(p + b_ref[...].reshape(1, 1, Cout), 0.0)

        o_ref[...] = p.reshape(N, H2, W2, Cout).astype(o_ref.dtype)

    return kernel


@jax.jit
def conv_block_down(x_nchw, w_oihw, b):
    """Forward of ConvBlockDown. x_nchw: (N, Cin, H, W) -> (N, Cout, H//2, W//2)."""
    N, Cin, H, W = x_nchw.shape
    Cout = w_oihw.shape[0]
    assert H % 2 == 0 and W % 2 == 0
    H2, W2 = H // 2, W // 2

    # ---- light XLA glue: pad + W-parity split (no im2col, no padding to 128) -
    x_nhwc = jnp.transpose(x_nchw, (0, 2, 3, 1))                  # (N, H, W, Cin)
    x_pad = jnp.pad(x_nhwc, ((0, 0), (1, 1), (1, 1), (0, 0)))     # (N, H+2, W+2, Cin)
    x_sp = x_pad.reshape(N, H + 2, W2 + 1, 2, Cin)                # w = 2*j + q
    x_sp = jnp.transpose(x_sp, (3, 0, 1, 2, 4))                   # (2, N, H+2, W2+1, Cin)

    # weights: (Cout, Cin, 3, 3) -> (ky, kx, Cin, Cout) -> (9, Cin, Cout)
    w_t = jnp.transpose(w_oihw, (2, 3, 1, 0)).reshape(9, Cin, Cout)
    b_row = b.reshape(1, Cout)

    # Single grid-less pallas_call: whole problem (both images) in one
    # invocation, full arrays as the blocks (all tiny -> fits VMEM easily).
    out_nhwc = pl.pallas_call(
        _make_kernel(N, H, W, Cin, Cout),
        out_shape=jax.ShapeDtypeStruct((N, H2, W2, Cout), x_nchw.dtype),
    )(x_sp, w_t, b_row)

    # single small transpose back to NCHW
    return jnp.transpose(out_nhwc, (0, 3, 1, 2))


def _reference(x_nchw, w_oihw, b):
    y = lax.conv_general_dilated(
        x_nchw, w_oihw, window_strides=(1, 1), padding=((1, 1), (1, 1)),
        dimension_numbers=("NCHW", "OIHW", "NCHW"))
    y = y + b.reshape(1, -1, 1, 1)
    y = jnp.maximum(y, 0.0)
    y = lax.reduce_window(y, -jnp.inf, lax.max,
                          window_dimensions=(1, 1, 2, 2),
                          window_strides=(1, 1, 2, 2), padding="VALID")
    return y


if __name__ == "__main__":
    key = jax.random.PRNGKey(0)
    kx, kw, kb = jax.random.split(key, 3)

    N, Cin, Cout, H, W = 2, 4, 8, 16, 16
    x = jax.random.normal(kx, (N, Cin, H, W), jnp.float32)

    # Deterministic PyTorch-style uniform init, bound = 1/sqrt(fan_in)
    fan_in = Cin * 3 * 3
    bound = 1.0 / (fan_in ** 0.5)
    w = jax.random.uniform(kw, (Cout, Cin, 3, 3), jnp.float32, -bound, bound)
    b = jax.random.uniform(kb, (Cout,), jnp.float32, -bound, bound)

    out = jax.block_until_ready(conv_block_down(x, w, b))
    ref = _reference(x, w, b)

    assert out.shape == (N, Cout, H // 2, W // 2)
    if not bool(jnp.allclose(out, ref, atol=1e-4, rtol=1e-4)):
        raise AssertionError("Pallas kernel does not match reference")
    print("KERNEL_OK")
</pallas_src>

<mosaic_0001>
module attributes {stable_mosaic.version = 11 : i64} {
  func.func @kernel(%arg0: memref<2x2x18x9x4xf32, #tpu.memory_space<vmem>>, %arg1: memref<9x4x8xf32, #tpu.memory_space<vmem>>, %arg2: memref<1x8xf32, #tpu.memory_space<vmem>>, %arg3: memref<2x8x8x8xf32, #tpu.memory_space<vmem>>) attributes {dimension_semantics = [], scalar_prefetch = 0 : i64, scratch_operands = 0 : i64, tpu.core_type = #tpu.core_type<tc>} {
    %cst = arith.constant 0.000000e+00 : f32
    %0 = vector.broadcast %cst : f32 to vector<256x8xf32>
    %c0 = arith.constant 0 : index
    %c0_0 = arith.constant 0 : index
    %c0_1 = arith.constant 0 : index
    %c0_2 = arith.constant 0 : index
    %c0_3 = arith.constant 0 : index
    %1 = vector.load %arg0[%c0, %c0_0, %c0_1, %c0_2, %c0_3] : memref<2x2x18x9x4xf32, #tpu.memory_space<vmem>>, vector<1x2x16x8x4xf32>
    %2 = vector.shape_cast %1 : vector<1x2x16x8x4xf32> to vector<256x4xf32>
    %c0_4 = arith.constant 0 : index
    %c0_5 = arith.constant 0 : index
    %c0_6 = arith.constant 0 : index
    %3 = vector.load %arg1[%c0_4, %c0_5, %c0_6] : memref<9x4x8xf32, #tpu.memory_space<vmem>>, vector<1x4x8xf32>
    %4 = vector.shape_cast %3 : vector<1x4x8xf32> to vector<4x8xf32>
    %cst_7 = arith.constant dense<0.000000e+00> : vector<256x8xf32>
    %5 = tpu.matmul %2, %4, %cst_7 {dimension_numbers = #tpu.dot_dimension_numbers<[1], [0], [0], [1], [0, 0, 1, 1], [], []>} : vector<256x4xf32>, vector<4x8xf32>, vector<256x8xf32> -> vector<256x8xf32>
    %6 = arith.addf %0, %5 : vector<256x8xf32>
    %c1 = arith.constant 1 : index
    %c0_8 = arith.constant 0 : index
    %c0_9 = arith.constant 0 : index
    %c0_10 = arith.constant 0 : index
    %c0_11 = arith.constant 0 : index
    %7 = vector.load %arg0[%c1, %c0_8, %c0_9, %c0_10, %c0_11] : memref<2x2x18x9x4xf32, #tpu.memory_space<vmem>>, vector<1x2x16x8x4xf32>
    %8 = vector.shape_cast %7 : vector<1x2x16x8x4xf32> to vector<256x4xf32>
    %c1_12 = arith.constant 1 : index
    %c0_13 = arith.constant 0 : index
    %c0_14 = arith.constant 0 : index
    %9 = vector.load %arg1[%c1_12, %c0_13, %c0_14] : memref<9x4x8xf32, #tpu.memory_space<vmem>>, vector<1x4x8xf32>
    %10 = vector.shape_cast %9 : vector<1x4x8xf32> to vector<4x8xf32>
    %cst_15 = arith.constant dense<0.000000e+00> : vector<256x8xf32>
    %11 = tpu.matmul %8, %10, %cst_15 {dimension_numbers = #tpu.dot_dimension_numbers<[1], [0], [0], [1], [0, 0, 1, 1], [], []>} : vector<256x4xf32>, vector<4x8xf32>, vector<256x8xf32> -> vector<256x8xf32>
    %12 = arith.addf %6, %11 : vector<256x8xf32>
    %c0_16 = arith.constant 0 : index
    %c0_17 = arith.constant 0 : index
    %c0_18 = arith.constant 0 : index
    %c1_19 = arith.constant 1 : index
    %c0_20 = arith.constant 0 : index
    %13 = vector.load %arg0[%c0_16, %c0_17, %c0_18, %c1_19, %c0_20] : memref<2x2x18x9x4xf32, #tpu.memory_space<vmem>>, vector<1x2x16x8x4xf32>
    %14 = vector.shape_cast %13 : vector<1x2x16x8x4xf32> to vector<256x4xf32>
    %c2 = arith.constant 2 : index
    %c0_21 = arith.constant 0 : index
    %c0_22 = arith.constant 0 : index
    %15 = vector.load %arg1[%c2, %c0_21, %c0_22] : memref<9x4x8xf32, #tpu.memory_space<vmem>>, vector<1x4x8xf32>
    %16 = vector.shape_cast %15 : vector<1x4x8xf32> to vector<4x8xf32>
    %cst_23 = arith.constant dense<0.000000e+00> : vector<256x8xf32>
    %17 = tpu.matmul %14, %16, %cst_23 {dimension_numbers = #tpu.dot_dimension_numbers<[1], [0], [0], [1], [0, 0, 1, 1], [], []>} : vector<256x4xf32>, vector<4x8xf32>, vector<256x8xf32> -> vector<256x8xf32>
    %18 = arith.addf %12, %17 : vector<256x8xf32>
    %c0_24 = arith.constant 0 : index
    %c0_25 = arith.constant 0 : index
    %c1_26 = arith.constant 1 : index
    %c0_27 = arith.constant 0 : index
    %c0_28 = arith.constant 0 : index
    %19 = vector.load %arg0[%c0_24, %c0_25, %c1_26, %c0_27, %c0_28] : memref<2x2x18x9x4xf32, #tpu.memory_space<vmem>>, vector<1x2x16x8x4xf32>
    %20 = vector.shape_cast %19 : vector<1x2x16x8x4xf32> to vector<256x4xf32>
    %c3 = arith.constant 3 : index
    %c0_29 = arith.constant 0 : index
    %c0_30 = arith.constant 0 : index
    %21 = vector.load %arg1[%c3, %c0_29, %c0_30] : memref<9x4x8xf32, #tpu.memory_space<vmem>>, vector<1x4x8xf32>
    %22 = vector.shape_cast %21 : vector<1x4x8xf32> to vector<4x8xf32>
    %cst_31 = arith.constant dense<0.000000e+00> : vector<256x8xf32>
    %23 = tpu.matmul %20, %22, %cst_31 {dimension_numbers = #tpu.dot_dimension_numbers<[1], [0], [0], [1], [0, 0, 1, 1], [], []>} : vector<256x4xf32>, vector<4x8xf32>, vector<256x8xf32> -> vector<256x8xf32>
    %24 = arith.addf %18, %23 : vector<256x8xf32>
    %c1_32 = arith.constant 1 : index
    %c0_33 = arith.constant 0 : index
    %c1_34 = arith.constant 1 : index
    %c0_35 = arith.constant 0 : index
    %c0_36 = arith.constant 0 : index
    %25 = vector.load %arg0[%c1_32, %c0_33, %c1_34, %c0_35, %c0_36] : memref<2x2x18x9x4xf32, #tpu.memory_space<vmem>>, vector<1x2x16x8x4xf32>
    %26 = vector.shape_cast %25 : vector<1x2x16x8x4xf32> to vector<256x4xf32>
    %c4 = arith.constant 4 : index
    %c0_37 = arith.constant 0 : index
    %c0_38 = arith.constant 0 : index
    %27 = vector.load %arg1[%c4, %c0_37, %c0_38] : memref<9x4x8xf32, #tpu.memory_space<vmem>>, vector<1x4x8xf32>
    %28 = vector.shape_cast %27 : vector<1x4x8xf32> to vector<4x8xf32>
    %cst_39 = arith.constant dense<0.000000e+00> : vector<256x8xf32>
    %29 = tpu.matmul %26, %28, %cst_39 {dimension_numbers = #tpu.dot_dimension_numbers<[1], [0], [0], [1], [0, 0, 1, 1], [], []>} : vector<256x4xf32>, vector<4x8xf32>, vector<256x8xf32> -> vector<256x8xf32>
    %30 = arith.addf %24, %29 : vector<256x8xf32>
    %c0_40 = arith.constant 0 : index
    %c0_41 = arith.constant 0 : index
    %c1_42 = arith.constant 1 : index
    %c1_43 = arith.constant 1 : index
    %c0_44 = arith.constant 0 : index
    %31 = vector.load %arg0[%c0_40, %c0_41, %c1_42, %c1_43, %c0_44] : memref<2x2x18x9x4xf32, #tpu.memory_space<vmem>>, vector<1x2x16x8x4xf32>
    %32 = vector.shape_cast %31 : vector<1x2x16x8x4xf32> to vector<256x4xf32>
    %c5 = arith.constant 5 : index
    %c0_45 = arith.constant 0 : index
    %c0_46 = arith.constant 0 : index
    %33 = vector.load %arg1[%c5, %c0_45, %c0_46] : memref<9x4x8xf32, #tpu.memory_space<vmem>>, vector<1x4x8xf32>
    %34 = vector.shape_cast %33 : vector<1x4x8xf32> to vector<4x8xf32>
    %cst_47 = arith.constant dense<0.000000e+00> : vector<256x8xf32>
    %35 = tpu.matmul %32, %34, %cst_47 {dimension_numbers = #tpu.dot_dimension_numbers<[1], [0], [0], [1], [0, 0, 1, 1], [], []>} : vector<256x4xf32>, vector<4x8xf32>, vector<256x8xf32> -> vector<256x8xf32>
    %36 = arith.addf %30, %35 : vector<256x8xf32>
    %c0_48 = arith.constant 0 : index
    %c0_49 = arith.constant 0 : index
    %c2_50 = arith.constant 2 : index
    %c0_51 = arith.constant 0 : index
    %c0_52 = arith.constant 0 : index
    %37 = vector.load %arg0[%c0_48, %c0_49, %c2_50, %c0_51, %c0_52] : memref<2x2x18x9x4xf32, #tpu.memory_space<vmem>>, vector<1x2x16x8x4xf32>
    %38 = vector.shape_cast %37 : vector<1x2x16x8x4xf32> to vector<256x4xf32>
    %c6 = arith.constant 6 : index
    %c0_53 = arith.constant 0 : index
    %c0_54 = arith.constant 0 : index
    %39 = vector.load %arg1[%c6, %c0_53, %c0_54] : memref<9x4x8xf32, #tpu.memory_space<vmem>>, vector<1x4x8xf32>
    %40 = vector.shape_cast %39 : vector<1x4x8xf32> to vector<4x8xf32>
    %cst_55 = arith.constant dense<0.000000e+00> : vector<256x8xf32>
    %41 = tpu.matmul %38, %40, %cst_55 {dimension_numbers = #tpu.dot_dimension_numbers<[1], [0], [0], [1], [0, 0, 1, 1], [], []>} : vector<256x4xf32>, vector<4x8xf32>, vector<256x8xf32> -> vector<256x8xf32>
    %42 = arith.addf %36, %41 : vector<256x8xf32>
    %c1_56 = arith.constant 1 : index
    %c0_57 = arith.constant 0 : index
    %c2_58 = arith.constant 2 : index
    %c0_59 = arith.constant 0 : index
    %c0_60 = arith.constant 0 : index
    %43 = vector.load %arg0[%c1_56, %c0_57, %c2_58, %c0_59, %c0_60] : memref<2x2x18x9x4xf32, #tpu.memory_space<vmem>>, vector<1x2x16x8x4xf32>
    %44 = vector.shape_cast %43 : vector<1x2x16x8x4xf32> to vector<256x4xf32>
    %c7 = arith.constant 7 : index
    %c0_61 = arith.constant 0 : index
    %c0_62 = arith.constant 0 : index
    %45 = vector.load %arg1[%c7, %c0_61, %c0_62] : memref<9x4x8xf32, #tpu.memory_space<vmem>>, vector<1x4x8xf32>
    %46 = vector.shape_cast %45 : vector<1x4x8xf32> to vector<4x8xf32>
    %cst_63 = arith.constant dense<0.000000e+00> : vector<256x8xf32>
    %47 = tpu.matmul %44, %46, %cst_63 {dimension_numbers = #tpu.dot_dimension_numbers<[1], [0], [0], [1], [0, 0, 1, 1], [], []>} : vector<256x4xf32>, vector<4x8xf32>, vector<256x8xf32> -> vector<256x8xf32>
    %48 = arith.addf %42, %47 : vector<256x8xf32>
    %c0_64 = arith.constant 0 : index
    %c0_65 = arith.constant 0 : index
    %c2_66 = arith.constant 2 : index
    %c1_67 = arith.constant 1 : index
    %c0_68 = arith.constant 0 : index
    %49 = vector.load %arg0[%c0_64, %c0_65, %c2_66, %c1_67, %c0_68] : memref<2x2x18x9x4xf32, #tpu.memory_space<vmem>>, vector<1x2x16x8x4xf32>
    %50 = vector.shape_cast %49 : vector<1x2x16x8x4xf32> to vector<256x4xf32>
    %c8 = arith.constant 8 : index
    %c0_69 = arith.constant 0 : index
    %c0_70 = arith.constant 0 : index
    %51 = vector.load %arg1[%c8, %c0_69, %c0_70] : memref<9x4x8xf32, #tpu.memory_space<vmem>>, vector<1x4x8xf32>
    %52 = vector.shape_cast %51 : vector<1x4x8xf32> to vector<4x8xf32>
    %cst_71 = arith.constant dense<0.000000e+00> : vector<256x8xf32>
    %53 = tpu.matmul %50, %52, %cst_71 {dimension_numbers = #tpu.dot_dimension_numbers<[1], [0], [0], [1], [0, 0, 1, 1], [], []>} : vector<256x4xf32>, vector<4x8xf32>, vector<256x8xf32> -> vector<256x8xf32>
    %54 = arith.addf %48, %53 : vector<256x8xf32>
    %cst_72 = arith.constant 0.000000e+00 : f32
    %55 = vector.broadcast %cst_72 : f32 to vector<256x8xf32>
    %cst_73 = arith.constant dense<0.000000e+00> : vector<256x8xf32>
    %56 = tpu.matmul %8, %4, %cst_73 {dimension_numbers = #tpu.dot_dimension_numbers<[1], [0], [0], [1], [0, 0, 1, 1], [], []>} : vector<256x4xf32>, vector<4x8xf32>, vector<256x8xf32> -> vector<256x8xf32>
    %57 = arith.addf %55, %56 : vector<256x8xf32>
    %cst_74 = arith.constant dense<0.000000e+00> : vector<256x8xf32>
    %58 = tpu.matmul %14, %10, %cst_74 {dimension_numbers = #tpu.dot_dimension_numbers<[1], [0], [0], [1], [0, 0, 1, 1], [], []>} : vector<256x4xf32>, vector<4x8xf32>, vector<256x8xf32> -> vector<256x8xf32>
    %59 = arith.addf %57, %58 : vector<256x8xf32>
    %c1_75 = arith.constant 1 : index
    %c0_76 = arith.constant 0 : index
    %c0_77 = arith.constant 0 : index
    %c1_78 = arith.constant 1 : index
    %c0_79 = arith.constant 0 : index
    %60 = vector.load %arg0[%c1_75, %c0_76, %c0_77, %c1_78, %c0_79] : memref<2x2x18x9x4xf32, #tpu.memory_space<vmem>>, vector<1x2x16x8x4xf32>
    %61 = vector.shape_cast %60 : vector<1x2x16x8x4xf32> to vector<256x4xf32>
    %cst_80 = arith.constant dense<0.000000e+00> : vector<256x8xf32>
    %62 = tpu.matmul %61, %16, %cst_80 {dimension_numbers = #tpu.dot_dimension_numbers<[1], [0], [0], [1], [0, 0, 1, 1], [], []>} : vector<256x4xf32>, vector<4x8xf32>, vector<256x8xf32> -> vector<256x8xf32>
    %63 = arith.addf %59, %62 : vector<256x8xf32>
    %cst_81 = arith.constant dense<0.000000e+00> : vector<256x8xf32>
    %64 = tpu.matmul %26, %22, %cst_81 {dimension_numbers = #tpu.dot_dimension_numbers<[1], [0], [0], [1], [0, 0, 1, 1], [], []>} : vector<256x4xf32>, vector<4x8xf32>, vector<256x8xf32> -> vector<256x8xf32>
    %65 = arith.addf %63, %64 : vector<256x8xf32>
    %cst_82 = arith.constant dense<0.000000e+00> : vector<256x8xf32>
    %66 = tpu.matmul %32, %28, %cst_82 {dimension_numbers = #tpu.dot_dimension_numbers<[1], [0], [0], [1], [0, 0, 1, 1], [], []>} : vector<256x4xf32>, vector<4x8xf32>, vector<256x8xf32> -> vector<256x8xf32>
    %67 = arith.addf %65, %66 : vector<256x8xf32>
    %c1_83 = arith.constant 1 : index
    %c0_84 = arith.constant 0 : index
    %c1_85 = arith.constant 1 : index
    %c1_86 = arith.constant 1 : index
    %c0_87 = arith.constant 0 : index
    %68 = vector.load %arg0[%c1_83, %c0_84, %c1_85, %c1_86, %c0_87] : memref<2x2x18x9x4xf32, #tpu.memory_space<vmem>>, vector<1x2x16x8x4xf32>
    %69 = vector.shape_cast %68 : vector<1x2x16x8x4xf32> to vector<256x4xf32>
    %cst_88 = arith.constant dense<0.000000e+00> : vector<256x8xf32>
    %70 = tpu.matmul %69, %34, %cst_88 {dimension_numbers = #tpu.dot_dimension_numbers<[1], [0], [0], [1], [0, 0, 1, 1], [], []>} : vector<256x4xf32>, vector<4x8xf32>, vector<256x8xf32> -> vector<256x8xf32>
    %71 = arith.addf %67, %70 : vector<256x8xf32>
    %cst_89 = arith.constant dense<0.000000e+00> : vector<256x8xf32>
    %72 = tpu.matmul %44, %40, %cst_89 {dimension_numbers = #tpu.dot_dimension_numbers<[1], [0], [0], [1], [0, 0, 1, 1], [], []>} : vector<256x4xf32>, vector<4x8xf32>, vector<256x8xf32> -> vector<256x8xf32>
    %73 = arith.addf %71, %72 : vector<256x8xf32>
    %cst_90 = arith.constant dense<0.000000e+00> : vector<256x8xf32>
    %74 = tpu.matmul %50, %46, %cst_90 {dimension_numbers = #tpu.dot_dimension_numbers<[1], [0], [0], [1], [0, 0, 1, 1], [], []>} : vector<256x4xf32>, vector<4x8xf32>, vector<256x8xf32> -> vector<256x8xf32>
    %75 = arith.addf %73, %74 : vector<256x8xf32>
    %c1_91 = arith.constant 1 : index
    %c0_92 = arith.constant 0 : index
    %c2_93 = arith.constant 2 : index
    %c1_94 = arith.constant 1 : index
    %c0_95 = arith.constant 0 : index
    %76 = vector.load %arg0[%c1_91, %c0_92, %c2_93, %c1_94, %c0_95] : memref<2x2x18x9x4xf32, #tpu.memory_space<vmem>>, vector<1x2x16x8x4xf32>
    %77 = vector.shape_cast %76 : vector<1x2x16x8x4xf32> to vector<256x4xf32>
    %cst_96 = arith.constant dense<0.000000e+00> : vector<256x8xf32>
    %78 = tpu.matmul %77, %52, %cst_96 {dimension_numbers = #tpu.dot_dimension_numbers<[1], [0], [0], [1], [0, 0, 1, 1], [], []>} : vector<256x4xf32>, vector<4x8xf32>, vector<256x8xf32> -> vector<256x8xf32>
    %79 = arith.addf %75, %78 : vector<256x8xf32>
    %80 = arith.maximumf %54, %79 : vector<256x8xf32>
    %81 = vector.shape_cast %80 : vector<256x8xf32> to vector<16x2x8x8xf32>
    %82 = vector.extract_strided_slice %81 {offsets = [0, 0, 0, 0], sizes = [16, 1, 8, 8], strides = [1, 1, 1, 1]} : vector<16x2x8x8xf32> to vector<16x1x8x8xf32>
    %83 = vector.shape_cast %82 : vector<16x1x8x8xf32> to vector<16x8x8xf32>
    %84 = vector.extract_strided_slice %81 {offsets = [0, 1, 0, 0], sizes = [16, 1, 8, 8], strides = [1, 1, 1, 1]} : vector<16x2x8x8xf32> to vector<16x1x8x8xf32>
    %85 = vector.shape_cast %84 : vector<16x1x8x8xf32> to vector<16x8x8xf32>
    %86 = arith.maximumf %83, %85 : vector<16x8x8xf32>
    %c0_97 = arith.constant 0 : index
    %c0_98 = arith.constant 0 : index
    %87 = vector.load %arg2[%c0_97, %c0_98] : memref<1x8xf32, #tpu.memory_space<vmem>>, vector<1x8xf32>
    %88 = vector.shape_cast %87 : vector<1x8xf32> to vector<1x1x8xf32>
    %89 = vector.broadcast %88 : vector<1x1x8xf32> to vector<16x8x8xf32>
    %90 = arith.addf %86, %89 : vector<16x8x8xf32>
    %cst_99 = arith.constant 0.000000e+00 : f32
    %91 = vector.broadcast %cst_99 : f32 to vector<16x8x8xf32>
    %92 = arith.maximumf %90, %91 : vector<16x8x8xf32>
    %93 = vector.shape_cast %92 : vector<16x8x8xf32> to vector<2x8x8x8xf32>
    %c0_100 = arith.constant 0 : index
    %c0_101 = arith.constant 0 : index
    %c0_102 = arith.constant 0 : index
    %c0_103 = arith.constant 0 : index
    %94 = vector.load %arg3[%c0_100, %c0_101, %c0_102, %c0_103] : memref<2x8x8x8xf32, #tpu.memory_space<vmem>>, vector<2x8x8x8xf32>
    tpu.vector_store %arg3[%c0_100, %c0_101, %c0_102, %c0_103], %93 {strides = array<i32>} : memref<2x8x8x8xf32, #tpu.memory_space<vmem>>, vector<2x8x8x8xf32>,
    return
  }
}

</mosaic_0001>

<llo_original>
// kernel: conv_block_down.1
$region0: #{conv_block_down.1}
  #allocation0 [shape = 'u32[]', space=smem, size = 0x4, offset = 0x4, fixed_abs, tag = 'smem constant byte address 0x4 - core index']
  #allocation1 [shape = 'u32[144,128]{1,0:T(1,128)}', space=vmem, size = 0x12000, scoped, tag = 'internal scratch']
  %s0 = inlined_call_operand.vmem [shape: f32[2,2,18,9,4], index: 0, kind: input, shape index: {}]
  %s1 = inlined_call_operand.vmem [shape: f32[9,4,8], index: 1, kind: input, shape index: {}]
  %s2 = inlined_call_operand.vmem [shape: f32[1,8], index: 2, kind: input, shape index: {}]
  %s3 = inlined_call_operand.vmem [shape: f32[2,8,8,8], index: 3, kind: output, shape index: {}]
  %s4 = sld [smem:[#allocation0]]
  $region22: #{conv_block_down.1} parent=0
    _
  %s6 = ssub.s32 1, %s4
  %s7 = scalar_select 0, %s6, %s4
  // Predicated region
  $region2: #{conv_block_down.1} parent=0 // pred_check
    _
  $region3: #{conv_block_down.1} parent=0 // pred_check_branch
    %9 = sbr.rel (0) target = $region5
  $region4: #{conv_block_down.1} parent=0 // pred_region
    _
  $region5: #{conv_block_down.1} parent=0 // pred_fallthru
    _
  // Predicated region
  $region6: #{conv_block_down.1} parent=0 // pred_check
    _
  $region7: #{conv_block_down.1} parent=0 // pred_check_branch
    %11 = sbr.rel (0) target = $region9
  $region8: #{conv_block_down.1} parent=0 // pred_region
    _
  $region9: #{conv_block_down.1} parent=0 // pred_fallthru
    _
  // Predicated region
  $region10: #{conv_block_down.1} parent=0 // pred_check
    _
  $region11: #{conv_block_down.1} parent=0 // pred_check_branch
    %13 = sbr.rel (0) target = $region13
  $region12: #{conv_block_down.1} parent=0 // pred_region
    _
  $region13: #{conv_block_down.1} parent=0 // pred_fallthru
    _
  %v14 = vld [vmem:[%s0] sm:$0xff]
  %v15 = vld [vmem:[%s0 + $0x10] sm:$0xff]
  %v16 = vld [vmem:[%s0 + $0x20] sm:$0xff]
  %v17 = vld [vmem:[%s0 + $0x30] sm:$0xff]
  %v18 = vld [vmem:[%s0 + $0x40] sm:$0xff]
  %v19 = vld [vmem:[%s0 + $0x50] sm:$0xff]
  %v20 = vld [vmem:[%s0 + $0x60] sm:$0xff]
  %v21 = vld [vmem:[%s0 + $0x70] sm:$0xff]
  %v22 = vld [vmem:[%s0 + $0x80] sm:$0xff]
  %v23 = vld [vmem:[%s0 + $0x90] sm:$0xff]
  %v24 = vld [vmem:[%s0 + $0xa0] sm:$0xff]
  %v25 = vld [vmem:[%s0 + $0xb0] sm:$0xff]
  %v26 = vld [vmem:[%s0 + $0xc0] sm:$0xff]
  %v27 = vld [vmem:[%s0 + $0xd0] sm:$0xff]
  %v28 = vld [vmem:[%s0 + $0xe0] sm:$0xff]
  %v29 = vld [vmem:[%s0 + $0xf0] sm:$0xff]
  %v30 = vld [vmem:[%s0 + $0x120] sm:$0xff]
  %v31 = vld [vmem:[%s0 + $0x130] sm:$0xff]
  %v32 = vld [vmem:[%s0 + $0x140] sm:$0xff]
  %v33 = vld [vmem:[%s0 + $0x150] sm:$0xff]
  %v34 = vld [vmem:[%s0 + $0x160] sm:$0xff]
  %v35 = vld [vmem:[%s0 + $0x170] sm:$0xff]
  %v36 = vld [vmem:[%s0 + $0x180] sm:$0xff]
  %v37 = vld [vmem:[%s0 + $0x190] sm:$0xff]
  %v38 = vld [vmem:[%s0 + $0x1a0] sm:$0xff]
  %v39 = vld [vmem:[%s0 + $0x1b0] sm:$0xff]
  %v40 = vld [vmem:[%s0 + $0x1c0] sm:$0xff]
  %v41 = vld [vmem:[%s0 + $0x1d0] sm:$0xff]
  %v42 = vld [vmem:[%s0 + $0x1e0] sm:$0xff]
  %v43 = vld [vmem:[%s0 + $0x1f0] sm:$0xff]
  %v44 = vld [vmem:[%s0 + $0x200] sm:$0xff]
  %v45 = vld [vmem:[%s0 + $0x210] sm:$0xff]
  %v46 = vld [vmem:[%s1] sm:$0xf]
  %s47 = scalar_lea.vmem %s0, 576
  %v48 = vld [vmem:[%s47] sm:$0xff]
  %v49 = vld [vmem:[%s47 + $0x10] sm:$0xff]
  %v50 = vld [vmem:[%s47 + $0x20] sm:$0xff]
  %v51 = vld [vmem:[%s47 + $0x30] sm:$0xff]
  %v52 = vld [vmem:[%s47 + $0x40] sm:$0xff]
  %v53 = vld [vmem:[%s47 + $0x50] sm:$0xff]
  %v54 = vld [vmem:[%s47 + $0x60] sm:$0xff]
  %v55 = vld [vmem:[%s47 + $0x70] sm:$0xff]
  %v56 = vld [vmem:[%s47 + $0x80] sm:$0xff]
  %v57 = vld [vmem:[%s47 + $0x90] sm:$0xff]
  %v58 = vld [vmem:[%s47 + $0xa0] sm:$0xff]
  %v59 = vld [vmem:[%s47 + $0xb0] sm:$0xff]
  %v60 = vld [vmem:[%s47 + $0xc0] sm:$0xff]
  %v61 = vld [vmem:[%s47 + $0xd0] sm:$0xff]
  %v62 = vld [vmem:[%s47 + $0xe0] sm:$0xff]
  %v63 = vld [vmem:[%s47 + $0xf0] sm:$0xff]
  %v64 = vld [vmem:[%s47 + $0x120] sm:$0xff]
  %v65 = vld [vmem:[%s47 + $0x130] sm:$0xff]
  %v66 = vld [vmem:[%s47 + $0x140] sm:$0xff]
  %v67 = vld [vmem:[%s47 + $0x150] sm:$0xff]
  %v68 = vld [vmem:[%s47 + $0x160] sm:$0xff]
  %v69 = vld [vmem:[%s47 + $0x170] sm:$0xff]
  %v70 = vld [vmem:[%s47 + $0x180] sm:$0xff]
  %v71 = vld [vmem:[%s47 + $0x190] sm:$0xff]
  %v72 = vld [vmem:[%s47 + $0x1a0] sm:$0xff]
  %v73 = vld [vmem:[%s47 + $0x1b0] sm:$0xff]
  %v74 = vld [vmem:[%s47 + $0x1c0] sm:$0xff]
  %v75 = vld [vmem:[%s47 + $0x1d0] sm:$0xff]
  %v76 = vld [vmem:[%s47 + $0x1e0] sm:$0xff]
  %v77 = vld [vmem:[%s47 + $0x1f0] sm:$0xff]
  %v78 = vld [vmem:[%s47 + $0x200] sm:$0xff]
  %v79 = vld [vmem:[%s47 + $0x210] sm:$0xff]
  %s80 = scalar_lea.vmem %s1, 4
  %v81 = vld [vmem:[%s80] sm:$0xf]
  %vm82 = vcmask 31744
  %v84 = vsel %vm82, %v48, 0
  %v87 = vsel %vm82, %v49, 0
  %v90 = vsel %vm82, %v50, 0
  %v93 = vsel %vm82, %v51, 0
  %v96 = vsel %vm82, %v52, 0
  %v99 = vsel %vm82, %v53, 0
  %v102 = vsel %vm82, %v54, 0
  %v105 = vsel %vm82, %v55, 0
  %v108 = vsel %vm82, %v56, 0
  %v111 = vsel %vm82, %v57, 0
  %v114 = vsel %vm82, %v58, 0
  %v117 = vsel %vm82, %v59, 0
  %v120 = vsel %vm82, %v60, 0
  %v123 = vsel %vm82, %v61, 0
  %v126 = vsel %vm82, %v62, 0
  %v129 = vsel %vm82, %v63, 0
  %v132 = vsel %vm82, %v64, 0
  %v135 = vsel %vm82, %v65, 0
  %v138 = vsel %vm82, %v66, 0
  %v141 = vsel %vm82, %v67, 0
  %v144 = vsel %vm82, %v68, 0
  %v147 = vsel %vm82, %v69, 0
  %v150 = vsel %vm82, %v70, 0
  %v153 = vsel %vm82, %v71, 0
  %v156 = vsel %vm82, %v72, 0
  %v159 = vsel %vm82, %v73, 0
  %v162 = vsel %vm82, %v74, 0
  %v165 = vsel %vm82, %v75, 0
  %v168 = vsel %vm82, %v76, 0
  %v171 = vsel %vm82, %v77, 0
  %v174 = vsel %vm82, %v78, 0
  %v177 = vsel %vm82, %v79, 0
  %vm179 = vcmask 1043456
  %v181 = vsel %vm179, %v81, 0
  %183 = vmatprep.subr.mxu0 0.0
  %184 = vmatpush1.msra.mxu0 %v181
  %185 = vmatprep.subr.mxu0 0.0
  %186 = vmatpush1.msra.mxu0 0.0
  %187 = vmatprep.subr.mxu0 0.0
  %188 = vmatpush1.msra.mxu0 0.0
  %189 = vmatprep.subr.mxu0 0.0
  %190 = vmatpush1.msra.mxu0 0.0
  %191 = vmatprep.subr.mxu0 0.0
  %192 = vmatpush1.msra.mxu0 0.0
  %193 = vmatprep.subr.mxu0 0.0
  %194 = vmatpush1.msra.mxu0 0.0
  %195 = vmatprep.subr.mxu0 0.0
  %196 = vmatpush1.msra.mxu0 0.0
  %197 = vmatprep.subr.mxu0 0.0
  %198 = vmatpush1.msra.mxu0 0.0
  %199 = vmatprep.subr.mxu0 0.0
  %200 = vmatpush1.msra.mxu0 0.0
  %201 = vmatprep.subr.mxu0 0.0
  %202 = vmatpush1.msra.mxu0 0.0
  %203 = vmatprep.subr.mxu0 0.0
  %204 = vmatpush1.msra.mxu0 0.0
  %205 = vmatprep.subr.mxu0 0.0
  %206 = vmatpush1.msra.mxu0 0.0
  %207 = vmatprep.subr.mxu0 0.0
  %208 = vmatpush1.msra.mxu0 0.0
  %209 = vmatprep.subr.mxu0 0.0
  %210 = vmatpush1.msra.mxu0 0.0
  %211 = vmatprep.subr.mxu0 0.0
  %212 = vmatpush1.msra.mxu0 0.0
  %213 = vmatprep.subr.mxu0 0.0
  %214 = vmatpush1.msra.mxu0 0.0
  %215 = vmatprep.subr.mxu0 0.0
  %216 = vmatpush1.msra.mxu0 0.0
  %217 = vmatprep.subr.mxu0 0.0
  %218 = vmatpush1.msra.mxu0 0.0
  %219 = vmatprep.subr.mxu0 0.0
  %220 = vmatpush1.msra.mxu0 0.0
  %221 = vmatprep.subr.mxu0 0.0
  %222 = vmatpush1.msra.mxu0 0.0
  %223 = vmatprep.subr.mxu0 0.0
  %224 = vmatpush1.msra.mxu0 0.0
  %225 = vmatprep.subr.mxu0 0.0
  %226 = vmatpush1.msra.mxu0 0.0
  %227 = vmatprep.subr.mxu0 0.0
  %228 = vmatpush1.msra.mxu0 0.0
  %229 = vmatprep.subr.mxu0 0.0
  %230 = vmatpush1.msra.mxu0 0.0
  %231 = vmatprep.subr.mxu0 0.0
  %232 = vmatpush1.msra.mxu0 0.0
  %233 = vmatprep.subr.mxu0 0.0
  %234 = vmatpush1.msra.mxu0 0.0
  %235 = vmatprep.subr.mxu0 0.0
  %236 = vmatpush1.msra.mxu0 0.0
  %237 = vmatprep.subr.mxu0 0.0
  %238 = vmatpush1.msra.mxu0 0.0
  %239 = vmatprep.subr.mxu0 0.0
  %240 = vmatpush1.msra.mxu0 0.0
  %241 = vmatprep.subr.mxu0 0.0
  %242 = vmatpush1.msra.mxu0 0.0
  %243 = vmatprep.subr.mxu0 0.0
  %244 = vmatpush1.msra.mxu0 0.0
  %245 = vmatprep.subr.mxu0 0.0
  %246 = vmatpush1.msra.mxu0 0.0
  %247 = vmatprep.mubr.f32.mxu0 0.0
  %248 = vmatmul.mubr.f32.gmra.mrb[0].mxu0 %v84
  %v249 = vpop.f32.mrb[0].mxu0
  %v250 = vadd.f32 0.0, %v249
  %v251 = vpop.f32.mrb[0].mxu0
  %252 = vmatprep.mubr.f32.mxu0 0.0
  %253 = vmatmul.mubr.f32.gmra.mrb[0].mxu0 %v87
  %v254 = vpop.f32.mrb[0].mxu0
  %v255 = vadd.f32 0.0, %v254
  %v256 = vpop.f32.mrb[0].mxu0
  %257 = vmatprep.mubr.f32.mxu0 0.0
  %258 = vmatmul.mubr.f32.gmra.mrb[0].mxu0 %v90
  %v259 = vpop.f32.mrb[0].mxu0
  %v260 = vadd.f32 0.0, %v259
  %v261 = vpop.f32.mrb[0].mxu0
  %262 = vmatprep.mubr.f32.mxu0 0.0
  %263 = vmatmul.mubr.f32.gmra.mrb[0].mxu0 %v93
  %v264 = vpop.f32.mrb[0].mxu0
  %v265 = vadd.f32 0.0, %v264
  %v266 = vpop.f32.mrb[0].mxu0
  %267 = vmatprep.mubr.f32.mxu0 0.0
  %268 = vmatmul.mubr.f32.gmra.mrb[0].mxu0 %v96
  %v269 = vpop.f32.mrb[0].mxu0
  %v270 = vadd.f32 0.0, %v269
  %v271 = vpop.f32.mrb[0].mxu0
  %272 = vmatprep.mubr.f32.mxu0 0.0
  %273 = vmatmul.mubr.f32.gmra.mrb[0].mxu0 %v99
  %v274 = vpop.f32.mrb[0].mxu0
  %v275 = vadd.f32 0.0, %v274
  %v276 = vpop.f32.mrb[0].mxu0
  %277 = vmatprep.mubr.f32.mxu0 0.0
  %278 = vmatmul.mubr.f32.gmra.mrb[0].mxu0 %v102
  %v279 = vpop.f32.mrb[0].mxu0
  %v280 = vadd.f32 0.0, %v279
  %v281 = vpop.f32.mrb[0].mxu0
  %282 = vmatprep.mubr.f32.mxu0 0.0
  %283 = vmatmul.mubr.f32.gmra.mrb[0].mxu0 %v105
  %v284 = vpop.f32.mrb[0].mxu0
  %v285 = vadd.f32 0.0, %v284
  %v286 = vpop.f32.mrb[0].mxu0
  %287 = vmatprep.mubr.f32.mxu0 0.0
  %288 = vmatmul.mubr.f32.gmra.mrb[0].mxu0 %v108
  %v289 = vpop.f32.mrb[0].mxu0
  %v290 = vadd.f32 0.0, %v289
  %v291 = vpop.f32.mrb[0].mxu0
  %292 = vmatprep.mubr.f32.mxu0 0.0
  %293 = vmatmul.mubr.f32.gmra.mrb[0].mxu0 %v111
  %v294 = vpop.f32.mrb[0].mxu0
  %v295 = vadd.f32 0.0, %v294
  %v296 = vpop.f32.mrb[0].mxu0
  %297 = vmatprep.mubr.f32.mxu0 0.0
  %298 = vmatmul.mubr.f32.gmra.mrb[0].mxu0 %v114
  %v299 = vpop.f32.mrb[0].mxu0
  %v300 = vadd.f32 0.0, %v299
  %v301 = vpop.f32.mrb[0].mxu0
  %302 = vmatprep.mubr.f32.mxu0 0.0
  %303 = vmatmul.mubr.f32.gmra.mrb[0].mxu0 %v117
  %v304 = vpop.f32.mrb[0].mxu0
  %v305 = vadd.f32 0.0, %v304
  %v306 = vpop.f32.mrb[0].mxu0
  %307 = vmatprep.mubr.f32.mxu0 0.0
  %308 = vmatmul.mubr.f32.gmra.mrb[0].mxu0 %v120
  %v309 = vpop.f32.mrb[0].mxu0
  %v310 = vadd.f32 0.0, %v309
  %v311 = vpop.f32.mrb[0].mxu0
  %312 = vmatprep.mubr.f32.mxu0 0.0
  %313 = vmatmul.mubr.f32.gmra.mrb[0].mxu0 %v123
  %v314 = vpop.f32.mrb[0].mxu0
  %v315 = vadd.f32 0.0, %v314
  %v316 = vpop.f32.mrb[0].mxu0
  %317 = vmatprep.mubr.f32.mxu0 0.0
  %318 = vmatmul.mubr.f32.gmra.mrb[0].mxu0 %v126
  %v319 = vpop.f32.mrb[0].mxu0
  %v320 = vadd.f32 0.0, %v319
  %v321 = vpop.f32.mrb[0].mxu0
  %322 = vmatprep.mubr.f32.mxu0 0.0
  %323 = vmatmul.mubr.f32.gmra.mrb[0].mxu0 %v129
  %v324 = vpop.f32.mrb[0].mxu0
  %v325 = vadd.f32 0.0, %v324
  %v326 = vpop.f32.mrb[0].mxu0
  %327 = vmatprep.mubr.f32.mxu0 0.0
  %328 = vmatmul.mubr.f32.gmra.mrb[0].mxu0 %v132
  %v329 = vpop.f32.mrb[0].mxu0
  %v330 = vadd.f32 0.0, %v329
  %v331 = vpop.f32.mrb[0].mxu0
  %332 = vmatprep.mubr.f32.mxu0 0.0
  %333 = vmatmul.mubr.f32.gmra.mrb[0].mxu0 %v135
  %v334 = vpop.f32.mrb[0].mxu0
  %v335 = vadd.f32 0.0, %v334
  %v336 = vpop.f32.mrb[0].mxu0
  %337 = vmatprep.mubr.f32.mxu0 0.0
  %338 = vmatmul.mubr.f32.gmra.mrb[0].mxu0 %v138
  %v339 = vpop.f32.mrb[0].mxu0
  %v340 = vadd.f32 0.0, %v339
  %v341 = vpop.f32.mrb[0].mxu0
  %342 = vmatprep.mubr.f32.mxu0 0.0
  %343 = vmatmul.mubr.f32.gmra.mrb[0].mxu0 %v141
  %v344 = vpop.f32.mrb[0].mxu0
  %v345 = vadd.f32 0.0, %v344
  %v346 = vpop.f32.mrb[0].mxu0
  %347 = vmatprep.mubr.f32.mxu0 0.0
  %348 = vmatmul.mubr.f32.gmra.mrb[0].mxu0 %v144
  %v349 = vpop.f32.mrb[0].mxu0
  %v350 = vadd.f32 0.0, %v349
  %v351 = vpop.f32.mrb[0].mxu0
  %352 = vmatprep.mubr.f32.mxu0 0.0
  %353 = vmatmul.mubr.f32.gmra.mrb[0].mxu0 %v147
  %v354 = vpop.f32.mrb[0].mxu0
  %v355 = vadd.f32 0.0, %v354
  %v356 = vpop.f32.mrb[0].mxu0
  %357 = vmatprep.mubr.f32.mxu0 0.0
  %358 = vmatmul.mubr.f32.gmra.mrb[0].mxu0 %v150
  %v359 = vpop.f32.mrb[0].mxu0
  %v360 = vadd.f32 0.0, %v359
  %v361 = vpop.f32.mrb[0].mxu0
  %362 = vmatprep.mubr.f32.mxu0 0.0
  %363 = vmatmul.mubr.f32.gmra.mrb[0].mxu0 %v153
  %v364 = vpop.f32.mrb[0].mxu0
  %v365 = vadd.f32 0.0, %v364
  %v366 = vpop.f32.mrb[0].mxu0
  %367 = vmatprep.mubr.f32.mxu0 0.0
  %368 = vmatmul.mubr.f32.gmra.mrb[0].mxu0 %v156
  %v369 = vpop.f32.mrb[0].mxu0
  %v370 = vadd.f32 0.0, %v369
  %v371 = vpop.f32.mrb[0].mxu0
  %372 = vmatprep.mubr.f32.mxu0 0.0
  %373 = vmatmul.mubr.f32.gmra.mrb[0].mxu0 %v159
  %v374 = vpop.f32.mrb[0].mxu0
  %v375 = vadd.f32 0.0, %v374
  %v376 = vpop.f32.mrb[0].mxu0
  %377 = vmatprep.mubr.f32.mxu0 0.0
  %378 = vmatmul.mubr.f32.gmra.mrb[0].mxu0 %v162
  %v379 = vpop.f32.mrb[0].mxu0
  %v380 = vadd.f32 0.0, %v379
  %v381 = vpop.f32.mrb[0].mxu0
  %382 = vmatprep.mubr.f32.mxu0 0.0
  %383 = vmatmul.mubr.f32.gmra.mrb[0].mxu0 %v165
  %v384 = vpop.f32.mrb[0].mxu0
  %v385 = vadd.f32 0.0, %v384
  %v386 = vpop.f32.mrb[0].mxu0
  %387 = vmatprep.mubr.f32.mxu0 0.0
  %388 = vmatmul.mubr.f32.gmra.mrb[0].mxu0 %v168
  %v389 = vpop.f32.mrb[0].mxu0
  %v390 = vadd.f32 0.0, %v389
  %v391 = vpop.f32.mrb[0].mxu0
  %392 = vmatprep.mubr.f32.mxu0 0.0
  %393 = vmatmul.mubr.f32.gmra.mrb[0].mxu0 %v171
  %v394 = vpop.f32.mrb[0].mxu0
  %v395 = vadd.f32 0.0, %v394
  %v396 = vpop.f32.mrb[0].mxu0
  %397 = vmatprep.mubr.f32.mxu0 0.0
  %398 = vmatmul.mubr.f32.gmra.mrb[0].mxu0 %v174
  %v399 = vpop.f32.mrb[0].mxu0
  %v400 = vadd.f32 0.0, %v399
  %v401 = vpop.f32.mrb[0].mxu0
  %402 = vmatprep.mubr.f32.mxu0 0.0
  %403 = vmatmul.mubr.f32.gmra.mrb[0].mxu0 %v177
  %v404 = vpop.f32.mrb[0].mxu0
  %v405 = vadd.f32 0.0, %v404
  %v406 = vpop.f32.mrb[0].mxu0
  %407 = vdwg.mxu0
  %v409 = vsel %vm82, %v14, 0
  %v412 = vsel %vm82, %v15, 0
  %v415 = vsel %vm82, %v16, 0
  %v418 = vsel %vm82, %v17, 0
  %v421 = vsel %vm82, %v18, 0
  %v424 = vsel %vm82, %v19, 0
  %v427 = vsel %vm82, %v20, 0
  %v430 = vsel %vm82, %v21, 0
  %v433 = vsel %vm82, %v22, 0
  %v436 = vsel %vm82, %v23, 0
  %v439 = vsel %vm82, %v24, 0
  %v442 = vsel %vm82, %v25, 0
  %v445 = vsel %vm82, %v26, 0
  %v448 = vsel %vm82, %v27, 0
  %v451 = vsel %vm82, %v28, 0
  %v454 = vsel %vm82, %v29, 0
  %v457 = vsel %vm82, %v30, 0
  %v460 = vsel %vm82, %v31, 0
  %v463 = vsel %vm82, %v32, 0
  %v466 = vsel %vm82, %v33, 0
  %v469 = vsel %vm82, %v34, 0
  %v472 = vsel %vm82, %v35, 0
  %v475 = vsel %vm82, %v36, 0
  %v478 = vsel %vm82, %v37, 0
  %v481 = vsel %vm82, %v38, 0
  %v484 = vsel %vm82, %v39, 0
  %v487 = vsel %vm82, %v40, 0
  %v490 = vsel %vm82, %v41, 0
  %v493 = vsel %vm82, %v42, 0
  %v496 = vsel %vm82, %v43, 0
  %v499 = vsel %vm82, %v44, 0
  %v502 = vsel %vm82, %v45, 0
  %v505 = vsel %vm179, %v46, 0
  %507 = vmatprep.subr.mxu0 0.0
  %508 = vmatpush1.msra.mxu0 %v505
  %509 = vmatprep.subr.mxu0 0.0
  %510 = vmatpush1.msra.mxu0 0.0
  %511 = vmatprep.subr.mxu0 0.0
  %512 = vmatpush1.msra.mxu0 0.0
  %513 = vmatprep.subr.mxu0 0.0
  %514 = vmatpush1.msra.mxu0 0.0
  %515 = vmatprep.subr.mxu0 0.0
  %516 = vmatpush1.msra.mxu0 0.0
  %517 = vmatprep.subr.mxu0 0.0
  %518 = vmatpush1.msra.mxu0 0.0
  %519 = vmatprep.subr.mxu0 0.0
  %520 = vmatpush1.msra.mxu0 0.0
  %521 = vmatprep.subr.mxu0 0.0
  %522 = vmatpush1.msra.mxu0 0.0
  %523 = vmatprep.subr.mxu0 0.0
  %524 = vmatpush1.msra.mxu0 0.0
  %525 = vmatprep.subr.mxu0 0.0
  %526 = vmatpush1.msra.mxu0 0.0
  %527 = vmatprep.subr.mxu0 0.0
  %528 = vmatpush1.msra.mxu0 0.0
  %529 = vmatprep.subr.mxu0 0.0
  %530 = vmatpush1.msra.mxu0 0.0
  %531 = vmatprep.subr.mxu0 0.0
  %532 = vmatpush1.msra.mxu0 0.0
  %533 = vmatprep.subr.mxu0 0.0
  %534 = vmatpush1.msra.mxu0 0.0
  %535 = vmatprep.subr.mxu0 0.0
  %536 = vmatpush1.msra.mxu0 0.0
  %537 = vmatprep.subr.mxu0 0.0
  %538 = vmatpush1.msra.mxu0 0.0
  %539 = vmatprep.subr.mxu0 0.0
  %540 = vmatpush1.msra.mxu0 0.0
  %541 = vmatprep.subr.mxu0 0.0
  %542 = vmatpush1.msra.mxu0 0.0
  %543 = vmatprep.subr.mxu0 0.0
  %544 = vmatpush1.msra.mxu0 0.0
  %545 = vmatprep.subr.mxu0 0.0
  %546 = vmatpush1.msra.mxu0 0.0
  %547 = vmatprep.subr.mxu0 0.0
  %548 = vmatpush1.msra.mxu0 0.0
  %549 = vmatprep.subr.mxu0 0.0
  %550 = vmatpush1.msra.mxu0 0.0
  %551 = vmatprep.subr.mxu0 0.0
  %552 = vmatpush1.msra.mxu0 0.0
  %553 = vmatprep.subr.mxu0 0.0
  %554 = vmatpush1.msra.mxu0 0.0
  %555 = vmatprep.subr.mxu0 0.0
  %556 = vmatpush1.msra.mxu0 0.0
  %557 = vmatprep.subr.mxu0 0.0
  %558 = vmatpush1.msra.mxu0 0.0
  %559 = vmatprep.subr.mxu0 0.0
  %560 = vmatpush1.msra.mxu0 0.0
  %561 = vmatprep.subr.mxu0 0.0
  %562 = vmatpush1.msra.mxu0 0.0
  %563 = vmatprep.subr.mxu0 0.0
  %564 = vmatpush1.msra.mxu0 0.0
  %565 = vmatprep.subr.mxu0 0.0
  %566 = vmatpush1.msra.mxu0 0.0
  %567 = vmatprep.subr.mxu0 0.0
  %568 = vmatpush1.msra.mxu0 0.0
  %569 = vmatprep.subr.mxu0 0.0
  %570 = vmatpush1.msra.mxu0 0.0
  %571 = vmatprep.mubr.f32.mxu0 0.0
  %572 = vmatmul.mubr.f32.gmra.mrb[0].mxu0 %v409
  %v573 = vpop.f32.mrb[0].mxu0
  %v574 = vadd.f32 %v250, %v573
  %v575 = vpop.f32.mrb[0].mxu0
  %576 = vmatprep.mubr.f32.mxu0 0.0
  %577 = vmatmul.mubr.f32.gmra.mrb[0].mxu0 %v412
  %v578 = vpop.f32.mrb[0].mxu0
  %v579 = vadd.f32 %v255, %v578
  %v580 = vpop.f32.mrb[0].mxu0
  %581 = vmatprep.mubr.f32.mxu0 0.0
  %582 = vmatmul.mubr.f32.gmra.mrb[0].mxu0 %v415
  %v583 = vpop.f32.mrb[0].mxu0
  %v584 = vadd.f32 %v260, %v583
  %v585 = vpop.f32.mrb[0].mxu0
  %586 = vmatprep.mubr.f32.mxu0 0.0
  %587 = vmatmul.mubr.f32.gmra.mrb[0].mxu0 %v418
  %v588 = vpop.f32.mrb[0].mxu0
  %v589 = vadd.f32 %v265, %v588
  %v590 = vpop.f32.mrb[0].mxu0
  %591 = vmatprep.mubr.f32.mxu0 0.0
  %592 = vmatmul.mubr.f32.gmra.mrb[0].mxu0 %v421
  %v593 = vpop.f32.mrb[0].mxu0
  %v594 = vadd.f32 %v270, %v593
  %v595 = vpop.f32.mrb[0].mxu0
  %596 = vmatprep.mubr.f32.mxu0 0.0
  %597 = vmatmul.mubr.f32.gmra.mrb[0].mxu0 %v424
  %v598 = vpop.f32.mrb[0].mxu0
  %v599 = vadd.f32 %v275, %v598
  %v600 = vpop.f32.mrb[0].mxu0
  %601 = vmatprep.mubr.f32.mxu0 0.0
  %602 = vmatmul.mubr.f32.gmra.mrb[0].mxu0 %v427
  %v603 = vpop.f32.mrb[0].mxu0
  %v604 = vadd.f32 %v280, %v603
  %v605 = vpop.f32.mrb[0].mxu0
  %606 = vmatprep.mubr.f32.mxu0 0.0
  %607 = vmatmul.mubr.f32.gmra.mrb[0].mxu0 %v430
  %v608 = vpop.f32.mrb[0].mxu0
  %v609 = vadd.f32 %v285, %v608
  %v610 = vpop.f32.mrb[0].mxu0
  %611 = vmatprep.mubr.f32.mxu0 0.0
  %612 = vmatmul.mubr.f32.gmra.mrb[0].mxu0 %v433
  %v613 = vpop.f32.mrb[0].mxu0
  %v614 = vadd.f32 %v290, %v613
  %v615 = vpop.f32.mrb[0].mxu0
  %616 = vmatprep.mubr.f32.mxu0 0.0
  %617 = vmatmul.mubr.f32.gmra.mrb[0].mxu0 %v436
  %v618 = vpop.f32.mrb[0].mxu0
  %v619 = vadd.f32 %v295, %v618
  %v620 = vpop.f32.mrb[0].mxu0
  %621 = vmatprep.mubr.f32.mxu0 0.0
  %622 = vmatmul.mubr.f32.gmra.mrb[0].mxu0 %v439
  %v623 = vpop.f32.mrb[0].mxu0
  %v624 = vadd.f32 %v300, %v623
  %v625 = vpop.f32.mrb[0].mxu0
  %626 = vmatprep.mubr.f32.mxu0 0.0
  %627 = vmatmul.mubr.f32.gmra.mrb[0].mxu0 %v442
  %v628 = vpop.f32.mrb[0].mxu0
  %v629 = vadd.f32 %v305, %v628
  %v630 = vpop.f32.mrb[0].mxu0
  %631 = vmatprep.mubr.f32.mxu0 0.0
  %632 = vmatmul.mubr.f32.gmra.mrb[0].mxu0 %v445
  %v633 = vpop.f32.mrb[0].mxu0
  %v634 = vadd.f32 %v310, %v633
  %v635 = vpop.f32.mrb[0].mxu0
  %636 = vmatprep.mubr.f32.mxu0 0.0
  %637 = vmatmul.mubr.f32.gmra.mrb[0].mxu0 %v448
  %v638 = vpop.f32.mrb[0].mxu0
  %v639 = vadd.f32 %v315, %v638
  %v640 = vpop.f32.mrb[0].mxu0
  %641 = vmatprep.mubr.f32.mxu0 0.0
  %642 = vmatmul.mubr.f32.gmra.mrb[0].mxu0 %v451
  %v643 = vpop.f32.mrb[0].mxu0
  %v644 = vadd.f32 %v320, %v643
  %v645 = vpop.f32.mrb[0].mxu0
  %646 = vmatprep.mubr.f32.mxu0 0.0
  %647 = vmatmul.mubr.f32.gmra.mrb[0].mxu0 %v454
  %v648 = vpop.f32.mrb[0].mxu0
  %v649 = vadd.f32 %v325, %v648
  %v650 = vpop.f32.mrb[0].mxu0
  %651 = vmatprep.mubr.f32.mxu0 0.0
  %652 = vmatmul.mubr.f32.gmra.mrb[0].mxu0 %v457
  %v653 = vpop.f32.mrb[0].mxu0
  %v654 = vadd.f32 %v330, %v653
  %v655 = vpop.f32.mrb[0].mxu0
  %656 = vmatprep.mubr.f32.mxu0 0.0
  %657 = vmatmul.mubr.f32.gmra.mrb[0].mxu0 %v460
  %v658 = vpop.f32.mrb[0].mxu0
  %v659 = vadd.f32 %v335, %v658
  %v660 = vpop.f32.mrb[0].mxu0
  %661 = vmatprep.mubr.f32.mxu0 0.0
  %662 = vmatmul.mubr.f32.gmra.mrb[0].mxu0 %v463
  %v663 = vpop.f32.mrb[0].mxu0
  %v664 = vadd.f32 %v340, %v663
  %v665 = vpop.f32.mrb[0].mxu0
  %666 = vmatprep.mubr.f32.mxu0 0.0
  %667 = vmatmul.mubr.f32.gmra.mrb[0].mxu0 %v466
  %v668 = vpop.f32.mrb[0].mxu0
  %v669 = vadd.f32 %v345, %v668
  %v670 = vpop.f32.mrb[0].mxu0
  %671 = vmatprep.mubr.f32.mxu0 0.0
  %672 = vmatmul.mubr.f32.gmra.mrb[0].mxu0 %v469
  %v673 = vpop.f32.mrb[0].mxu0
  %v674 = vadd.f32 %v350, %v673
  %v675 = vpop.f32.mrb[0].mxu0
  %676 = vmatprep.mubr.f32.mxu0 0.0
  %677 = vmatmul.mubr.f32.gmra.mrb[0].mxu0 %v472
  %v678 = vpop.f32.mrb[0].mxu0
  %v679 = vadd.f32 %v355, %v678
  %v680 = vpop.f32.mrb[0].mxu0
  %681 = vmatprep.mubr.f32.mxu0 0.0
  %682 = vmatmul.mubr.f32.gmra.mrb[0].mxu0 %v475
  %v683 = vpop.f32.mrb[0].mxu0
  %v684 = vadd.f32 %v360, %v683
  %v685 = vpop.f32.mrb[0].mxu0
  %686 = vmatprep.mubr.f32.mxu0 0.0
  %687 = vmatmul.mubr.f32.gmra.mrb[0].mxu0 %v478
  %v688 = vpop.f32.mrb[0].mxu0
  %v689 = vadd.f32 %v365, %v688
  %v690 = vpop.f32.mrb[0].mxu0
  %691 = vmatprep.mubr.f32.mxu0 0.0
  %692 = vmatmul.mubr.f32.gmra.mrb[0].mxu0 %v481
  %v693 = vpop.f32.mrb[0].mxu0
  %v694 = vadd.f32 %v370, %v693
  %v695 = vpop.f32.mrb[0].mxu0
  %696 = vmatprep.mubr.f32.mxu0 0.0
  %697 = vmatmul.mubr.f32.gmra.mrb[0].mxu0 %v484
  %v698 = vpop.f32.mrb[0].mxu0
  %v699 = vadd.f32 %v375, %v698
  %v700 = vpop.f32.mrb[0].mxu0
  %701 = vmatprep.mubr.f32.mxu0 0.0
  %702 = vmatmul.mubr.f32.gmra.mrb[0].mxu0 %v487
  %v703 = vpop.f32.mrb[0].mxu0
  %v704 = vadd.f32 %v380, %v703
  %v705 = vpop.f32.mrb[0].mxu0
  %706 = vmatprep.mubr.f32.mxu0 0.0
  %707 = vmatmul.mubr.f32.gmra.mrb[0].mxu0 %v490
  %v708 = vpop.f32.mrb[0].mxu0
  %v709 = vadd.f32 %v385, %v708
  %v710 = vpop.f32.mrb[0].mxu0
  %711 = vmatprep.mubr.f32.mxu0 0.0
  %712 = vmatmul.mubr.f32.gmra.mrb[0].mxu0 %v493
  %v713 = vpop.f32.mrb[0].mxu0
  %v714 = vadd.f32 %v390, %v713
  %v715 = vpop.f32.mrb[0].mxu0
  %716 = vmatprep.mubr.f32.mxu0 0.0
  %717 = vmatmul.mubr.f32.gmra.mrb[0].mxu0 %v496
  %v718 = vpop.f32.mrb[0].mxu0
  %v719 = vadd.f32 %v395, %v718
  %v720 = vpop.f32.mrb[0].mxu0
  %721 = vmatprep.mubr.f32.mxu0 0.0
  %722 = vmatmul.mubr.f32.gmra.mrb[0].mxu0 %v499
  %v723 = vpop.f32.mrb[0].mxu0
  %v724 = vadd.f32 %v400, %v723
  %v725 = vpop.f32.mrb[0].mxu0
  %726 = vmatprep.mubr.f32.mxu0 0.0
  %727 = vmatmul.mubr.f32.gmra.mrb[0].mxu0 %v502
  %v728 = vpop.f32.mrb[0].mxu0
  %v729 = vadd.f32 %v405, %v728
  %v730 = vpop.f32.mrb[0].mxu0
  %731 = vdwg.mxu0
  %v732 = vld [vmem:[%s0 + $0x1] sm:$0xff]
  %v733 = vld [vmem:[%s0 + $0x11] sm:$0xff]
  %v734 = vld [vmem:[%s0 + $0x21] sm:$0xff]
  %v735 = vld [vmem:[%s0 + $0x31] sm:$0xff]
  %v736 = vld [vmem:[%s0 + $0x41] sm:$0xff]
  %v737 = vld [vmem:[%s0 + $0x51] sm:$0xff]
  %v738 = vld [vmem:[%s0 + $0x61] sm:$0xff]
  %v739 = vld [vmem:[%s0 + $0x71] sm:$0xff]
  %v740 = vld [vmem:[%s0 + $0x81] sm:$0xff]
  %v741 = vld [vmem:[%s0 + $0x91] sm:$0xff]
  %v742 = vld [vmem:[%s0 + $0xa1] sm:$0xff]
  %v743 = vld [vmem:[%s0 + $0xb1] sm:$0xff]
  %v744 = vld [vmem:[%s0 + $0xc1] sm:$0xff]
  %v745 = vld [vmem:[%s0 + $0xd1] sm:$0xff]
  %v746 = vld [vmem:[%s0 + $0xe1] sm:$0xff]
  %v747 = vld [vmem:[%s0 + $0xf1] sm:$0xff]
  %v748 = vld [vmem:[%s0 + $0x121] sm:$0xff]
  %v749 = vld [vmem:[%s0 + $0x131] sm:$0xff]
  %v750 = vld [vmem:[%s0 + $0x141] sm:$0xff]
  %v751 = vld [vmem:[%s0 + $0x151] sm:$0xff]
  %v752 = vld [vmem:[%s0 + $0x161] sm:$0xff]
  %v753 = vld [vmem:[%s0 + $0x171] sm:$0xff]
  %v754 = vld [vmem:[%s0 + $0x181] sm:$0xff]
  %v755 = vld [vmem:[%s0 + $0x191] sm:$0xff]
  %v756 = vld [vmem:[%s0 + $0x1a1] sm:$0xff]
  %v757 = vld [vmem:[%s0 + $0x1b1] sm:$0xff]
  %v758 = vld [vmem:[%s0 + $0x1c1] sm:$0xff]
  %v759 = vld [vmem:[%s0 + $0x1d1] sm:$0xff]
  %v760 = vld [vmem:[%s0 + $0x1e1] sm:$0xff]
  %v761 = vld [vmem:[%s0 + $0x1f1] sm:$0xff]
  %v762 = vld [vmem:[%s0 + $0x201] sm:$0xff]
  %v763 = vld [vmem:[%s0 + $0x211] sm:$0xff]
  %s764 = scalar_lea.vmem %s1, 8
  %v765 = vld [vmem:[%s764] sm:$0xf]
  %v767 = vsel %vm82, %v732, 0
  %v770 = vsel %vm82, %v733, 0
  %v773 = vsel %vm82, %v734, 0
  %v776 = vsel %vm82, %v735, 0
  %v779 = vsel %vm82, %v736, 0
  %v782 = vsel %vm82, %v737, 0
  %v785 = vsel %vm82, %v738, 0
  %v788 = vsel %vm82, %v739, 0
  %v791 = vsel %vm82, %v740, 0
  %v794 = vsel %vm82, %v741, 0
  %v797 = vsel %vm82, %v742, 0
  %v800 = vsel %vm82, %v743, 0
  %v803 = vsel %vm82, %v744, 0
  %v806 = vsel %vm82, %v745, 0
  %v809 = vsel %vm82, %v746, 0
  %v812 = vsel %vm82, %v747, 0
  %v815 = vsel %vm82, %v748, 0
  %v818 = vsel %vm82, %v749, 0
  %v821 = vsel %vm82, %v750, 0
  %v824 = vsel %vm82, %v751, 0
  %v827 = vsel %vm82, %v752, 0
  %v830 = vsel %vm82, %v753, 0
  %v833 = vsel %vm82, %v754, 0
  %v836 = vsel %vm82, %v755, 0
  %v839 = vsel %vm82, %v756, 0
  %v842 = vsel %vm82, %v757, 0
  %v845 = vsel %vm82, %v758, 0
  %v848 = vsel %vm82, %v759, 0
  %v851 = vsel %vm82, %v760, 0
  %v854 = vsel %vm82, %v761, 0
  %v857 = vsel %vm82, %v762, 0
  %v860 = vsel %vm82, %v763, 0
  %v863 = vsel %vm179, %v765, 0
  %865 = vmatprep.subr.mxu0 0.0
  %866 = vmatpush1.msra.mxu0 %v863
  %867 = vmatprep.subr.mxu0 0.0
  %868 = vmatpush1.msra.mxu0 0.0
  %869 = vmatprep.subr.mxu0 0.0
  %870 = vmatpush1.msra.mxu0 0.0
  %871 = vmatprep.subr.mxu0 0.0
  %872 = vmatpush1.msra.mxu0 0.0
  %873 = vmatprep.subr.mxu0 0.0
  %874 = vmatpush1.msra.mxu0 0.0
  %875 = vmatprep.subr.mxu0 0.0
  %876 = vmatpush1.msra.mxu0 0.0
  %877 = vmatprep.subr.mxu0 0.0
  %878 = vmatpush1.msra.mxu0 0.0
  %879 = vmatprep.subr.mxu0 0.0
  %880 = vmatpush1.msra.mxu0 0.0
  %881 = vmatprep.subr.mxu0 0.0
  %882 = vmatpush1.msra.mxu0 0.0
  %883 = vmatprep.subr.mxu0 0.0
  %884 = vmatpush1.msra.mxu0 0.0
  %885 = vmatprep.subr.mxu0 0.0
  %886 = vmatpush1.msra.mxu0 0.0
  %887 = vmatprep.subr.mxu0 0.0
  %888 = vmatpush1.msra.mxu0 0.0
  %889 = vmatprep.subr.mxu0 0.0
  %890 = vmatpush1.msra.mxu0 0.0
  %891 = vmatprep.subr.mxu0 0.0
  %892 = vmatpush1.msra.mxu0 0.0
  %893 = vmatprep.subr.mxu0 0.0
  %894 = vmatpush1.msra.mxu0 0.0
  %895 = vmatprep.subr.mxu0 0.0
  %896 = vmatpush1.msra.mxu0 0.0
  %897 = vmatprep.subr.mxu0 0.0
  %898 = vmatpush1.msra.mxu0 0.0
  %899 = vmatprep.subr.mxu0 0.0
  %900 = vmatpush1.msra.mxu0 0.0
  %901 = vmatprep.subr.mxu0 0.0
  %902 = vmatpush1.msra.mxu0 0.0
  %903 = vmatprep.subr.mxu0 0.0
  %904 = vmatpush1.msra.mxu0 0.0
  %905 = vmatprep.subr.mxu0 0.0
  %906 = vmatpush1.msra.mxu0 0.0
  %907 = vmatprep.subr.mxu0 0.0
  %908 = vmatpush1.msra.mxu0 0.0
  %909 = vmatprep.subr.mxu0 0.0
  %910 = vmatpush1.msra.mxu0 0.0
  %911 = vmatprep.subr.mxu0 0.0
  %912 = vmatpush1.msra.mxu0 0.0
  %913 = vmatprep.subr.mxu0 0.0
  %914 = vmatpush1.msra.mxu0 0.0
  %915 = vmatprep.subr.mxu0 0.0
  %916 = vmatpush1.msra.mxu0 0.0
  %917 = vmatprep.subr.mxu0 0.0
  %918 = vmatpush1.msra.mxu0 0.0
  %919 = vmatprep.subr.mxu0 0.0
  %920 = vmatpush1.msra.mxu0 0.0
  %921 = vmatprep.subr.mxu0 0.0
  %922 = vmatpush1.msra.mxu0 0.0
  %923 = vmatprep.subr.mxu0 0.0
  %924 = vmatpush1.msra.mxu0 0.0
  %925 = vmatprep.subr.mxu0 0.0
  %926 = vmatpush1.msra.mxu0 0.0
  %927 = vmatprep.subr.mxu0 0.0
  %928 = vmatpush1.msra.mxu0 0.0
  %929 = vmatprep.mubr.f32.mxu0 0.0
  %930 = vmatmul.mubr.f32.gmra.mrb[0].mxu0 %v767
  %v931 = vpop.f32.mrb[0].mxu0
  %v932 = vadd.f32 0.0, %v931
  %v933 = vpop.f32.mrb[0].mxu0
  %934 = vmatprep.mubr.f32.mxu0 0.0
  %935 = vmatmul.mubr.f32.gmra.mrb[0].mxu0 %v770
  %v936 = vpop.f32.mrb[0].mxu0
  %v937 = vadd.f32 0.0, %v936
  %v938 = vpop.f32.mrb[0].mxu0
  %939 = vmatprep.mubr.f32.mxu0 0.0
  %940 = vmatmul.mubr.f32.gmra.mrb[0].mxu0 %v773
  %v941 = vpop.f32.mrb[0].mxu0
  %v942 = vadd.f32 0.0, %v941
  %v943 = vpop.f32.mrb[0].mxu0
  %944 = vmatprep.mubr.f32.mxu0 0.0
  %945 = vmatmul.mubr.f32.gmra.mrb[0].mxu0 %v776
  %v946 = vpop.f32.mrb[0].mxu0
  %v947 = vadd.f32 0.0, %v946
  %v948 = vpop.f32.mrb[0].mxu0
  %949 = vmatprep.mubr.f32.mxu0 0.0
  %950 = vmatmul.mubr.f32.gmra.mrb[0].mxu0 %v779
  %v951 = vpop.f32.mrb[0].mxu0
  %v952 = vadd.f32 0.0, %v951
  %v953 = vpop.f32.mrb[0].mxu0
  %954 = vmatprep.mubr.f32.mxu0 0.0
  %955 = vmatmul.mubr.f32.gmra.mrb[0].mxu0 %v782
  %v956 = vpop.f32.mrb[0].mxu0
  %v957 = vadd.f32 0.0, %v956
  %v958 = vpop.f32.mrb[0].mxu0
  %959 = vmatprep.mubr.f32.mxu0 0.0
  %960 = vmatmul.mubr.f32.gmra.mrb[0].mxu0 %v785
  %v961 = vpop.f32.mrb[0].mxu0
  %v962 = vadd.f32 0.0, %v961
  %v963 = vpop.f32.mrb[0].mxu0
  %964 = vmatprep.mubr.f32.mxu0 0.0
  %965 = vmatmul.mubr.f32.gmra.mrb[0].mxu0 %v788
  %v966 = vpop.f32.mrb[0].mxu0
  %v967 = vadd.f32 0.0, %v966
  %v968 = vpop.f32.mrb[0].mxu0
  %969 = vmatprep.mubr.f32.mxu0 0.0
  %970 = vmatmul.mubr.f32.gmra.mrb[0].mxu0 %v791
  %v971 = vpop.f32.mrb[0].mxu0
  %v972 = vadd.f32 0.0, %v971
  %v973 = vpop.f32.mrb[0].mxu0
  %974 = vmatprep.mubr.f32.mxu0 0.0
  %975 = vmatmul.mubr.f32.gmra.mrb[0].mxu0 %v794
  %v976 = vpop.f32.mrb[0].mxu0
  %v977 = vadd.f32 0.0, %v976
  %v978 = vpop.f32.mrb[0].mxu0
  %979 = vmatprep.mubr.f32.mxu0 0.0
  %980 = vmatmul.mubr.f32.gmra.mrb[0].mxu0 %v797
  %v981 = vpop.f32.mrb[0].mxu0
  %v982 = vadd.f32 0.0, %v981
  %v983 = vpop.f32.mrb[0].mxu0
  %984 = vmatprep.mubr.f32.mxu0 0.0
  %985 = vmatmul.mubr.f32.gmra.mrb[0].mxu0 %v800
  %v986 = vpop.f32.mrb[0].mxu0
  %v987 = vadd.f32 0.0, %v986
  %v988 = vpop.f32.mrb[0].mxu0
  %989 = vmatprep.mubr.f32.mxu0 0.0
  %990 = vmatmul.mubr.f32.gmra.mrb[0].mxu0 %v803
  %v991 = vpop.f32.mrb[0].mxu0
  %v992 = vadd.f32 0.0, %v991
  %v993 = vpop.f32.mrb[0].mxu0
  %994 = vmatprep.mubr.f32.mxu0 0.0
  %995 = vmatmul.mubr.f32.gmra.mrb[0].mxu0 %v806
  %v996 = vpop.f32.mrb[0].mxu0
  %v997 = vadd.f32 0.0, %v996
  %v998 = vpop.f32.mrb[0].mxu0
  %999 = vmatprep.mubr.f32.mxu0 0.0
  %1000 = vmatmul.mubr.f32.gmra.mrb[0].mxu0 %v809
  %v1001 = vpop.f32.mrb[0].mxu0
  %v1002 = vadd.f32 0.0, %v1001
  %v1003 = vpop.f32.mrb[0].mxu0
  %1004 = vmatprep.mubr.f32.mxu0 0.0
  %1005 = vmatmul.mubr.f32.gmra.mrb[0].mxu0 %v812
  %v1006 = vpop.f32.mrb[0].mxu0
  %v1007 = vadd.f32 0.0, %v1006
  %v1008 = vpop.f32.mrb[0].mxu0
  %1009 = vmatprep.mubr.f32.mxu0 0.0
  %1010 = vmatmul.mubr.f32.gmra.mrb[0].mxu0 %v815
  %v1011 = vpop.f32.mrb[0].mxu0
  %v1012 = vadd.f32 0.0, %v1011
  %v1013 = vpop.f32.mrb[0].mxu0
  %1014 = vmatprep.mubr.f32.mxu0 0.0
  %1015 = vmatmul.mubr.f32.gmra.mrb[0].mxu0 %v818
  %v1016 = vpop.f32.mrb[0].mxu0
  %v1017 = vadd.f32 0.0, %v1016
  %v1018 = vpop.f32.mrb[0].mxu0
  %1019 = vmatprep.mubr.f32.mxu0 0.0
  %1020 = vmatmul.mubr.f32.gmra.mrb[0].mxu0 %v821
  %v1021 = vpop.f32.mrb[0].mxu0
  %v1022 = vadd.f32 0.0, %v1021
  %v1023 = vpop.f32.mrb[0].mxu0
  %1024 = vmatprep.mubr.f32.mxu0 0.0
  %1025 = vmatmul.mubr.f32.gmra.mrb[0].mxu0 %v824
  %v1026 = vpop.f32.mrb[0].mxu0
  %v1027 = vadd.f32 0.0, %v1026
  %v1028 = vpop.f32.mrb[0].mxu0
  %1029 = vmatprep.mubr.f32.mxu0 0.0
  %1030 = vmatmul.mubr.f32.gmra.mrb[0].mxu0 %v827
  %v1031 = vpop.f32.mrb[0].mxu0
  %v1032 = vadd.f32 0.0, %v1031
  %v1033 = vpop.f32.mrb[0].mxu0
  %1034 = vmatprep.mubr.f32.mxu0 0.0
  %1035 = vmatmul.mubr.f32.gmra.mrb[0].mxu0 %v830
  %v1036 = vpop.f32.mrb[0].mxu0
  %v1037 = vadd.f32 0.0, %v1036
  %v1038 = vpop.f32.mrb[0].mxu0
  %1039 = vmatprep.mubr.f32.mxu0 0.0
  %1040 = vmatmul.mubr.f32.gmra.mrb[0].mxu0 %v833
  %v1041 = vpop.f32.mrb[0].mxu0
  %v1042 = vadd.f32 0.0, %v1041
  %v1043 = vpop.f32.mrb[0].mxu0
  %1044 = vmatprep.mubr.f32.mxu0 0.0
  %1045 = vmatmul.mubr.f32.gmra.mrb[0].mxu0 %v836
  %v1046 = vpop.f32.mrb[0].mxu0
  %v1047 = vadd.f32 0.0, %v1046
  %v1048 = vpop.f32.mrb[0].mxu0
  %1049 = vmatprep.mubr.f32.mxu0 0.0
  %1050 = vmatmul.mubr.f32.gmra.mrb[0].mxu0 %v839
  %v1051 = vpop.f32.mrb[0].mxu0
  %v1052 = vadd.f32 0.0, %v1051
  %v1053 = vpop.f32.mrb[0].mxu0
  %1054 = vmatprep.mubr.f32.mxu0 0.0
  %1055 = vmatmul.mubr.f32.gmra.mrb[0].mxu0 %v842
  %v1056 = vpop.f32.mrb[0].mxu0
  %v1057 = vadd.f32 0.0, %v1056
  %v1058 = vpop.f32.mrb[0].mxu0
  %1059 = vmatprep.mubr.f32.mxu0 0.0
  %1060 = vmatmul.mubr.f32.gmra.mrb[0].mxu0 %v845
  %v1061 = vpop.f32.mrb[0].mxu0
  %v1062 = vadd.f32 0.0, %v1061
  %v1063 = vpop.f32.mrb[0].mxu0
  %1064 = vmatprep.mubr.f32.mxu0 0.0
  %1065 = vmatmul.mubr.f32.gmra.mrb[0].mxu0 %v848
  %v1066 = vpop.f32.mrb[0].mxu0
  %v1067 = vadd.f32 0.0, %v1066
  %v1068 = vpop.f32.mrb[0].mxu0
  %1069 = vmatprep.mubr.f32.mxu0 0.0
  %1070 = vmatmul.mubr.f32.gmra.mrb[0].mxu0 %v851
  %v1071 = vpop.f32.mrb[0].mxu0
  %v1072 = vadd.f32 0.0, %v1071
  %v1073 = vpop.f32.mrb[0].mxu0
  %1074 = vmatprep.mubr.f32.mxu0 0.0
  %1075 = vmatmul.mubr.f32.gmra.mrb[0].mxu0 %v854
  %v1076 = vpop.f32.mrb[0].mxu0
  %v1077 = vadd.f32 0.0, %v1076
  %v1078 = vpop.f32.mrb[0].mxu0
  %1079 = vmatprep.mubr.f32.mxu0 0.0
  %1080 = vmatmul.mubr.f32.gmra.mrb[0].mxu0 %v857
  %v1081 = vpop.f32.mrb[0].mxu0
  %v1082 = vadd.f32 0.0, %v1081
  %v1083 = vpop.f32.mrb[0].mxu0
  %1084 = vmatprep.mubr.f32.mxu0 0.0
  %1085 = vmatmul.mubr.f32.gmra.mrb[0].mxu0 %v860
  %v1086 = vpop.f32.mrb[0].mxu0
  %v1087 = vadd.f32 0.0, %v1086
  %v1088 = vpop.f32.mrb[0].mxu0
  %1089 = vdwg.mxu0
  %v1090 = vadd.f32 %v574, %v932
  %v1091 = vadd.f32 %v579, %v937
  %v1092 = vadd.f32 %v584, %v942
  %v1093 = vadd.f32 %v589, %v947
  %v1094 = vadd.f32 %v594, %v952
  %v1095 = vadd.f32 %v599, %v957
  %v1096 = vadd.f32 %v604, %v962
  %v1097 = vadd.f32 %v609, %v967
  %v1098 = vadd.f32 %v614, %v972
  %v1099 = vadd.f32 %v619, %v977
  %v1100 = vadd.f32 %v624, %v982
  %v1101 = vadd.f32 %v629, %v987
  %v1102 = vadd.f32 %v634, %v992
  %v1103 = vadd.f32 %v639, %v997
  %v1104 = vadd.f32 %v644, %v1002
  %v1105 = vadd.f32 %v649, %v1007
  %v1106 = vadd.f32 %v654, %v1012
  %v1107 = vadd.f32 %v659, %v1017
  %v1108 = vadd.f32 %v664, %v1022
  %v1109 = vadd.f32 %v669, %v1027
  %v1110 = vadd.f32 %v674, %v1032
  %v1111 = vadd.f32 %v679, %v1037
  %v1112 = vadd.f32 %v684, %v1042
  %v1113 = vadd.f32 %v689, %v1047
  %v1114 = vadd.f32 %v694, %v1052
  %v1115 = vadd.f32 %v699, %v1057
  %v1116 = vadd.f32 %v704, %v1062
  %v1117 = vadd.f32 %v709, %v1067
  %v1118 = vadd.f32 %v714, %v1072
  %v1119 = vadd.f32 %v719, %v1077
  %v1120 = vadd.f32 %v724, %v1082
  %v1121 = vadd.f32 %v729, %v1087
  %s1122 = scalar_lea.vmem %s0, 16
  %v1123 = vld [vmem:[%s1122] sm:$0xff]
  %v1124 = vld [vmem:[%s1122 + $0x10] sm:$0xff]
  %v1125 = vld [vmem:[%s1122 + $0x20] sm:$0xff]
  %v1126 = vld [vmem:[%s1122 + $0x30] sm:$0xff]
  %v1127 = vld [vmem:[%s1122 + $0x40] sm:$0xff]
  %v1128 = vld [vmem:[%s1122 + $0x50] sm:$0xff]
  %v1129 = vld [vmem:[%s1122 + $0x60] sm:$0xff]
  %v1130 = vld [vmem:[%s1122 + $0x70] sm:$0xff]
  %v1131 = vld [vmem:[%s1122 + $0x80] sm:$0xff]
  %v1132 = vld [vmem:[%s1122 + $0x90] sm:$0xff]
  %v1133 = vld [vmem:[%s1122 + $0xa0] sm:$0xff]
  %v1134 = vld [vmem:[%s1122 + $0xb0] sm:$0xff]
  %v1135 = vld [vmem:[%s1122 + $0xc0] sm:$0xff]
  %v1136 = vld [vmem:[%s1122 + $0xd0] sm:$0xff]
  %v1137 = vld [vmem:[%s1122 + $0xe0] sm:$0xff]
  %v1138 = vld [vmem:[%s1122 + $0xf0] sm:$0xff]
  %v1139 = vld [vmem:[%s1122 + $0x120] sm:$0xff]
  %v1140 = vld [vmem:[%s1122 + $0x130] sm:$0xff]
  %v1141 = vld [vmem:[%s1122 + $0x140] sm:$0xff]
  %v1142 = vld [vmem:[%s1122 + $0x150] sm:$0xff]
  %v1143 = vld [vmem:[%s1122 + $0x160] sm:$0xff]
  %v1144 = vld [vmem:[%s1122 + $0x170] sm:$0xff]
  %v1145 = vld [vmem:[%s1122 + $0x180] sm:$0xff]
  %v1146 = vld [vmem:[%s1122 + $0x190] sm:$0xff]
  %v1147 = vld [vmem:[%s1122 + $0x1a0] sm:$0xff]
  %v1148 = vld [vmem:[%s1122 + $0x1b0] sm:$0xff]
  %v1149 = vld [vmem:[%s1122 + $0x1c0] sm:$0xff]
  %v1150 = vld [vmem:[%s1122 + $0x1d0] sm:$0xff]
  %v1151 = vld [vmem:[%s1122 + $0x1e0] sm:$0xff]
  %v1152 = vld [vmem:[%s1122 + $0x1f0] sm:$0xff]
  %v1153 = vld [vmem:[%s1122 + $0x200] sm:$0xff]
  %v1154 = vld [vmem:[%s1122 + $0x210] sm:$0xff]
  %s1155 = scalar_lea.vmem %s1, 12
  %v1156 = vld [vmem:[%s1155] sm:$0xf]
  %v1158 = vsel %vm82, %v1123, 0
  %v1161 = vsel %vm82, %v1124, 0
  %v1164 = vsel %vm82, %v1125, 0
  %v1167 = vsel %vm82, %v1126, 0
  %v1170 = vsel %vm82, %v1127, 0
  %v1173 = vsel %vm82, %v1128, 0
  %v1176 = vsel %vm82, %v1129, 0
  %v1179 = vsel %vm82, %v1130, 0
  %v1182 = vsel %vm82, %v1131, 0
  %v1185 = vsel %vm82, %v1132, 0
  %v1188 = vsel %vm82, %v1133, 0
  %v1191 = vsel %vm82, %v1134, 0
  %v1194 = vsel %vm82, %v1135, 0
  %v1197 = vsel %vm82, %v1136, 0
  %v1200 = vsel %vm82, %v1137, 0
  %v1203 = vsel %vm82, %v1138, 0
  %v1206 = vsel %vm82, %v1139, 0
  %v1209 = vsel %vm82, %v1140, 0
  %v1212 = vsel %vm82, %v1141, 0
  %v1215 = vsel %vm82, %v1142, 0
  %v1218 = vsel %vm82, %v1143, 0
  %v1221 = vsel %vm82, %v1144, 0
  %v1224 = vsel %vm82, %v1145, 0
  %v1227 = vsel %vm82, %v1146, 0
  %v1230 = vsel %vm82, %v1147, 0
  %v1233 = vsel %vm82, %v1148, 0
  %v1236 = vsel %vm82, %v1149, 0
  %v1239 = vsel %vm82, %v1150, 0
  %v1242 = vsel %vm82, %v1151, 0
  %v1245 = vsel %vm82, %v1152, 0
  %v1248 = vsel %vm82, %v1153, 0
  %v1251 = vsel %vm82, %v1154, 0
  %v1254 = vsel %vm179, %v1156, 0
  %1256 = vmatprep.subr.mxu0 0.0
  %1257 = vmatpush1.msra.mxu0 %v1254
  %1258 = vmatprep.subr.mxu0 0.0
  %1259 = vmatpush1.msra.mxu0 0.0
  %1260 = vmatprep.subr.mxu0 0.0
  %1261 = vmatpush1.msra.mxu0 0.0
  %1262 = vmatprep.subr.mxu0 0.0
  %1263 = vmatpush1.msra.mxu0 0.0
  %1264 = vmatprep.subr.mxu0 0.0
  %1265 = vmatpush1.msra.mxu0 0.0
  %1266 = vmatprep.subr.mxu0 0.0
  %1267 = vmatpush1.msra.mxu0 0.0
  %1268 = vmatprep.subr.mxu0 0.0
  %1269 = vmatpush1.msra.mxu0 0.0
  %1270 = vmatprep.subr.mxu0 0.0
  %1271 = vmatpush1.msra.mxu0 0.0
  %1272 = vmatprep.subr.mxu0 0.0
  %1273 = vmatpush1.msra.mxu0 0.0
  %1274 = vmatprep.subr.mxu0 0.0
  %1275 = vmatpush1.msra.mxu0 0.0
  %1276 = vmatprep.subr.mxu0 0.0
  %1277 = vmatpush1.msra.mxu0 0.0
  %1278 = vmatprep.subr.mxu0 0.0
  %1279 = vmatpush1.msra.mxu0 0.0
  %1280 = vmatprep.subr.mxu0 0.0
  %1281 = vmatpush1.msra.mxu0 0.0
  %1282 = vmatprep.subr.mxu0 0.0
  %1283 = vmatpush1.msra.mxu0 0.0
  %1284 = vmatprep.subr.mxu0 0.0
  %1285 = vmatpush1.msra.mxu0 0.0
  %1286 = vmatprep.subr.mxu0 0.0
  %1287 = vmatpush1.msra.mxu0 0.0
  %1288 = vmatprep.subr.mxu0 0.0
  %1289 = vmatpush1.msra.mxu0 0.0
  %1290 = vmatprep.subr.mxu0 0.0
  %1291 = vmatpush1.msra.mxu0 0.0
  %1292 = vmatprep.subr.mxu0 0.0
  %1293 = vmatpush1.msra.mxu0 0.0
  %1294 = vmatprep.subr.mxu0 0.0
  %1295 = vmatpush1.msra.mxu0 0.0
  %1296 = vmatprep.subr.mxu0 0.0
  %1297 = vmatpush1.msra.mxu0 0.0
  %1298 = vmatprep.subr.mxu0 0.0
  %1299 = vmatpush1.msra.mxu0 0.0
  %1300 = vmatprep.subr.mxu0 0.0
  %1301 = vmatpush1.msra.mxu0 0.0
  %1302 = vmatprep.subr.mxu0 0.0
  %1303 = vmatpush1.msra.mxu0 0.0
  %1304 = vmatprep.subr.mxu0 0.0
  %1305 = vmatpush1.msra.mxu0 0.0
  %1306 = vmatprep.subr.mxu0 0.0
  %1307 = vmatpush1.msra.mxu0 0.0
  %1308 = vmatprep.subr.mxu0 0.0
  %1309 = vmatpush1.msra.mxu0 0.0
  %1310 = vmatprep.subr.mxu0 0.0
  %1311 = vmatpush1.msra.mxu0 0.0
  %1312 = vmatprep.subr.mxu0 0.0
  %1313 = vmatpush1.msra.mxu0 0.0
  %1314 = vmatprep.subr.mxu0 0.0
  %1315 = vmatpush1.msra.mxu0 0.0
  %1316 = vmatprep.subr.mxu0 0.0
  %1317 = vmatpush1.msra.mxu0 0.0
  %1318 = vmatprep.subr.mxu0 0.0
  %1319 = vmatpush1.msra.mxu0 0.0
  %1320 = vmatprep.mubr.f32.mxu0 0.0
  %1321 = vmatmul.mubr.f32.gmra.mrb[0].mxu0 %v1158
  %v1322 = vpop.f32.mrb[0].mxu0
  %v1323 = vadd.f32 0.0, %v1322
  %v1324 = vpop.f32.mrb[0].mxu0
  %1325 = vmatprep.mubr.f32.mxu0 0.0
  %1326 = vmatmul.mubr.f32.gmra.mrb[0].mxu0 %v1161
  %v1327 = vpop.f32.mrb[0].mxu0
  %v1328 = vadd.f32 0.0, %v1327
  %v1329 = vpop.f32.mrb[0].mxu0
  %1330 = vmatprep.mubr.f32.mxu0 0.0
  %1331 = vmatmul.mubr.f32.gmra.mrb[0].mxu0 %v1164
  %v1332 = vpop.f32.mrb[0].mxu0
  %v1333 = vadd.f32 0.0, %v1332
  %v1334 = vpop.f32.mrb[0].mxu0
  %1335 = vmatprep.mubr.f32.mxu0 0.0
  %1336 = vmatmul.mubr.f32.gmra.mrb[0].mxu0 %v1167
  %v1337 = vpop.f32.mrb[0].mxu0
  %v1338 = vadd.f32 0.0, %v1337
  %v1339 = vpop.f32.mrb[0].mxu0
  %1340 = vmatprep.mubr.f32.mxu0 0.0
  %1341 = vmatmul.mubr.f32.gmra.mrb[0].mxu0 %v1170
  %v1342 = vpop.f32.mrb[0].mxu0
  %v1343 = vadd.f32 0.0, %v1342
  %v1344 = vpop.f32.mrb[0].mxu0
  %1345 = vmatprep.mubr.f32.mxu0 0.0
  %1346 = vmatmul.mubr.f32.gmra.mrb[0].mxu0 %v1173
  %v1347 = vpop.f32.mrb[0].mxu0
  %v1348 = vadd.f32 0.0, %v1347
  %v1349 = vpop.f32.mrb[0].mxu0
  %1350 = vmatprep.mubr.f32.mxu0 0.0
  %1351 = vmatmul.mubr.f32.gmra.mrb[0].mxu0 %v1176
  %v1352 = vpop.f32.mrb[0].mxu0
  %v1353 = vadd.f32 0.0, %v1352
  %v1354 = vpop.f32.mrb[0].mxu0
  %1355 = vmatprep.mubr.f32.mxu0 0.0
  %1356 = vmatmul.mubr.f32.gmra.mrb[0].mxu0 %v1179
  %v1357 = vpop.f32.mrb[0].mxu0
  %v1358 = vadd.f32 0.0, %v1357
  %v1359 = vpop.f32.mrb[0].mxu0
  %1360 = vmatprep.mubr.f32.mxu0 0.0
  %1361 = vmatmul.mubr.f32.gmra.mrb[0].mxu0 %v1182
  %v1362 = vpop.f32.mrb[0].mxu0
  %v1363 = vadd.f32 0.0, %v1362
  %v1364 = vpop.f32.mrb[0].mxu0
  %1365 = vmatprep.mubr.f32.mxu0 0.0
  %1366 = vmatmul.mubr.f32.gmra.mrb[0].mxu0 %v1185
  %v1367 = vpop.f32.mrb[0].mxu0
  %v1368 = vadd.f32 0.0, %v1367
  %v1369 = vpop.f32.mrb[0].mxu0
  %1370 = vmatprep.mubr.f32.mxu0 0.0
  %1371 = vmatmul.mubr.f32.gmra.mrb[0].mxu0 %v1188
  %v1372 = vpop.f32.mrb[0].mxu0
  %v1373 = vadd.f32 0.0, %v1372
  %v1374 = vpop.f32.mrb[0].mxu0
  %1375 = vmatprep.mubr.f32.mxu0 0.0
  %1376 = vmatmul.mubr.f32.gmra.mrb[0].mxu0 %v1191
  %v1377 = vpop.f32.mrb[0].mxu0
  %v1378 = vadd.f32 0.0, %v1377
  %v1379 = vpop.f32.mrb[0].mxu0
  %1380 = vmatprep.mubr.f32.mxu0 0.0
  %1381 = vmatmul.mubr.f32.gmra.mrb[0].mxu0 %v1194
  %v1382 = vpop.f32.mrb[0].mxu0
  %v1383 = vadd.f32 0.0, %v1382
  %v1384 = vpop.f32.mrb[0].mxu0
  %1385 = vmatprep.mubr.f32.mxu0 0.0
  %1386 = vmatmul.mubr.f32.gmra.mrb[0].mxu0 %v1197
  %v1387 = vpop.f32.mrb[0].mxu0
  %v1388 = vadd.f32 0.0, %v1387
  %v1389 = vpop.f32.mrb[0].mxu0
  %1390 = vmatprep.mubr.f32.mxu0 0.0
  %1391 = vmatmul.mubr.f32.gmra.mrb[0].mxu0 %v1200
  %v1392 = vpop.f32.mrb[0].mxu0
  %v1393 = vadd.f32 0.0, %v1392
  %v1394 = vpop.f32.mrb[0].mxu0
  %1395 = vmatprep.mubr.f32.mxu0 0.0
  %1396 = vmatmul.mubr.f32.gmra.mrb[0].mxu0 %v1203
  %v1397 = vpop.f32.mrb[0].mxu0
  %v1398 = vadd.f32 0.0, %v1397
  %v1399 = vpop.f32.mrb[0].mxu0
  %1400 = vmatprep.mubr.f32.mxu0 0.0
  %1401 = vmatmul.mubr.f32.gmra.mrb[0].mxu0 %v1206
  %v1402 = vpop.f32.mrb[0].mxu0
  %v1403 = vadd.f32 0.0, %v1402
  %v1404 = vpop.f32.mrb[0].mxu0
  %1405 = vmatprep.mubr.f32.mxu0 0.0
  %1406 = vmatmul.mubr.f32.gmra.mrb[0].mxu0 %v1209
  %v1407 = vpop.f32.mrb[0].mxu0
  %v1408 = vadd.f32 0.0, %v1407
  %v1409 = vpop.f32.mrb[0].mxu0
  %1410 = vmatprep.mubr.f32.mxu0 0.0
  %1411 = vmatmul.mubr.f32.gmra.mrb[0].mxu0 %v1212
  %v1412 = vpop.f32.mrb[0].mxu0
  %v1413 = vadd.f32 0.0, %v1412
  %v1414 = vpop.f32.mrb[0].mxu0
  %1415 = vmatprep.mubr.f32.mxu0 0.0
  %1416 = vmatmul.mubr.f32.gmra.mrb[0].mxu0 %v1215
  %v1417 = vpop.f32.mrb[0].mxu0
  %v1418 = vadd.f32 0.0, %v1417
  %v1419 = vpop.f32.mrb[0].mxu0
  %1420 = vmatprep.mubr.f32.mxu0 0.0
  %1421 = vmatmul.mubr.f32.gmra.mrb[0].mxu0 %v1218
  %v1422 = vpop.f32.mrb[0].mxu0
  %v1423 = vadd.f32 0.0, %v1422
  %v1424 = vpop.f32.mrb[0].mxu0
  %1425 = vmatprep.mubr.f32.mxu0 0.0
  %1426 = vmatmul.mubr.f32.gmra.mrb[0].mxu0 %v1221
  %v1427 = vpop.f32.mrb[0].mxu0
  %v1428 = vadd.f32 0.0, %v1427
  %v1429 = vpop.f32.mrb[0].mxu0
  %1430 = vmatprep.mubr.f32.mxu0 0.0
  %1431 = vmatmul.mubr.f32.gmra.mrb[0].mxu0 %v1224
  %v1432 = vpop.f32.mrb[0].mxu0
  %v1433 = vadd.f32 0.0, %v1432
  %v1434 = vpop.f32.mrb[0].mxu0
  %1435 = vmatprep.mubr.f32.mxu0 0.0
  %1436 = vmatmul.mubr.f32.gmra.mrb[0].mxu0 %v1227
  %v1437 = vpop.f32.mrb[0].mxu0
  %v1438 = vadd.f32 0.0, %v1437
  %v1439 = vpop.f32.mrb[0].mxu0
  %1440 = vmatprep.mubr.f32.mxu0 0.0
  %1441 = vmatmul.mubr.f32.gmra.mrb[0].mxu0 %v1230
  %v1442 = vpop.f32.mrb[0].mxu0
  %v1443 = vadd.f32 0.0, %v1442
  %v1444 = vpop.f32.mrb[0].mxu0
  %1445 = vmatprep.mubr.f32.mxu0 0.0
  %1446 = vmatmul.mubr.f32.gmra.mrb[0].mxu0 %v1233
  %v1447 = vpop.f32.mrb[0].mxu0
  %v1448 = vadd.f32 0.0, %v1447
  %v1449 = vpop.f32.mrb[0].mxu0
  %1450 = vmatprep.mubr.f32.mxu0 0.0
  %1451 = vmatmul.mubr.f32.gmra.mrb[0].mxu0 %v1236
  %v1452 = vpop.f32.mrb[0].mxu0
  %v1453 = vadd.f32 0.0, %v1452
  %v1454 = vpop.f32.mrb[0].mxu0
  %1455 = vmatprep.mubr.f32.mxu0 0.0
  %1456 = vmatmul.mubr.f32.gmra.mrb[0].mxu0 %v1239
  %v1457 = vpop.f32.mrb[0].mxu0
  %v1458 = vadd.f32 0.0, %v1457
  %v1459 = vpop.f32.mrb[0].mxu0
  %1460 = vmatprep.mubr.f32.mxu0 0.0
  %1461 = vmatmul.mubr.f32.gmra.mrb[0].mxu0 %v1242
  %v1462 = vpop.f32.mrb[0].mxu0
  %v1463 = vadd.f32 0.0, %v1462
  %v1464 = vpop.f32.mrb[0].mxu0
  %1465 = vmatprep.mubr.f32.mxu0 0.0
  %1466 = vmatmul.mubr.f32.gmra.mrb[0].mxu0 %v1245
  %v1467 = vpop.f32.mrb[0].mxu0
  %v1468 = vadd.f32 0.0, %v1467
  %v1469 = vpop.f32.mrb[0].mxu0
  %1470 = vmatprep.mubr.f32.mxu0 0.0
  %1471 = vmatmul.mubr.f32.gmra.mrb[0].mxu0 %v1248
  %v1472 = vpop.f32.mrb[0].mxu0
  %v1473 = vadd.f32 0.0, %v1472
  %v1474 = vpop.f32.mrb[0].mxu0
  %1475 = vmatprep.mubr.f32.mxu0 0.0
  %1476 = vmatmul.mubr.f32.gmra.mrb[0].mxu0 %v1251
  %v1477 = vpop.f32.mrb[0].mxu0
  %v1478 = vadd.f32 0.0, %v1477
  %v1479 = vpop.f32.mrb[0].mxu0
  %1480 = vdwg.mxu0
  %v1481 = vadd.f32 %v1090, %v1323
  %v1482 = vadd.f32 %v1091, %v1328
  %v1483 = vadd.f32 %v1092, %v1333
  %v1484 = vadd.f32 %v1093, %v1338
  %v1485 = vadd.f32 %v1094, %v1343
  %v1486 = vadd.f32 %v1095, %v1348
  %v1487 = vadd.f32 %v1096, %v1353
  %v1488 = vadd.f32 %v1097, %v1358
  %v1489 = vadd.f32 %v1098, %v1363
  %v1490 = vadd.f32 %v1099, %v1368
  %v1491 = vadd.f32 %v1100, %v1373
  %v1492 = vadd.f32 %v1101, %v1378
  %v1493 = vadd.f32 %v1102, %v1383
  %v1494 = vadd.f32 %v1103, %v1388
  %v1495 = vadd.f32 %v1104, %v1393
  %v1496 = vadd.f32 %v1105, %v1398
  %v1497 = vadd.f32 %v1106, %v1403
  %v1498 = vadd.f32 %v1107, %v1408
  %v1499 = vadd.f32 %v1108, %v1413
  %v1500 = vadd.f32 %v1109, %v1418
  %v1501 = vadd.f32 %v1110, %v1423
  %v1502 = vadd.f32 %v1111, %v1428
  %v1503 = vadd.f32 %v1112, %v1433
  %v1504 = vadd.f32 %v1113, %v1438
  %v1505 = vadd.f32 %v1114, %v1443
  %v1506 = vadd.f32 %v1115, %v1448
  %v1507 = vadd.f32 %v1116, %v1453
  %v1508 = vadd.f32 %v1117, %v1458
  %v1509 = vadd.f32 %v1118, %v1463
  %v1510 = vadd.f32 %v1119, %v1468
  %v1511 = vadd.f32 %v1120, %v1473
  %v1512 = vadd.f32 %v1121, %v1478
  %s1513 = scalar_lea.vmem %s0, 592
  %v1514 = vld [vmem:[%s1513] sm:$0xff]
  %v1515 = vld [vmem:[%s1513 + $0x10] sm:$0xff]
  %v1516 = vld [vmem:[%s1513 + $0x20] sm:$0xff]
  %v1517 = vld [vmem:[%s1513 + $0x30] sm:$0xff]
  %v1518 = vld [vmem:[%s1513 + $0x40] sm:$0xff]
  %v1519 = vld [vmem:[%s1513 + $0x50] sm:$0xff]
  %v1520 = vld [vmem:[%s1513 + $0x60] sm:$0xff]
  %v1521 = vld [vmem:[%s1513 + $0x70] sm:$0xff]
  %v1522 = vld [vmem:[%s1513 + $0x80] sm:$0xff]
  %v1523 = vld [vmem:[%s1513 + $0x90] sm:$0xff]
  %v1524 = vld [vmem:[%s1513 + $0xa0] sm:$0xff]
  %v1525 = vld [vmem:[%s1513 + $0xb0] sm:$0xff]
  %v1526 = vld [vmem:[%s1513 + $0xc0] sm:$0xff]
  %v1527 = vld [vmem:[%s1513 + $0xd0] sm:$0xff]
  %v1528 = vld [vmem:[%s1513 + $0xe0] sm:$0xff]
  %v1529 = vld [vmem:[%s1513 + $0xf0] sm:$0xff]
  %v1530 = vld [vmem:[%s1513 + $0x120] sm:$0xff]
  %v1531 = vld [vmem:[%s1513 + $0x130] sm:$0xff]
  %v1532 = vld [vmem:[%s1513 + $0x140] sm:$0xff]
  %v1533 = vld [vmem:[%s1513 + $0x150] sm:$0xff]
  %v1534 = vld [vmem:[%s1513 + $0x160] sm:$0xff]
  %v1535 = vld [vmem:[%s1513 + $0x170] sm:$0xff]
  %v1536 = vld [vmem:[%s1513 + $0x180] sm:$0xff]
  %v1537 = vld [vmem:[%s1513 + $0x190] sm:$0xff]
  %v1538 = vld [vmem:[%s1513 + $0x1a0] sm:$0xff]
  %v1539 = vld [vmem:[%s1513 + $0x1b0] sm:$0xff]
  %v1540 = vld [vmem:[%s1513 + $0x1c0] sm:$0xff]
  %v1541 = vld [vmem:[%s1513 + $0x1d0] sm:$0xff]
  %v1542 = vld [vmem:[%s1513 + $0x1e0] sm:$0xff]
  %v1543 = vld [vmem:[%s1513 + $0x1f0] sm:$0xff]
  %v1544 = vld [vmem:[%s1513 + $0x200] sm:$0xff]
  %v1545 = vld [vmem:[%s1513 + $0x210] sm:$0xff]
  %s1546 = scalar_lea.vmem %s1, 16
  %v1547 = vld [vmem:[%s1546] sm:$0xf]
  %v1549 = vsel %vm82, %v1514, 0
  %v1552 = vsel %vm82, %v1515, 0
  %v1555 = vsel %vm82, %v1516, 0
  %v1558 = vsel %vm82, %v1517, 0
  %v1561 = vsel %vm82, %v1518, 0
  %v1564 = vsel %vm82, %v1519, 0
  %v1567 = vsel %vm82, %v1520, 0
  %v1570 = vsel %vm82, %v1521, 0
  %v1573 = vsel %vm82, %v1522, 0
  %v1576 = vsel %vm82, %v1523, 0
  %v1579 = vsel %vm82, %v1524, 0
  %v1582 = vsel %vm82, %v1525, 0
  %v1585 = vsel %vm82, %v1526, 0
  %v1588 = vsel %vm82, %v1527, 0
  %v1591 = vsel %vm82, %v1528, 0
  %v1594 = vsel %vm82, %v1529, 0
  %v1597 = vsel %vm82, %v1530, 0
  %v1600 = vsel %vm82, %v1531, 0
  %v1603 = vsel %vm82, %v1532, 0
  %v1606 = vsel %vm82, %v1533, 0
  %v1609 = vsel %vm82, %v1534, 0
  %v1612 = vsel %vm82, %v1535, 0
  %v1615 = vsel %vm82, %v1536, 0
  %v1618 = vsel %vm82, %v1537, 0
  %v1621 = vsel %vm82, %v1538, 0
  %v1624 = vsel %vm82, %v1539, 0
  %v1627 = vsel %vm82, %v1540, 0
  %v1630 = vsel %vm82, %v1541, 0
  %v1633 = vsel %vm82, %v1542, 0
  %v1636 = vsel %vm82, %v1543, 0
  %v1639 = vsel %vm82, %v1544, 0
  %v1642 = vsel %vm82, %v1545, 0
  %v1645 = vsel %vm179, %v1547, 0
  %1647 = vmatprep.subr.mxu0 0.0
  %1648 = vmatpush1.msra.mxu0 %v1645
  %1649 = vmatprep.subr.mxu0 0.0
  %1650 = vmatpush1.msra.mxu0 0.0
  %1651 = vmatprep.subr.mxu0 0.0
  %1652 = vmatpush1.msra.mxu0 0.0
  %1653 = vmatprep.subr.mxu0 0.0
  %1654 = vmatpush1.msra.mxu0 0.0
  %1655 = vmatprep.subr.mxu0 0.0
  %1656 = vmatpush1.msra.mxu0 0.0
  %1657 = vmatprep.subr.mxu0 0.0
  %1658 = vmatpush1.msra.mxu0 0.0
  %1659 = vmatprep.subr.mxu0 0.0
  %1660 = vmatpush1.msra.mxu0 0.0
  %1661 = vmatprep.subr.mxu0 0.0
  %1662 = vmatpush1.msra.mxu0 0.0
  %1663 = vmatprep.subr.mxu0 0.0
  %1664 = vmatpush1.msra.mxu0 0.0
  %1665 = vmatprep.subr.mxu0 0.0
  %1666 = vmatpush1.msra.mxu0 0.0
  %1667 = vmatprep.subr.mxu0 0.0
  %1668 = vmatpush1.msra.mxu0 0.0
  %1669 = vmatprep.subr.mxu0 0.0
  %1670 = vmatpush1.msra.mxu0 0.0
  %1671 = vmatprep.subr.mxu0 0.0
  %1672 = vmatpush1.msra.mxu0 0.0
  %1673 = vmatprep.subr.mxu0 0.0
  %1674 = vmatpush1.msra.mxu0 0.0
  %1675 = vmatprep.subr.mxu0 0.0
  %1676 = vmatpush1.msra.mxu0 0.0
  %1677 = vmatprep.subr.mxu0 0.0
  %1678 = vmatpush1.msra.mxu0 0.0
  %1679 = vmatprep.subr.mxu0 0.0
  %1680 = vmatpush1.msra.mxu0 0.0
  %1681 = vmatprep.subr.mxu0 0.0
  %1682 = vmatpush1.msra.mxu0 0.0
  %1683 = vmatprep.subr.mxu0 0.0
  %1684 = vmatpush1.msra.mxu0 0.0
  %1685 = vmatprep.subr.mxu0 0.0
  %1686 = vmatpush1.msra.mxu0 0.0
  %1687 = vmatprep.subr.mxu0 0.0
  %1688 = vmatpush1.msra.mxu0 0.0
  %1689 = vmatprep.subr.mxu0 0.0
  %1690 = vmatpush1.msra.mxu0 0.0
  %1691 = vmatprep.subr.mxu0 0.0
  %1692 = vmatpush1.msra.mxu0 0.0
  %1693 = vmatprep.subr.mxu0 0.0
  %1694 = vmatpush1.msra.mxu0 0.0
  %1695 = vmatprep.subr.mxu0 0.0
  %1696 = vmatpush1.msra.mxu0 0.0
  %1697 = vmatprep.subr.mxu0 0.0
  %1698 = vmatpush1.msra.mxu0 0.0
  %1699 = vmatprep.subr.mxu0 0.0
  %1700 = vmatpush1.msra.mxu0 0.0
  %1701 = vmatprep.subr.mxu0 0.0
  %1702 = vmatpush1.msra.mxu0 0.0
  %1703 = vmatprep.subr.mxu0 0.0
  %1704 = vmatpush1.msra.mxu0 0.0
  %1705 = vmatprep.subr.mxu0 0.0
  %1706 = vmatpush1.msra.mxu0 0.0
  %1707 = vmatprep.subr.mxu0 0.0
  %1708 = vmatpush1.msra.mxu0 0.0
  %1709 = vmatprep.subr.mxu0 0.0
  %1710 = vmatpush1.msra.mxu0 0.0
  %1711 = vmatprep.mubr.f32.mxu0 0.0
  %1712 = vmatmul.mubr.f32.gmra.mrb[0].mxu0 %v1549
  %v1713 = vpop.f32.mrb[0].mxu0
  %v1714 = vadd.f32 0.0, %v1713
  %v1715 = vpop.f32.mrb[0].mxu0
  %1716 = vmatprep.mubr.f32.mxu0 0.0
  %1717 = vmatmul.mubr.f32.gmra.mrb[0].mxu0 %v1552
  %v1718 = vpop.f32.mrb[0].mxu0
  %v1719 = vadd.f32 0.0, %v1718
  %v1720 = vpop.f32.mrb[0].mxu0
  %1721 = vmatprep.mubr.f32.mxu0 0.0
  %1722 = vmatmul.mubr.f32.gmra.mrb[0].mxu0 %v1555
  %v1723 = vpop.f32.mrb[0].mxu0
  %v1724 = vadd.f32 0.0, %v1723
  %v1725 = vpop.f32.mrb[0].mxu0
  %1726 = vmatprep.mubr.f32.mxu0 0.0
  %1727 = vmatmul.mubr.f32.gmra.mrb[0].mxu0 %v1558
  %v1728 = vpop.f32.mrb[0].mxu0
  %v1729 = vadd.f32 0.0, %v1728
  %v1730 = vpop.f32.mrb[0].mxu0
  %1731 = vmatprep.mubr.f32.mxu0 0.0
  %1732 = vmatmul.mubr.f32.gmra.mrb[0].mxu0 %v1561
  %v1733 = vpop.f32.mrb[0].mxu0
  %v1734 = vadd.f32 0.0, %v1733
  %v1735 = vpop.f32.mrb[0].mxu0
  %1736 = vmatprep.mubr.f32.mxu0 0.0
  %1737 = vmatmul.mubr.f32.gmra.mrb[0].mxu0 %v1564
  %v1738 = vpop.f32.mrb[0].mxu0
  %v1739 = vadd.f32 0.0, %v1738
  %v1740 = vpop.f32.mrb[0].mxu0
  %1741 = vmatprep.mubr.f32.mxu0 0.0
  %1742 = vmatmul.mubr.f32.gmra.mrb[0].mxu0 %v1567
  %v1743 = vpop.f32.mrb[0].mxu0
  %v1744 = vadd.f32 0.0, %v1743
  %v1745 = vpop.f32.mrb[0].mxu0
  %1746 = vmatprep.mubr.f32.mxu0 0.0
  %1747 = vmatmul.mubr.f32.gmra.mrb[0].mxu0 %v1570
  %v1748 = vpop.f32.mrb[0].mxu0
  %v1749 = vadd.f32 0.0, %v1748
  %v1750 = vpop.f32.mrb[0].mxu0
  %1751 = vmatprep.mubr.f32.mxu0 0.0
  %1752 = vmatmul.mubr.f32.gmra.mrb[0].mxu0 %v1573
  %v1753 = vpop.f32.mrb[0].mxu0
  %v1754 = vadd.f32 0.0, %v1753
  %v1755 = vpop.f32.mrb[0].mxu0
  %1756 = vmatprep.mubr.f32.mxu0 0.0
  %1757 = vmatmul.mubr.f32.gmra.mrb[0].mxu0 %v1576
  %v1758 = vpop.f32.mrb[0].mxu0
  %v1759 = vadd.f32 0.0, %v1758
  %v1760 = vpop.f32.mrb[0].mxu0
  %1761 = vmatprep.mubr.f32.mxu0 0.0
  %1762 = vmatmul.mubr.f32.gmra.mrb[0].mxu0 %v1579
  %v1763 = vpop.f32.mrb[0].mxu0
  %v1764 = vadd.f32 0.0, %v1763
  %v1765 = vpop.f32.mrb[0].mxu0
  %1766 = vmatprep.mubr.f32.mxu0 0.0
  %1767 = vmatmul.mubr.f32.gmra.mrb[0].mxu0 %v1582
  %v1768 = vpop.f32.mrb[0].mxu0
  %v1769 = vadd.f32 0.0, %v1768
  %v1770 = vpop.f32.mrb[0].mxu0
  %1771 = vmatprep.mubr.f32.mxu0 0.0
  %1772 = vmatmul.mubr.f32.gmra.mrb[0].mxu0 %v1585
  %v1773 = vpop.f32.mrb[0].mxu0
  %v1774 = vadd.f32 0.0, %v1773
  %v1775 = vpop.f32.mrb[0].mxu0
  %1776 = vmatprep.mubr.f32.mxu0 0.0
  %1777 = vmatmul.mubr.f32.gmra.mrb[0].mxu0 %v1588
  %v1778 = vpop.f32.mrb[0].mxu0
  %v1779 = vadd.f32 0.0, %v1778
  %v1780 = vpop.f32.mrb[0].mxu0
  %1781 = vmatprep.mubr.f32.mxu0 0.0
  %1782 = vmatmul.mubr.f32.gmra.mrb[0].mxu0 %v1591
  %v1783 = vpop.f32.mrb[0].mxu0
  %v1784 = vadd.f32 0.0, %v1783
  %v1785 = vpop.f32.mrb[0].mxu0
  %1786 = vmatprep.mubr.f32.mxu0 0.0
  %1787 = vmatmul.mubr.f32.gmra.mrb[0].mxu0 %v1594
  %v1788 = vpop.f32.mrb[0].mxu0
  %v1789 = vadd.f32 0.0, %v1788
  %v1790 = vpop.f32.mrb[0].mxu0
  %1791 = vmatprep.mubr.f32.mxu0 0.0
  %1792 = vmatmul.mubr.f32.gmra.mrb[0].mxu0 %v1597
  %v1793 = vpop.f32.mrb[0].mxu0
  %v1794 = vadd.f32 0.0, %v1793
  %v1795 = vpop.f32.mrb[0].mxu0
  %1796 = vmatprep.mubr.f32.mxu0 0.0
  %1797 = vmatmul.mubr.f32.gmra.mrb[0].mxu0 %v1600
  %v1798 = vpop.f32.mrb[0].mxu0
  %v1799 = vadd.f32 0.0, %v1798
  %v1800 = vpop.f32.mrb[0].mxu0
  %1801 = vmatprep.mubr.f32.mxu0 0.0
  %1802 = vmatmul.mubr.f32.gmra.mrb[0].mxu0 %v1603
  %v1803 = vpop.f32.mrb[0].mxu0
  %v1804 = vadd.f32 0.0, %v1803
  %v1805 = vpop.f32.mrb[0].mxu0
  %1806 = vmatprep.mubr.f32.mxu0 0.0
  %1807 = vmatmul.mubr.f32.gmra.mrb[0].mxu0 %v1606
  %v1808 = vpop.f32.mrb[0].mxu0
  %v1809 = vadd.f32 0.0, %v1808
  %v1810 = vpop.f32.mrb[0].mxu0
  %1811 = vmatprep.mubr.f32.mxu0 0.0
  %1812 = vmatmul.mubr.f32.gmra.mrb[0].mxu0 %v1609
  %v1813 = vpop.f32.mrb[0].mxu0
  %v1814 = vadd.f32 0.0, %v1813
  %v1815 = vpop.f32.mrb[0].mxu0
  %1816 = vmatprep.mubr.f32.mxu0 0.0
  %1817 = vmatmul.mubr.f32.gmra.mrb[0].mxu0 %v1612
  %v1818 = vpop.f32.mrb[0].mxu0
  %v1819 = vadd.f32 0.0, %v1818
  %v1820 = vpop.f32.mrb[0].mxu0
  %1821 = vmatprep.mubr.f32.mxu0 0.0
  %1822 = vmatmul.mubr.f32.gmra.mrb[0].mxu0 %v1615
  %v1823 = vpop.f32.mrb[0].mxu0
  %v1824 = vadd.f32 0.0, %v1823
  %v1825 = vpop.f32.mrb[0].mxu0
  %1826 = vmatprep.mubr.f32.mxu0 0.0
  %1827 = vmatmul.mubr.f32.gmra.mrb[0].mxu0 %v1618
  %v1828 = vpop.f32.mrb[0].mxu0
  %v1829 = vadd.f32 0.0, %v1828
  %v1830 = vpop.f32.mrb[0].mxu0
  %1831 = vmatprep.mubr.f32.mxu0 0.0
  %1832 = vmatmul.mubr.f32.gmra.mrb[0].mxu0 %v1621
  %v1833 = vpop.f32.mrb[0].mxu0
  %v1834 = vadd.f32 0.0, %v1833
  %v1835 = vpop.f32.mrb[0].mxu0
  %1836 = vmatprep.mubr.f32.mxu0 0.0
  %1837 = vmatmul.mubr.f32.gmra.mrb[0].mxu0 %v1624
  %v1838 = vpop.f32.mrb[0].mxu0
  %v1839 = vadd.f32 0.0, %v1838
  %v1840 = vpop.f32.mrb[0].mxu0
  %1841 = vmatprep.mubr.f32.mxu0 0.0
  %1842 = vmatmul.mubr.f32.gmra.mrb[0].mxu0 %v1627
  %v1843 = vpop.f32.mrb[0].mxu0
  %v1844 = vadd.f32 0.0, %v1843
  %v1845 = vpop.f32.mrb[0].mxu0
  %1846 = vmatprep.mubr.f32.mxu0 0.0
  %1847 = vmatmul.mubr.f32.gmra.mrb[0].mxu0 %v1630
  %v1848 = vpop.f32.mrb[0].mxu0
  %v1849 = vadd.f32 0.0, %v1848
  %v1850 = vpop.f32.mrb[0].mxu0
  %1851 = vmatprep.mubr.f32.mxu0 0.0
  %1852 = vmatmul.mubr.f32.gmra.mrb[0].mxu0 %v1633
  %v1853 = vpop.f32.mrb[0].mxu0
  %v1854 = vadd.f32 0.0, %v1853
  %v1855 = vpop.f32.mrb[0].mxu0
  %1856 = vmatprep.mubr.f32.mxu0 0.0
  %1857 = vmatmul.mubr.f32.gmra.mrb[0].mxu0 %v1636
  %v1858 = vpop.f32.mrb[0].mxu0
  %v1859 = vadd.f32 0.0, %v1858
  %v1860 = vpop.f32.mrb[0].mxu0
  %1861 = vmatprep.mubr.f32.mxu0 0.0
  %1862 = vmatmul.mubr.f32.gmra.mrb[0].mxu0 %v1639
  %v1863 = vpop.f32.mrb[0].mxu0
  %v1864 = vadd.f32 0.0, %v1863
  %v1865 = vpop.f32.mrb[0].mxu0
  %1866 = vmatprep.mubr.f32.mxu0 0.0
  %1867 = vmatmul.mubr.f32.gmra.mrb[0].mxu0 %v1642
  %v1868 = vpop.f32.mrb[0].mxu0
  %v1869 = vadd.f32 0.0, %v1868
  %v1870 = vpop.f32.mrb[0].mxu0
  %1871 = vdwg.mxu0
  %v1872 = vadd.f32 %v1481, %v1714
  %v1873 = vadd.f32 %v1482, %v1719
  %v1874 = vadd.f32 %v1483, %v1724
  %v1875 = vadd.f32 %v1484, %v1729
  %v1876 = vadd.f32 %v1485, %v1734
  %v1877 = vadd.f32 %v1486, %v1739
  %v1878 = vadd.f32 %v1487, %v1744
  %v1879 = vadd.f32 %v1488, %v1749
  %v1880 = vadd.f32 %v1489, %v1754
  %v1881 = vadd.f32 %v1490, %v1759
  %v1882 = vadd.f32 %v1491, %v1764
  %v1883 = vadd.f32 %v1492, %v1769
  %v1884 = vadd.f32 %v1493, %v1774
  %v1885 = vadd.f32 %v1494, %v1779
  %v1886 = vadd.f32 %v1495, %v1784
  %v1887 = vadd.f32 %v1496, %v1789
  %v1888 = vadd.f32 %v1497, %v1794
  %v1889 = vadd.f32 %v1498, %v1799
  %v1890 = vadd.f32 %v1499, %v1804
  %v1891 = vadd.f32 %v1500, %v1809
  %v1892 = vadd.f32 %v1501, %v1814
  %v1893 = vadd.f32 %v1502, %v1819
  %v1894 = vadd.f32 %v1503, %v1824
  %v1895 = vadd.f32 %v1504, %v1829
  %v1896 = vadd.f32 %v1505, %v1834
  %v1897 = vadd.f32 %v1506, %v1839
  %v1898 = vadd.f32 %v1507, %v1844
  %v1899 = vadd.f32 %v1508, %v1849
  %v1900 = vadd.f32 %v1509, %v1854
  %v1901 = vadd.f32 %v1510, %v1859
  %v1902 = vadd.f32 %v1511, %v1864
  %v1903 = vadd.f32 %v1512, %v1869
  %v1904 = vld [vmem:[%s1122 + $0x1] sm:$0xff]
  %v1905 = vld [vmem:[%s1122 + $0x11] sm:$0xff]
  %v1906 = vld [vmem:[%s1122 + $0x21] sm:$0xff]
  %v1907 = vld [vmem:[%s1122 + $0x31] sm:$0xff]
  %v1908 = vld [vmem:[%s1122 + $0x41] sm:$0xff]
  %v1909 = vld [vmem:[%s1122 + $0x51] sm:$0xff]
  %v1910 = vld [vmem:[%s1122 + $0x61] sm:$0xff]
  %v1911 = vld [vmem:[%s1122 + $0x71] sm:$0xff]
  %v1912 = vld [vmem:[%s1122 + $0x81] sm:$0xff]
  %v1913 = vld [vmem:[%s1122 + $0x91] sm:$0xff]
  %v1914 = vld [vmem:[%s1122 + $0xa1] sm:$0xff]
  %v1915 = vld [vmem:[%s1122 + $0xb1] sm:$0xff]
  %v1916 = vld [vmem:[%s1122 + $0xc1] sm:$0xff]
  %v1917 = vld [vmem:[%s1122 + $0xd1] sm:$0xff]
  %v1918 = vld [vmem:[%s1122 + $0xe1] sm:$0xff]
  %v1919 = vld [vmem:[%s1122 + $0xf1] sm:$0xff]
  %v1920 = vld [vmem:[%s1122 + $0x121] sm:$0xff]
  %v1921 = vld [vmem:[%s1122 + $0x131] sm:$0xff]
  %v1922 = vld [vmem:[%s1122 + $0x141] sm:$0xff]
  %v1923 = vld [vmem:[%s1122 + $0x151] sm:$0xff]
  %v1924 = vld [vmem:[%s1122 + $0x161] sm:$0xff]
  %v1925 = vld [vmem:[%s1122 + $0x171] sm:$0xff]
  %v1926 = vld [vmem:[%s1122 + $0x181] sm:$0xff]
  %v1927 = vld [vmem:[%s1122 + $0x191] sm:$0xff]
  %v1928 = vld [vmem:[%s1122 + $0x1a1] sm:$0xff]
  %v1929 = vld [vmem:[%s1122 + $0x1b1] sm:$0xff]
  %v1930 = vld [vmem:[%s1122 + $0x1c1] sm:$0xff]
  %v1931 = vld [vmem:[%s1122 + $0x1d1] sm:$0xff]
  %v1932 = vld [vmem:[%s1122 + $0x1e1] sm:$0xff]
  %v1933 = vld [vmem:[%s1122 + $0x1f1] sm:$0xff]
  %v1934 = vld [vmem:[%s1122 + $0x201] sm:$0xff]
  %v1935 = vld [vmem:[%s1122 + $0x211] sm:$0xff]
  %s1936 = scalar_lea.vmem %s1, 20
  %v1937 = vld [vmem:[%s1936] sm:$0xf]
  %v1939 = vsel %vm82, %v1904, 0
  %v1942 = vsel %vm82, %v1905, 0
  %v1945 = vsel %vm82, %v1906, 0
  %v1948 = vsel %vm82, %v1907, 0
  %v1951 = vsel %vm82, %v1908, 0
  %v1954 = vsel %vm82, %v1909, 0
  %v1957 = vsel %vm82, %v1910, 0
  %v1960 = vsel %vm82, %v1911, 0
  %v1963 = vsel %vm82, %v1912, 0
  %v1966 = vsel %vm82, %v1913, 0
  %v1969 = vsel %vm82, %v1914, 0
  %v1972 = vsel %vm82, %v1915, 0
  %v1975 = vsel %vm82, %v1916, 0
  %v1978 = vsel %vm82, %v1917, 0
  %v1981 = vsel %vm82, %v1918, 0
  %v1984 = vsel %vm82, %v1919, 0
  %v1987 = vsel %vm82, %v1920, 0
  %v1990 = vsel %vm82, %v1921, 0
  %v1993 = vsel %vm82, %v1922, 0
  %v1996 = vsel %vm82, %v1923, 0
  %v1999 = vsel %vm82, %v1924, 0
  %v2002 = vsel %vm82, %v1925, 0
  %v2005 = vsel %vm82, %v1926, 0
  %v2008 = vsel %vm82, %v1927, 0
  %v2011 = vsel %vm82, %v1928, 0
  %v2014 = vsel %vm82, %v1929, 0
  %v2017 = vsel %vm82, %v1930, 0
  %v2020 = vsel %vm82, %v1931, 0
  %v2023 = vsel %vm82, %v1932, 0
  %v2026 = vsel %vm82, %v1933, 0
  %v2029 = vsel %vm82, %v1934, 0
  %v2032 = vsel %vm82, %v1935, 0
  %v2035 = vsel %vm179, %v1937, 0
  %2037 = vmatprep.subr.mxu0 0.0
  %2038 = vmatpush1.msra.mxu0 %v2035
  %2039 = vmatprep.subr.mxu0 0.0
  %2040 = vmatpush1.msra.mxu0 0.0
  %2041 = vmatprep.subr.mxu0 0.0
  %2042 = vmatpush1.msra.mxu0 0.0
  %2043 = vmatprep.subr.mxu0 0.0
  %2044 = vmatpush1.msra.mxu0 0.0
  %2045 = vmatprep.subr.mxu0 0.0
  %2046 = vmatpush1.msra.mxu0 0.0
  %2047 = vmatprep.subr.mxu0 0.0
  %2048 = vmatpush1.msra.mxu0 0.0
  %2049 = vmatprep.subr.mxu0 0.0
  %2050 = vmatpush1.msra.mxu0 0.0
  %2051 = vmatprep.subr.mxu0 0.0
  %2052 = vmatpush1.msra.mxu0 0.0
  %2053 = vmatprep.subr.mxu0 0.0
  %2054 = vmatpush1.msra.mxu0 0.0
  %2055 = vmatprep.subr.mxu0 0.0
  %2056 = vmatpush1.msra.mxu0 0.0
  %2057 = vmatprep.subr.mxu0 0.0
  %2058 = vmatpush1.msra.mxu0 0.0
  %2059 = vmatprep.subr.mxu0 0.0
  %2060 = vmatpush1.msra.mxu0 0.0
  %2061 = vmatprep.subr.mxu0 0.0
  %2062 = vmatpush1.msra.mxu0 0.0
  %2063 = vmatprep.subr.mxu0 0.0
  %2064 = vmatpush1.msra.mxu0 0.0
  %2065 = vmatprep.subr.mxu0 0.0
  %2066 = vmatpush1.msra.mxu0 0.0
  %2067 = vmatprep.subr.mxu0 0.0
  %2068 = vmatpush1.msra.mxu0 0.0
  %2069 = vmatprep.subr.mxu0 0.0
  %2070 = vmatpush1.msra.mxu0 0.0
  %2071 = vmatprep.subr.mxu0 0.0
  %2072 = vmatpush1.msra.mxu0 0.0
  %2073 = vmatprep.subr.mxu0 0.0
  %2074 = vmatpush1.msra.mxu0 0.0
  %2075 = vmatprep.subr.mxu0 0.0
  %2076 = vmatpush1.msra.mxu0 0.0
  %2077 = vmatprep.subr.mxu0 0.0
  %2078 = vmatpush1.msra.mxu0 0.0
  %2079 = vmatprep.subr.mxu0 0.0
  %2080 = vmatpush1.msra.mxu0 0.0
  %2081 = vmatprep.subr.mxu0 0.0
  %2082 = vmatpush1.msra.mxu0 0.0
  %2083 = vmatprep.subr.mxu0 0.0
  %2084 = vmatpush1.msra.mxu0 0.0
  %2085 = vmatprep.subr.mxu0 0.0
  %2086 = vmatpush1.msra.mxu0 0.0
  %2087 = vmatprep.subr.mxu0 0.0
  %2088 = vmatpush1.msra.mxu0 0.0
  %2089 = vmatprep.subr.mxu0 0.0
  %2090 = vmatpush1.msra.mxu0 0.0
  %2091 = vmatprep.subr.mxu0 0.0
  %2092 = vmatpush1.msra.mxu0 0.0
  %2093 = vmatprep.subr.mxu0 0.0
  %2094 = vmatpush1.msra.mxu0 0.0
  %2095 = vmatprep.subr.mxu0 0.0
  %2096 = vmatpush1.msra.mxu0 0.0
  %2097 = vmatprep.subr.mxu0 0.0
  %2098 = vmatpush1.msra.mxu0 0.0
  %2099 = vmatprep.subr.mxu0 0.0
  %2100 = vmatpush1.msra.mxu0 0.0
  %2101 = vmatprep.mubr.f32.mxu0 0.0
  %2102 = vmatmul.mubr.f32.gmra.mrb[0].mxu0 %v1939
  %v2103 = vpop.f32.mrb[0].mxu0
  %v2104 = vadd.f32 0.0, %v2103
  %v2105 = vpop.f32.mrb[0].mxu0
  %2106 = vmatprep.mubr.f32.mxu0 0.0
  %2107 = vmatmul.mubr.f32.gmra.mrb[0].mxu0 %v1942
  %v2108 = vpop.f32.mrb[0].mxu0
  %v2109 = vadd.f32 0.0, %v2108
  %v2110 = vpop.f32.mrb[0].mxu0
  %2111 = vmatprep.mubr.f32.mxu0 0.0
  %2112 = vmatmul.mubr.f32.gmra.mrb[0].mxu0 %v1945
  %v2113 = vpop.f32.mrb[0].mxu0
  %v2114 = vadd.f32 0.0, %v2113
  %v2115 = vpop.f32.mrb[0].mxu0
  %2116 = vmatprep.mubr.f32.mxu0 0.0
  %2117 = vmatmul.mubr.f32.gmra.mrb[0].mxu0 %v1948
  %v2118 = vpop.f32.mrb[0].mxu0
  %v2119 = vadd.f32 0.0, %v2118
  %v2120 = vpop.f32.mrb[0].mxu0
  %2121 = vmatprep.mubr.f32.mxu0 0.0
  %2122 = vmatmul.mubr.f32.gmra.mrb[0].mxu0 %v1951
  %v2123 = vpop.f32.mrb[0].mxu0
  %v2124 = vadd.f32 0.0, %v2123
  %v2125 = vpop.f32.mrb[0].mxu0
  %2126 = vmatprep.mubr.f32.mxu0 0.0
  %2127 = vmatmul.mubr.f32.gmra.mrb[0].mxu0 %v1954
  %v2128 = vpop.f32.mrb[0].mxu0
  %v2129 = vadd.f32 0.0, %v2128
  %v2130 = vpop.f32.mrb[0].mxu0
  %2131 = vmatprep.mubr.f32.mxu0 0.0
  %2132 = vmatmul.mubr.f32.gmra.mrb[0].mxu0 %v1957
  %v2133 = vpop.f32.mrb[0].mxu0
  %v2134 = vadd.f32 0.0, %v2133
  %v2135 = vpop.f32.mrb[0].mxu0
  %2136 = vmatprep.mubr.f32.mxu0 0.0
  %2137 = vmatmul.mubr.f32.gmra.mrb[0].mxu0 %v1960
  %v2138 = vpop.f32.mrb[0].mxu0
  %v2139 = vadd.f32 0.0, %v2138
  %v2140 = vpop.f32.mrb[0].mxu0
  %2141 = vmatprep.mubr.f32.mxu0 0.0
  %2142 = vmatmul.mubr.f32.gmra.mrb[0].mxu0 %v1963
  %v2143 = vpop.f32.mrb[0].mxu0
  %v2144 = vadd.f32 0.0, %v2143
  %v2145 = vpop.f32.mrb[0].mxu0
  %2146 = vmatprep.mubr.f32.mxu0 0.0
  %2147 = vmatmul.mubr.f32.gmra.mrb[0].mxu0 %v1966
  %v2148 = vpop.f32.mrb[0].mxu0
  %v2149 = vadd.f32 0.0, %v2148
  %v2150 = vpop.f32.mrb[0].mxu0
  %2151 = vmatprep.mubr.f32.mxu0 0.0
  %2152 = vmatmul.mubr.f32.gmra.mrb[0].mxu0 %v1969
  %v2153 = vpop.f32.mrb[0].mxu0
  %v2154 = vadd.f32 0.0, %v2153
  %v2155 = vpop.f32.mrb[0].mxu0
  %2156 = vmatprep.mubr.f32.mxu0 0.0
  %2157 = vmatmul.mubr.f32.gmra.mrb[0].mxu0 %v1972
  %v2158 = vpop.f32.mrb[0].mxu0
  %v2159 = vadd.f32 0.0, %v2158
  %v2160 = vpop.f32.mrb[0].mxu0
  %2161 = vmatprep.mubr.f32.mxu0 0.0
  %2162 = vmatmul.mubr.f32.gmra.mrb[0].mxu0 %v1975
  %v2163 = vpop.f32.mrb[0].mxu0
  %v2164 = vadd.f32 0.0, %v2163
  %v2165 = vpop.f32.mrb[0].mxu0
  %2166 = vmatprep.mubr.f32.mxu0 0.0
  %2167 = vmatmul.mubr.f32.gmra.mrb[0].mxu0 %v1978
  %v2168 = vpop.f32.mrb[0].mxu0
  %v2169 = vadd.f32 0.0, %v2168
  %v2170 = vpop.f32.mrb[0].mxu0
  %2171 = vmatprep.mubr.f32.mxu0 0.0
  %2172 = vmatmul.mubr.f32.gmra.mrb[0].mxu0 %v1981
  %v2173 = vpop.f32.mrb[0].mxu0
  %v2174 = vadd.f32 0.0, %v2173
  %v2175 = vpop.f32.mrb[0].mxu0
  %2176 = vmatprep.mubr.f32.mxu0 0.0
  %2177 = vmatmul.mubr.f32.gmra.mrb[0].mxu0 %v1984
  %v2178 = vpop.f32.mrb[0].mxu0
  %v2179 = vadd.f32 0.0, %v2178
  %v2180 = vpop.f32.mrb[0].mxu0
  %2181 = vmatprep.mubr.f32.mxu0 0.0
  %2182 = vmatmul.mubr.f32.gmra.mrb[0].mxu0 %v1987
  %v2183 = vpop.f32.mrb[0].mxu0
  %v2184 = vadd.f32 0.0, %v2183
  %v2185 = vpop.f32.mrb[0].mxu0
  %2186 = vmatprep.mubr.f32.mxu0 0.0
  %2187 = vmatmul.mubr.f32.gmra.mrb[0].mxu0 %v1990
  %v2188 = vpop.f32.mrb[0].mxu0
  %v2189 = vadd.f32 0.0, %v2188
  %v2190 = vpop.f32.mrb[0].mxu0
  %2191 = vmatprep.mubr.f32.mxu0 0.0
  %2192 = vmatmul.mubr.f32.gmra.mrb[0].mxu0 %v1993
  %v2193 = vpop.f32.mrb[0].mxu0
  %v2194 = vadd.f32 0.0, %v2193
  %v2195 = vpop.f32.mrb[0].mxu0
  %2196 = vmatprep.mubr.f32.mxu0 0.0
  %2197 = vmatmul.mubr.f32.gmra.mrb[0].mxu0 %v1996
  %v2198 = vpop.f32.mrb[0].mxu0
  %v2199 = vadd.f32 0.0, %v2198
  %v2200 = vpop.f32.mrb[0].mxu0
  %2201 = vmatprep.mubr.f32.mxu0 0.0
  %2202 = vmatmul.mubr.f32.gmra.mrb[0].mxu0 %v1999
  %v2203 = vpop.f32.mrb[0].mxu0
  %v2204 = vadd.f32 0.0, %v2203
  %v2205 = vpop.f32.mrb[0].mxu0
  %2206 = vmatprep.mubr.f32.mxu0 0.0
  %2207 = vmatmul.mubr.f32.gmra.mrb[0].mxu0 %v2002
  %v2208 = vpop.f32.mrb[0].mxu0
  %v2209 = vadd.f32 0.0, %v2208
  %v2210 = vpop.f32.mrb[0].mxu0
  %2211 = vmatprep.mubr.f32.mxu0 0.0
  %2212 = vmatmul.mubr.f32.gmra.mrb[0].mxu0 %v2005
  %v2213 = vpop.f32.mrb[0].mxu0
  %v2214 = vadd.f32 0.0, %v2213
  %v2215 = vpop.f32.mrb[0].mxu0
  %2216 = vmatprep.mubr.f32.mxu0 0.0
  %2217 = vmatmul.mubr.f32.gmra.mrb[0].mxu0 %v2008
  %v2218 = vpop.f32.mrb[0].mxu0
  %v2219 = vadd.f32 0.0, %v2218
  %v2220 = vpop.f32.mrb[0].mxu0
  %2221 = vmatprep.mubr.f32.mxu0 0.0
  %2222 = vmatmul.mubr.f32.gmra.mrb[0].mxu0 %v2011
  %v2223 = vpop.f32.mrb[0].mxu0
  %v2224 = vadd.f32 0.0, %v2223
  %v2225 = vpop.f32.mrb[0].mxu0
  %2226 = vmatprep.mubr.f32.mxu0 0.0
  %2227 = vmatmul.mubr.f32.gmra.mrb[0].mxu0 %v2014
  %v2228 = vpop.f32.mrb[0].mxu0
  %v2229 = vadd.f32 0.0, %v2228
  %v2230 = vpop.f32.mrb[0].mxu0
  %2231 = vmatprep.mubr.f32.mxu0 0.0
  %2232 = vmatmul.mubr.f32.gmra.mrb[0].mxu0 %v2017
  %v2233 = vpop.f32.mrb[0].mxu0
  %v2234 = vadd.f32 0.0, %v2233
  %v2235 = vpop.f32.mrb[0].mxu0
  %2236 = vmatprep.mubr.f32.mxu0 0.0
  %2237 = vmatmul.mubr.f32.gmra.mrb[0].mxu0 %v2020
  %v2238 = vpop.f32.mrb[0].mxu0
  %v2239 = vadd.f32 0.0, %v2238
  %v2240 = vpop.f32.mrb[0].mxu0
  %2241 = vmatprep.mubr.f32.mxu0 0.0
  %2242 = vmatmul.mubr.f32.gmra.mrb[0].mxu0 %v2023
  %v2243 = vpop.f32.mrb[0].mxu0
  %v2244 = vadd.f32 0.0, %v2243
  %v2245 = vpop.f32.mrb[0].mxu0
  %2246 = vmatprep.mubr.f32.mxu0 0.0
  %2247 = vmatmul.mubr.f32.gmra.mrb[0].mxu0 %v2026
  %v2248 = vpop.f32.mrb[0].mxu0
  %v2249 = vadd.f32 0.0, %v2248
  %v2250 = vpop.f32.mrb[0].mxu0
  %2251 = vmatprep.mubr.f32.mxu0 0.0
  %2252 = vmatmul.mubr.f32.gmra.mrb[0].mxu0 %v2029
  %v2253 = vpop.f32.mrb[0].mxu0
  %v2254 = vadd.f32 0.0, %v2253
  %v2255 = vpop.f32.mrb[0].mxu0
  %2256 = vmatprep.mubr.f32.mxu0 0.0
  %2257 = vmatmul.mubr.f32.gmra.mrb[0].mxu0 %v2032
  %v2258 = vpop.f32.mrb[0].mxu0
  %v2259 = vadd.f32 0.0, %v2258
  %v2260 = vpop.f32.mrb[0].mxu0
  %2261 = vdwg.mxu0
  %v2262 = vadd.f32 %v1872, %v2104
  %v2263 = vadd.f32 %v1873, %v2109
  %v2264 = vadd.f32 %v1874, %v2114
  %v2265 = vadd.f32 %v1875, %v2119
  %v2266 = vadd.f32 %v1876, %v2124
  %v2267 = vadd.f32 %v1877, %v2129
  %v2268 = vadd.f32 %v1878, %v2134
  %v2269 = vadd.f32 %v1879, %v2139
  %v2270 = vadd.f32 %v1880, %v2144
  %v2271 = vadd.f32 %v1881, %v2149
  %v2272 = vadd.f32 %v1882, %v2154
  %v2273 = vadd.f32 %v1883, %v2159
  %v2274 = vadd.f32 %v1884, %v2164
  %v2275 = vadd.f32 %v1885, %v2169
  %v2276 = vadd.f32 %v1886, %v2174
  %v2277 = vadd.f32 %v1887, %v2179
  %v2278 = vadd.f32 %v1888, %v2184
  %v2279 = vadd.f32 %v1889, %v2189
  %v2280 = vadd.f32 %v1890, %v2194
  %v2281 = vadd.f32 %v1891, %v2199
  %v2282 = vadd.f32 %v1892, %v2204
  %v2283 = vadd.f32 %v1893, %v2209
  %v2284 = vadd.f32 %v1894, %v2214
  %v2285 = vadd.f32 %v1895, %v2219
  %v2286 = vadd.f32 %v1896, %v2224
  %v2287 = vadd.f32 %v1897, %v2229
  %v2288 = vadd.f32 %v1898, %v2234
  %v2289 = vadd.f32 %v1899, %v2239
  %v2290 = vadd.f32 %v1900, %v2244
  %v2291 = vadd.f32 %v1901, %v2249
  %v2292 = vadd.f32 %v1902, %v2254
  %v2293 = vadd.f32 %v1903, %v2259
  %s2294 = scalar_lea.vmem %s0, 32
  %v2295 = vld [vmem:[%s2294] sm:$0xff]
  %v2296 = vld [vmem:[%s2294 + $0x10] sm:$0xff]
  %v2297 = vld [vmem:[%s2294 + $0x20] sm:$0xff]
  %v2298 = vld [vmem:[%s2294 + $0x30] sm:$0xff]
  %v2299 = vld [vmem:[%s2294 + $0x40] sm:$0xff]
  %v2300 = vld [vmem:[%s2294 + $0x50] sm:$0xff]
  %v2301 = vld [vmem:[%s2294 + $0x60] sm:$0xff]
  %v2302 = vld [vmem:[%s2294 + $0x70] sm:$0xff]
  %v2303 = vld [vmem:[%s2294 + $0x80] sm:$0xff]
  %v2304 = vld [vmem:[%s2294 + $0x90] sm:$0xff]
  %v2305 = vld [vmem:[%s2294 + $0xa0] sm:$0xff]
  %v2306 = vld [vmem:[%s2294 + $0xb0] sm:$0xff]
  %v2307 = vld [vmem:[%s2294 + $0xc0] sm:$0xff]
  %v2308 = vld [vmem:[%s2294 + $0xd0] sm:$0xff]
  %v2309 = vld [vmem:[%s2294 + $0xe0] sm:$0xff]
  %v2310 = vld [vmem:[%s2294 + $0xf0] sm:$0xff]
  %v2311 = vld [vmem:[%s2294 + $0x120] sm:$0xff]
  %v2312 = vld [vmem:[%s2294 + $0x130] sm:$0xff]
  %v2313 = vld [vmem:[%s2294 + $0x140] sm:$0xff]
  %v2314 = vld [vmem:[%s2294 + $0x150] sm:$0xff]
  %v2315 = vld [vmem:[%s2294 + $0x160] sm:$0xff]
  %v2316 = vld [vmem:[%s2294 + $0x170] sm:$0xff]
  %v2317 = vld [vmem:[%s2294 + $0x180] sm:$0xff]
  %v2318 = vld [vmem:[%s2294 + $0x190] sm:$0xff]
  %v2319 = vld [vmem:[%s2294 + $0x1a0] sm:$0xff]
  %v2320 = vld [vmem:[%s2294 + $0x1b0] sm:$0xff]
  %v2321 = vld [vmem:[%s2294 + $0x1c0] sm:$0xff]
  %v2322 = vld [vmem:[%s2294 + $0x1d0] sm:$0xff]
  %v2323 = vld [vmem:[%s2294 + $0x1e0] sm:$0xff]
  %v2324 = vld [vmem:[%s2294 + $0x1f0] sm:$0xff]
  %v2325 = vld [vmem:[%s2294 + $0x200] sm:$0xff]
  %v2326 = vld [vmem:[%s2294 + $0x210] sm:$0xff]
  %s2327 = scalar_lea.vmem %s1, 24
  %v2328 = vld [vmem:[%s2327] sm:$0xf]
  %v2330 = vsel %vm82, %v2295, 0
  %v2333 = vsel %vm82, %v2296, 0
  %v2336 = vsel %vm82, %v2297, 0
  %v2339 = vsel %vm82, %v2298, 0
  %v2342 = vsel %vm82, %v2299, 0
  %v2345 = vsel %vm82, %v2300, 0
  %v2348 = vsel %vm82, %v2301, 0
  %v2351 = vsel %vm82, %v2302, 0
  %v2354 = vsel %vm82, %v2303, 0
  %v2357 = vsel %vm82, %v2304, 0
  %v2360 = vsel %vm82, %v2305, 0
  %v2363 = vsel %vm82, %v2306, 0
  %v2366 = vsel %vm82, %v2307, 0
  %v2369 = vsel %vm82, %v2308, 0
  %v2372 = vsel %vm82, %v2309, 0
  %v2375 = vsel %vm82, %v2310, 0
  %v2378 = vsel %vm82, %v2311, 0
  %v2381 = vsel %vm82, %v2312, 0
  %v2384 = vsel %vm82, %v2313, 0
  %v2387 = vsel %vm82, %v2314, 0
  %v2390 = vsel %vm82, %v2315, 0
  %v2393 = vsel %vm82, %v2316, 0
  %v2396 = vsel %vm82, %v2317, 0
  %v2399 = vsel %vm82, %v2318, 0
  %v2402 = vsel %vm82, %v2319, 0
  %v2405 = vsel %vm82, %v2320, 0
  %v2408 = vsel %vm82, %v2321, 0
  %v2411 = vsel %vm82, %v2322, 0
  %v2414 = vsel %vm82, %v2323, 0
  %v2417 = vsel %vm82, %v2324, 0
  %v2420 = vsel %vm82, %v2325, 0
  %v2423 = vsel %vm82, %v2326, 0
  %v2426 = vsel %vm179, %v2328, 0
  %2428 = vmatprep.subr.mxu0 0.0
  %2429 = vmatpush1.msra.mxu0 %v2426
  %2430 = vmatprep.subr.mxu0 0.0
  %2431 = vmatpush1.msra.mxu0 0.0
  %2432 = vmatprep.subr.mxu0 0.0
  %2433 = vmatpush1.msra.mxu0 0.0
  %2434 = vmatprep.subr.mxu0 0.0
  %2435 = vmatpush1.msra.mxu0 0.0
  %2436 = vmatprep.subr.mxu0 0.0
  %2437 = vmatpush1.msra.mxu0 0.0
  %2438 = vmatprep.subr.mxu0 0.0
  %2439 = vmatpush1.msra.mxu0 0.0
  %2440 = vmatprep.subr.mxu0 0.0
  %2441 = vmatpush1.msra.mxu0 0.0
  %2442 = vmatprep.subr.mxu0 0.0
  %2443 = vmatpush1.msra.mxu0 0.0
  %2444 = vmatprep.subr.mxu0 0.0
  %2445 = vmatpush1.msra.mxu0 0.0
  %2446 = vmatprep.subr.mxu0 0.0
  %2447 = vmatpush1.msra.mxu0 0.0
  %2448 = vmatprep.subr.mxu0 0.0
  %2449 = vmatpush1.msra.mxu0 0.0
  %2450 = vmatprep.subr.mxu0 0.0
  %2451 = vmatpush1.msra.mxu0 0.0
  %2452 = vmatprep.subr.mxu0 0.0
  %2453 = vmatpush1.msra.mxu0 0.0
  %2454 = vmatprep.subr.mxu0 0.0
  %2455 = vmatpush1.msra.mxu0 0.0
  %2456 = vmatprep.subr.mxu0 0.0
  %2457 = vmatpush1.msra.mxu0 0.0
  %2458 = vmatprep.subr.mxu0 0.0
  %2459 = vmatpush1.msra.mxu0 0.0
  %2460 = vmatprep.subr.mxu0 0.0
  %2461 = vmatpush1.msra.mxu0 0.0
  %2462 = vmatprep.subr.mxu0 0.0
  %2463 = vmatpush1.msra.mxu0 0.0
  %2464 = vmatprep.subr.mxu0 0.0
  %2465 = vmatpush1.msra.mxu0 0.0
  %2466 = vmatprep.subr.mxu0 0.0
  %2467 = vmatpush1.msra.mxu0 0.0
  %2468 = vmatprep.subr.mxu0 0.0
  %2469 = vmatpush1.msra.mxu0 0.0
  %2470 = vmatprep.subr.mxu0 0.0
  %2471 = vmatpush1.msra.mxu0 0.0
  %2472 = vmatprep.subr.mxu0 0.0
  %2473 = vmatpush1.msra.mxu0 0.0
  %2474 = vmatprep.subr.mxu0 0.0
  %2475 = vmatpush1.msra.mxu0 0.0
  %2476 = vmatprep.subr.mxu0 0.0
  %2477 = vmatpush1.msra.mxu0 0.0
  %2478 = vmatprep.subr.mxu0 0.0
  %2479 = vmatpush1.msra.mxu0 0.0
  %2480 = vmatprep.subr.mxu0 0.0
  %2481 = vmatpush1.msra.mxu0 0.0
  %2482 = vmatprep.subr.mxu0 0.0
  %2483 = vmatpush1.msra.mxu0 0.0
  %2484 = vmatprep.subr.mxu0 0.0
  %2485 = vmatpush1.msra.mxu0 0.0
  %2486 = vmatprep.subr.mxu0 0.0
  %2487 = vmatpush1.msra.mxu0 0.0
  %2488 = vmatprep.subr.mxu0 0.0
  %2489 = vmatpush1.msra.mxu0 0.0
  %2490 = vmatprep.subr.mxu0 0.0
  %2491 = vmatpush1.msra.mxu0 0.0
  %2492 = vmatprep.mubr.f32.mxu0 0.0
  %2493 = vmatmul.mubr.f32.gmra.mrb[0].mxu0 %v2330
  %v2494 = vpop.f32.mrb[0].mxu0
  %v2495 = vadd.f32 0.0, %v2494
  %v2496 = vpop.f32.mrb[0].mxu0
  %2497 = vmatprep.mubr.f32.mxu0 0.0
  %2498 = vmatmul.mubr.f32.gmra.mrb[0].mxu0 %v2333
  %v2499 = vpop.f32.mrb[0].mxu0
  %v2500 = vadd.f32 0.0, %v2499
  %v2501 = vpop.f32.mrb[0].mxu0
  %2502 = vmatprep.mubr.f32.mxu0 0.0
  %2503 = vmatmul.mubr.f32.gmra.mrb[0].mxu0 %v2336
  %v2504 = vpop.f32.mrb[0].mxu0
  %v2505 = vadd.f32 0.0, %v2504
  %v2506 = vpop.f32.mrb[0].mxu0
  %2507 = vmatprep.mubr.f32.mxu0 0.0
  %2508 = vmatmul.mubr.f32.gmra.mrb[0].mxu0 %v2339
  %v2509 = vpop.f32.mrb[0].mxu0
  %v2510 = vadd.f32 0.0, %v2509
  %v2511 = vpop.f32.mrb[0].mxu0
  %2512 = vmatprep.mubr.f32.mxu0 0.0
  %2513 = vmatmul.mubr.f32.gmra.mrb[0].mxu0 %v2342
  %v2514 = vpop.f32.mrb[0].mxu0
  %v2515 = vadd.f32 0.0, %v2514
  %v2516 = vpop.f32.mrb[0].mxu0
  %2517 = vmatprep.mubr.f32.mxu0 0.0
  %2518 = vmatmul.mubr.f32.gmra.mrb[0].mxu0 %v2345
  %v2519 = vpop.f32.mrb[0].mxu0
  %v2520 = vadd.f32 0.0, %v2519
  %v2521 = vpop.f32.mrb[0].mxu0
  %2522 = vmatprep.mubr.f32.mxu0 0.0
  %2523 = vmatmul.mubr.f32.gmra.mrb[0].mxu0 %v2348
  %v2524 = vpop.f32.mrb[0].mxu0
  %v2525 = vadd.f32 0.0, %v2524
  %v2526 = vpop.f32.mrb[0].mxu0
  %2527 = vmatprep.mubr.f32.mxu0 0.0
  %2528 = vmatmul.mubr.f32.gmra.mrb[0].mxu0 %v2351
  %v2529 = vpop.f32.mrb[0].mxu0
  %v2530 = vadd.f32 0.0, %v2529
  %v2531 = vpop.f32.mrb[0].mxu0
  %2532 = vmatprep.mubr.f32.mxu0 0.0
  %2533 = vmatmul.mubr.f32.gmra.mrb[0].mxu0 %v2354
  %v2534 = vpop.f32.mrb[0].mxu0
  %v2535 = vadd.f32 0.0, %v2534
  %v2536 = vpop.f32.mrb[0].mxu0
  %2537 = vmatprep.mubr.f32.mxu0 0.0
  %2538 = vmatmul.mubr.f32.gmra.mrb[0].mxu0 %v2357
  %v2539 = vpop.f32.mrb[0].mxu0
  %v2540 = vadd.f32 0.0, %v2539
  %v2541 = vpop.f32.mrb[0].mxu0
  %2542 = vmatprep.mubr.f32.mxu0 0.0
  %2543 = vmatmul.mubr.f32.gmra.mrb[0].mxu0 %v2360
  %v2544 = vpop.f32.mrb[0].mxu0
  %v2545 = vadd.f32 0.0, %v2544
  %v2546 = vpop.f32.mrb[0].mxu0
  %2547 = vmatprep.mubr.f32.mxu0 0.0
  %2548 = vmatmul.mubr.f32.gmra.mrb[0].mxu0 %v2363
  %v2549 = vpop.f32.mrb[0].mxu0
  %v2550 = vadd.f32 0.0, %v2549
  %v2551 = vpop.f32.mrb[0].mxu0
  %2552 = vmatprep.mubr.f32.mxu0 0.0
  %2553 = vmatmul.mubr.f32.gmra.mrb[0].mxu0 %v2366
  %v2554 = vpop.f32.mrb[0].mxu0
  %v2555 = vadd.f32 0.0, %v2554
  %v2556 = vpop.f32.mrb[0].mxu0
  %2557 = vmatprep.mubr.f32.mxu0 0.0
  %2558 = vmatmul.mubr.f32.gmra.mrb[0].mxu0 %v2369
  %v2559 = vpop.f32.mrb[0].mxu0
  %v2560 = vadd.f32 0.0, %v2559
  %v2561 = vpop.f32.mrb[0].mxu0
  %2562 = vmatprep.mubr.f32.mxu0 0.0
  %2563 = vmatmul.mubr.f32.gmra.mrb[0].mxu0 %v2372
  %v2564 = vpop.f32.mrb[0].mxu0
  %v2565 = vadd.f32 0.0, %v2564
  %v2566 = vpop.f32.mrb[0].mxu0
  %2567 = vmatprep.mubr.f32.mxu0 0.0
  %2568 = vmatmul.mubr.f32.gmra.mrb[0].mxu0 %v2375
  %v2569 = vpop.f32.mrb[0].mxu0
  %v2570 = vadd.f32 0.0, %v2569
  %v2571 = vpop.f32.mrb[0].mxu0
  %2572 = vmatprep.mubr.f32.mxu0 0.0
  %2573 = vmatmul.mubr.f32.gmra.mrb[0].mxu0 %v2378
  %v2574 = vpop.f32.mrb[0].mxu0
  %v2575 = vadd.f32 0.0, %v2574
  %v2576 = vpop.f32.mrb[0].mxu0
  %2577 = vmatprep.mubr.f32.mxu0 0.0
  %2578 = vmatmul.mubr.f32.gmra.mrb[0].mxu0 %v2381
  %v2579 = vpop.f32.mrb[0].mxu0
  %v2580 = vadd.f32 0.0, %v2579
  %v2581 = vpop.f32.mrb[0].mxu0
  %2582 = vmatprep.mubr.f32.mxu0 0.0
  %2583 = vmatmul.mubr.f32.gmra.mrb[0].mxu0 %v2384
  %v2584 = vpop.f32.mrb[0].mxu0
  %v2585 = vadd.f32 0.0, %v2584
  %v2586 = vpop.f32.mrb[0].mxu0
  %2587 = vmatprep.mubr.f32.mxu0 0.0
  %2588 = vmatmul.mubr.f32.gmra.mrb[0].mxu0 %v2387
  %v2589 = vpop.f32.mrb[0].mxu0
  %v2590 = vadd.f32 0.0, %v2589
  %v2591 = vpop.f32.mrb[0].mxu0
  %2592 = vmatprep.mubr.f32.mxu0 0.0
  %2593 = vmatmul.mubr.f32.gmra.mrb[0].mxu0 %v2390
  %v2594 = vpop.f32.mrb[0].mxu0
  %v2595 = vadd.f32 0.0, %v2594
  %v2596 = vpop.f32.mrb[0].mxu0
  %2597 = vmatprep.mubr.f32.mxu0 0.0
  %2598 = vmatmul.mubr.f32.gmra.mrb[0].mxu0 %v2393
  %v2599 = vpop.f32.mrb[0].mxu0
  %v2600 = vadd.f32 0.0, %v2599
  %v2601 = vpop.f32.mrb[0].mxu0
  %2602 = vmatprep.mubr.f32.mxu0 0.0
  %2603 = vmatmul.mubr.f32.gmra.mrb[0].mxu0 %v2396
  %v2604 = vpop.f32.mrb[0].mxu0
  %v2605 = vadd.f32 0.0, %v2604
  %v2606 = vpop.f32.mrb[0].mxu0
  %2607 = vmatprep.mubr.f32.mxu0 0.0
  %2608 = vmatmul.mubr.f32.gmra.mrb[0].mxu0 %v2399
  %v2609 = vpop.f32.mrb[0].mxu0
  %v2610 = vadd.f32 0.0, %v2609
  %v2611 = vpop.f32.mrb[0].mxu0
  %2612 = vmatprep.mubr.f32.mxu0 0.0
  %2613 = vmatmul.mubr.f32.gmra.mrb[0].mxu0 %v2402
  %v2614 = vpop.f32.mrb[0].mxu0
  %v2615 = vadd.f32 0.0, %v2614
  %v2616 = vpop.f32.mrb[0].mxu0
  %2617 = vmatprep.mubr.f32.mxu0 0.0
  %2618 = vmatmul.mubr.f32.gmra.mrb[0].mxu0 %v2405
  %v2619 = vpop.f32.mrb[0].mxu0
  %v2620 = vadd.f32 0.0, %v2619
  %v2621 = vpop.f32.mrb[0].mxu0
  %2622 = vmatprep.mubr.f32.mxu0 0.0
  %2623 = vmatmul.mubr.f32.gmra.mrb[0].mxu0 %v2408
  %v2624 = vpop.f32.mrb[0].mxu0
  %v2625 = vadd.f32 0.0, %v2624
  %v2626 = vpop.f32.mrb[0].mxu0
  %2627 = vmatprep.mubr.f32.mxu0 0.0
  %2628 = vmatmul.mubr.f32.gmra.mrb[0].mxu0 %v2411
  %v2629 = vpop.f32.mrb[0].mxu0
  %v2630 = vadd.f32 0.0, %v2629
  %v2631 = vpop.f32.mrb[0].mxu0
  %2632 = vmatprep.mubr.f32.mxu0 0.0
  %2633 = vmatmul.mubr.f32.gmra.mrb[0].mxu0 %v2414
  %v2634 = vpop.f32.mrb[0].mxu0
  %v2635 = vadd.f32 0.0, %v2634
  %v2636 = vpop.f32.mrb[0].mxu0
  %2637 = vmatprep.mubr.f32.mxu0 0.0
  %2638 = vmatmul.mubr.f32.gmra.mrb[0].mxu0 %v2417
  %v2639 = vpop.f32.mrb[0].mxu0
  %v2640 = vadd.f32 0.0, %v2639
  %v2641 = vpop.f32.mrb[0].mxu0
  %2642 = vmatprep.mubr.f32.mxu0 0.0
  %2643 = vmatmul.mubr.f32.gmra.mrb[0].mxu0 %v2420
  %v2644 = vpop.f32.mrb[0].mxu0
  %v2645 = vadd.f32 0.0, %v2644
  %v2646 = vpop.f32.mrb[0].mxu0
  %2647 = vmatprep.mubr.f32.mxu0 0.0
  %2648 = vmatmul.mubr.f32.gmra.mrb[0].mxu0 %v2423
  %v2649 = vpop.f32.mrb[0].mxu0
  %v2650 = vadd.f32 0.0, %v2649
  %v2651 = vpop.f32.mrb[0].mxu0
  %2652 = vdwg.mxu0
  %v2653 = vadd.f32 %v2262, %v2495
  %v2654 = vadd.f32 %v2263, %v2500
  %v2655 = vadd.f32 %v2264, %v2505
  %v2656 = vadd.f32 %v2265, %v2510
  %v2657 = vadd.f32 %v2266, %v2515
  %v2658 = vadd.f32 %v2267, %v2520
  %v2659 = vadd.f32 %v2268, %v2525
  %v2660 = vadd.f32 %v2269, %v2530
  %v2661 = vadd.f32 %v2270, %v2535
  %v2662 = vadd.f32 %v2271, %v2540
  %v2663 = vadd.f32 %v2272, %v2545
  %v2664 = vadd.f32 %v2273, %v2550
  %v2665 = vadd.f32 %v2274, %v2555
  %v2666 = vadd.f32 %v2275, %v2560
  %v2667 = vadd.f32 %v2276, %v2565
  %v2668 = vadd.f32 %v2277, %v2570
  %v2669 = vadd.f32 %v2278, %v2575
  %v2670 = vadd.f32 %v2279, %v2580
  %v2671 = vadd.f32 %v2280, %v2585
  %v2672 = vadd.f32 %v2281, %v2590
  %v2673 = vadd.f32 %v2282, %v2595
  %v2674 = vadd.f32 %v2283, %v2600
  %v2675 = vadd.f32 %v2284, %v2605
  %v2676 = vadd.f32 %v2285, %v2610
  %v2677 = vadd.f32 %v2286, %v2615
  %v2678 = vadd.f32 %v2287, %v2620
  %v2679 = vadd.f32 %v2288, %v2625
  %v2680 = vadd.f32 %v2289, %v2630
  %v2681 = vadd.f32 %v2290, %v2635
  %v2682 = vadd.f32 %v2291, %v2640
  %v2683 = vadd.f32 %v2292, %v2645
  %v2684 = vadd.f32 %v2293, %v2650
  %s2685 = scalar_lea.vmem %s0, 608
  %v2686 = vld [vmem:[%s2685] sm:$0xff]
  %v2687 = vld [vmem:[%s2685 + $0x10] sm:$0xff]
  %v2688 = vld [vmem:[%s2685 + $0x20] sm:$0xff]
  %v2689 = vld [vmem:[%s2685 + $0x30] sm:$0xff]
  %v2690 = vld [vmem:[%s2685 + $0x40] sm:$0xff]
  %v2691 = vld [vmem:[%s2685 + $0x50] sm:$0xff]
  %v2692 = vld [vmem:[%s2685 + $0x60] sm:$0xff]
  %v2693 = vld [vmem:[%s2685 + $0x70] sm:$0xff]
  %v2694 = vld [vmem:[%s2685 + $0x80] sm:$0xff]
  %v2695 = vld [vmem:[%s2685 + $0x90] sm:$0xff]
  %v2696 = vld [vmem:[%s2685 + $0xa0] sm:$0xff]
  %v2697 = vld [vmem:[%s2685 + $0xb0] sm:$0xff]
  %v2698 = vld [vmem:[%s2685 + $0xc0] sm:$0xff]
  %v2699 = vld [vmem:[%s2685 + $0xd0] sm:$0xff]
  %v2700 = vld [vmem:[%s2685 + $0xe0] sm:$0xff]
  %v2701 = vld [vmem:[%s2685 + $0xf0] sm:$0xff]
  %v2702 = vld [vmem:[%s2685 + $0x120] sm:$0xff]
  %v2703 = vld [vmem:[%s2685 + $0x130] sm:$0xff]
  %v2704 = vld [vmem:[%s2685 + $0x140] sm:$0xff]
  %v2705 = vld [vmem:[%s2685 + $0x150] sm:$0xff]
  %v2706 = vld [vmem:[%s2685 + $0x160] sm:$0xff]
  %v2707 = vld [vmem:[%s2685 + $0x170] sm:$0xff]
  %v2708 = vld [vmem:[%s2685 + $0x180] sm:$0xff]
  %v2709 = vld [vmem:[%s2685 + $0x190] sm:$0xff]
  %v2710 = vld [vmem:[%s2685 + $0x1a0] sm:$0xff]
  %v2711 = vld [vmem:[%s2685 + $0x1b0] sm:$0xff]
  %v2712 = vld [vmem:[%s2685 + $0x1c0] sm:$0xff]
  %v2713 = vld [vmem:[%s2685 + $0x1d0] sm:$0xff]
  %v2714 = vld [vmem:[%s2685 + $0x1e0] sm:$0xff]
  %v2715 = vld [vmem:[%s2685 + $0x1f0] sm:$0xff]
  %v2716 = vld [vmem:[%s2685 + $0x200] sm:$0xff]
  %v2717 = vld [vmem:[%s2685 + $0x210] sm:$0xff]
  %s2718 = scalar_lea.vmem %s1, 28
  %v2719 = vld [vmem:[%s2718] sm:$0xf]
  %v2721 = vsel %vm82, %v2686, 0
  %v2724 = vsel %vm82, %v2687, 0
  %v2727 = vsel %vm82, %v2688, 0
  %v2730 = vsel %vm82, %v2689, 0
  %v2733 = vsel %vm82, %v2690, 0
  %v2736 = vsel %vm82, %v2691, 0
  %v2739 = vsel %vm82, %v2692, 0
  %v2742 = vsel %vm82, %v2693, 0
  %v2745 = vsel %vm82, %v2694, 0
  %v2748 = vsel %vm82, %v2695, 0
  %v2751 = vsel %vm82, %v2696, 0
  %v2754 = vsel %vm82, %v2697, 0
  %v2757 = vsel %vm82, %v2698, 0
  %v2760 = vsel %vm82, %v2699, 0
  %v2763 = vsel %vm82, %v2700, 0
  %v2766 = vsel %vm82, %v2701, 0
  %v2769 = vsel %vm82, %v2702, 0
  %v2772 = vsel %vm82, %v2703, 0
  %v2775 = vsel %vm82, %v2704, 0
  %v2778 = vsel %vm82, %v2705, 0
  %v2781 = vsel %vm82, %v2706, 0
  %v2784 = vsel %vm82, %v2707, 0
  %v2787 = vsel %vm82, %v2708, 0
  %v2790 = vsel %vm82, %v2709, 0
  %v2793 = vsel %vm82, %v2710, 0
  %v2796 = vsel %vm82, %v2711, 0
  %v2799 = vsel %vm82, %v2712, 0
  %v2802 = vsel %vm82, %v2713, 0
  %v2805 = vsel %vm82, %v2714, 0
  %v2808 = vsel %vm82, %v2715, 0
  %v2811 = vsel %vm82, %v2716, 0
  %v2814 = vsel %vm82, %v2717, 0
  %v2817 = vsel %vm179, %v2719, 0
  %2819 = vmatprep.subr.mxu0 0.0
  %2820 = vmatpush1.msra.mxu0 %v2817
  %2821 = vmatprep.subr.mxu0 0.0
  %2822 = vmatpush1.msra.mxu0 0.0
  %2823 = vmatprep.subr.mxu0 0.0
  %2824 = vmatpush1.msra.mxu0 0.0
  %2825 = vmatprep.subr.mxu0 0.0
  %2826 = vmatpush1.msra.mxu0 0.0
  %2827 = vmatprep.subr.mxu0 0.0
  %2828 = vmatpush1.msra.mxu0 0.0
  %2829 = vmatprep.subr.mxu0 0.0
  %2830 = vmatpush1.msra.mxu0 0.0
  %2831 = vmatprep.subr.mxu0 0.0
  %2832 = vmatpush1.msra.mxu0 0.0
  %2833 = vmatprep.subr.mxu0 0.0
  %2834 = vmatpush1.msra.mxu0 0.0
  %2835 = vmatprep.subr.mxu0 0.0
  %2836 = vmatpush1.msra.mxu0 0.0
  %2837 = vmatprep.subr.mxu0 0.0
  %2838 = vmatpush1.msra.mxu0 0.0
  %2839 = vmatprep.subr.mxu0 0.0
  %2840 = vmatpush1.msra.mxu0 0.0
  %2841 = vmatprep.subr.mxu0 0.0
  %2842 = vmatpush1.msra.mxu0 0.0
  %2843 = vmatprep.subr.mxu0 0.0
  %2844 = vmatpush1.msra.mxu0 0.0
  %2845 = vmatprep.subr.mxu0 0.0
  %2846 = vmatpush1.msra.mxu0 0.0
  %2847 = vmatprep.subr.mxu0 0.0
  %2848 = vmatpush1.msra.mxu0 0.0
  %2849 = vmatprep.subr.mxu0 0.0
  %2850 = vmatpush1.msra.mxu0 0.0
  %2851 = vmatprep.subr.mxu0 0.0
  %2852 = vmatpush1.msra.mxu0 0.0
  %2853 = vmatprep.subr.mxu0 0.0
  %2854 = vmatpush1.msra.mxu0 0.0
  %2855 = vmatprep.subr.mxu0 0.0
  %2856 = vmatpush1.msra.mxu0 0.0
  %2857 = vmatprep.subr.mxu0 0.0
  %2858 = vmatpush1.msra.mxu0 0.0
  %2859 = vmatprep.subr.mxu0 0.0
  %2860 = vmatpush1.msra.mxu0 0.0
  %2861 = vmatprep.subr.mxu0 0.0
  %2862 = vmatpush1.msra.mxu0 0.0
  %2863 = vmatprep.subr.mxu0 0.0
  %2864 = vmatpush1.msra.mxu0 0.0
  %2865 = vmatprep.subr.mxu0 0.0
  %2866 = vmatpush1.msra.mxu0 0.0
  %2867 = vmatprep.subr.mxu0 0.0
  %2868 = vmatpush1.msra.mxu0 0.0
  %2869 = vmatprep.subr.mxu0 0.0
  %2870 = vmatpush1.msra.mxu0 0.0
  %2871 = vmatprep.subr.mxu0 0.0
  %2872 = vmatpush1.msra.mxu0 0.0
  %2873 = vmatprep.subr.mxu0 0.0
  %2874 = vmatpush1.msra.mxu0 0.0
  %2875 = vmatprep.subr.mxu0 0.0
  %2876 = vmatpush1.msra.mxu0 0.0
  %2877 = vmatprep.subr.mxu0 0.0
  %2878 = vmatpush1.msra.mxu0 0.0
  %2879 = vmatprep.subr.mxu0 0.0
  %2880 = vmatpush1.msra.mxu0 0.0
  %2881 = vmatprep.subr.mxu0 0.0
  %2882 = vmatpush1.msra.mxu0 0.0
  %2883 = vmatprep.mubr.f32.mxu0 0.0
  %2884 = vmatmul.mubr.f32.gmra.mrb[0].mxu0 %v2721
  %v2885 = vpop.f32.mrb[0].mxu0
  %v2886 = vadd.f32 0.0, %v2885
  %v2887 = vpop.f32.mrb[0].mxu0
  %2888 = vmatprep.mubr.f32.mxu0 0.0
  %2889 = vmatmul.mubr.f32.gmra.mrb[0].mxu0 %v2724
  %v2890 = vpop.f32.mrb[0].mxu0
  %v2891 = vadd.f32 0.0, %v2890
  %v2892 = vpop.f32.mrb[0].mxu0
  %2893 = vmatprep.mubr.f32.mxu0 0.0
  %2894 = vmatmul.mubr.f32.gmra.mrb[0].mxu0 %v2727
  %v2895 = vpop.f32.mrb[0].mxu0
  %v2896 = vadd.f32 0.0, %v2895
  %v2897 = vpop.f32.mrb[0].mxu0
  %2898 = vmatprep.mubr.f32.mxu0 0.0
  %2899 = vmatmul.mubr.f32.gmra.mrb[0].mxu0 %v2730
  %v2900 = vpop.f32.mrb[0].mxu0
  %v2901 = vadd.f32 0.0, %v2900
  %v2902 = vpop.f32.mrb[0].mxu0
  %2903 = vmatprep.mubr.f32.mxu0 0.0
  %2904 = vmatmul.mubr.f32.gmra.mrb[0].mxu0 %v2733
  %v2905 = vpop.f32.mrb[0].mxu0
  %v2906 = vadd.f32 0.0, %v2905
  %v2907 = vpop.f32.mrb[0].mxu0
  %2908 = vmatprep.mubr.f32.mxu0 0.0
  %2909 = vmatmul.mubr.f32.gmra.mrb[0].mxu0 %v2736
  %v2910 = vpop.f32.mrb[0].mxu0
  %v2911 = vadd.f32 0.0, %v2910
  %v2912 = vpop.f32.mrb[0].mxu0
  %2913 = vmatprep.mubr.f32.mxu0 0.0
  %2914 = vmatmul.mubr.f32.gmra.mrb[0].mxu0 %v2739
  %v2915 = vpop.f32.mrb[0].mxu0
  %v2916 = vadd.f32 0.0, %v2915
  %v2917 = vpop.f32.mrb[0].mxu0
  %2918 = vmatprep.mubr.f32.mxu0 0.0
  %2919 = vmatmul.mubr.f32.gmra.mrb[0].mxu0 %v2742
  %v2920 = vpop.f32.mrb[0].mxu0
  %v2921 = vadd.f32 0.0, %v2920
  %v2922 = vpop.f32.mrb[0].mxu0
  %2923 = vmatprep.mubr.f32.mxu0 0.0
  %2924 = vmatmul.mubr.f32.gmra.mrb[0].mxu0 %v2745
  %v2925 = vpop.f32.mrb[0].mxu0
  %v2926 = vadd.f32 0.0, %v2925
  %v2927 = vpop.f32.mrb[0].mxu0
  %2928 = vmatprep.mubr.f32.mxu0 0.0
  %2929 = vmatmul.mubr.f32.gmra.mrb[0].mxu0 %v2748
  %v2930 = vpop.f32.mrb[0].mxu0
  %v2931 = vadd.f32 0.0, %v2930
  %v2932 = vpop.f32.mrb[0].mxu0
  %2933 = vmatprep.mubr.f32.mxu0 0.0
  %2934 = vmatmul.mubr.f32.gmra.mrb[0].mxu0 %v2751
  %v2935 = vpop.f32.mrb[0].mxu0
  %v2936 = vadd.f32 0.0, %v2935
  %v2937 = vpop.f32.mrb[0].mxu0
  %2938 = vmatprep.mubr.f32.mxu0 0.0
  %2939 = vmatmul.mubr.f32.gmra.mrb[0].mxu0 %v2754
  %v2940 = vpop.f32.mrb[0].mxu0
  %v2941 = vadd.f32 0.0, %v2940
  %v2942 = vpop.f32.mrb[0].mxu0
  %2943 = vmatprep.mubr.f32.mxu0 0.0
  %2944 = vmatmul.mubr.f32.gmra.mrb[0].mxu0 %v2757
  %v2945 = vpop.f32.mrb[0].mxu0
  %v2946 = vadd.f32 0.0, %v2945
  %v2947 = vpop.f32.mrb[0].mxu0
  %2948 = vmatprep.mubr.f32.mxu0 0.0
  %2949 = vmatmul.mubr.f32.gmra.mrb[0].mxu0 %v2760
  %v2950 = vpop.f32.mrb[0].mxu0
  %v2951 = vadd.f32 0.0, %v2950
  %v2952 = vpop.f32.mrb[0].mxu0
  %2953 = vmatprep.mubr.f32.mxu0 0.0
  %2954 = vmatmul.mubr.f32.gmra.mrb[0].mxu0 %v2763
  %v2955 = vpop.f32.mrb[0].mxu0
  %v2956 = vadd.f32 0.0, %v2955
  %v2957 = vpop.f32.mrb[0].mxu0
  %2958 = vmatprep.mubr.f32.mxu0 0.0
  %2959 = vmatmul.mubr.f32.gmra.mrb[0].mxu0 %v2766
  %v2960 = vpop.f32.mrb[0].mxu0
  %v2961 = vadd.f32 0.0, %v2960
  %v2962 = vpop.f32.mrb[0].mxu0
  %2963 = vmatprep.mubr.f32.mxu0 0.0
  %2964 = vmatmul.mubr.f32.gmra.mrb[0].mxu0 %v2769
  %v2965 = vpop.f32.mrb[0].mxu0
  %v2966 = vadd.f32 0.0, %v2965
  %v2967 = vpop.f32.mrb[0].mxu0
  %2968 = vmatprep.mubr.f32.mxu0 0.0
  %2969 = vmatmul.mubr.f32.gmra.mrb[0].mxu0 %v2772
  %v2970 = vpop.f32.mrb[0].mxu0
  %v2971 = vadd.f32 0.0, %v2970
  %v2972 = vpop.f32.mrb[0].mxu0
  %2973 = vmatprep.mubr.f32.mxu0 0.0
  %2974 = vmatmul.mubr.f32.gmra.mrb[0].mxu0 %v2775
  %v2975 = vpop.f32.mrb[0].mxu0
  %v2976 = vadd.f32 0.0, %v2975
  %v2977 = vpop.f32.mrb[0].mxu0
  %2978 = vmatprep.mubr.f32.mxu0 0.0
  %2979 = vmatmul.mubr.f32.gmra.mrb[0].mxu0 %v2778
  %v2980 = vpop.f32.mrb[0].mxu0
  %v2981 = vadd.f32 0.0, %v2980
  %v2982 = vpop.f32.mrb[0].mxu0
  %2983 = vmatprep.mubr.f32.mxu0 0.0
  %2984 = vmatmul.mubr.f32.gmra.mrb[0].mxu0 %v2781
  %v2985 = vpop.f32.mrb[0].mxu0
  %v2986 = vadd.f32 0.0, %v2985
  %v2987 = vpop.f32.mrb[0].mxu0
  %2988 = vmatprep.mubr.f32.mxu0 0.0
  %2989 = vmatmul.mubr.f32.gmra.mrb[0].mxu0 %v2784
  %v2990 = vpop.f32.mrb[0].mxu0
  %v2991 = vadd.f32 0.0, %v2990
  %v2992 = vpop.f32.mrb[0].mxu0
  %2993 = vmatprep.mubr.f32.mxu0 0.0
  %2994 = vmatmul.mubr.f32.gmra.mrb[0].mxu0 %v2787
  %v2995 = vpop.f32.mrb[0].mxu0
  %v2996 = vadd.f32 0.0, %v2995
  %v2997 = vpop.f32.mrb[0].mxu0
  %2998 = vmatprep.mubr.f32.mxu0 0.0
  %2999 = vmatmul.mubr.f32.gmra.mrb[0].mxu0 %v2790
  %v3000 = vpop.f32.mrb[0].mxu0
  %v3001 = vadd.f32 0.0, %v3000
  %v3002 = vpop.f32.mrb[0].mxu0
  %3003 = vmatprep.mubr.f32.mxu0 0.0
  %3004 = vmatmul.mubr.f32.gmra.mrb[0].mxu0 %v2793
  %v3005 = vpop.f32.mrb[0].mxu0
  %v3006 = vadd.f32 0.0, %v3005
  %v3007 = vpop.f32.mrb[0].mxu0
  %3008 = vmatprep.mubr.f32.mxu0 0.0
  %3009 = vmatmul.mubr.f32.gmra.mrb[0].mxu0 %v2796
  %v3010 = vpop.f32.mrb[0].mxu0
  %v3011 = vadd.f32 0.0, %v3010
  %v3012 = vpop.f32.mrb[0].mxu0
  %3013 = vmatprep.mubr.f32.mxu0 0.0
  %3014 = vmatmul.mubr.f32.gmra.mrb[0].mxu0 %v2799
  %v3015 = vpop.f32.mrb[0].mxu0
  %v3016 = vadd.f32 0.0, %v3015
  %v3017 = vpop.f32.mrb[0].mxu0
  %3018 = vmatprep.mubr.f32.mxu0 0.0
  %3019 = vmatmul.mubr.f32.gmra.mrb[0].mxu0 %v2802
  %v3020 = vpop.f32.mrb[0].mxu0
  %v3021 = vadd.f32 0.0, %v3020
  %v3022 = vpop.f32.mrb[0].mxu0
  %3023 = vmatprep.mubr.f32.mxu0 0.0
  %3024 = vmatmul.mubr.f32.gmra.mrb[0].mxu0 %v2805
  %v3025 = vpop.f32.mrb[0].mxu0
  %v3026 = vadd.f32 0.0, %v3025
  %v3027 = vpop.f32.mrb[0].mxu0
  %3028 = vmatprep.mubr.f32.mxu0 0.0
  %3029 = vmatmul.mubr.f32.gmra.mrb[0].mxu0 %v2808
  %v3030 = vpop.f32.mrb[0].mxu0
  %v3031 = vadd.f32 0.0, %v3030
  %v3032 = vpop.f32.mrb[0].mxu0
  %3033 = vmatprep.mubr.f32.mxu0 0.0
  %3034 = vmatmul.mubr.f32.gmra.mrb[0].mxu0 %v2811
  %v3035 = vpop.f32.mrb[0].mxu0
  %v3036 = vadd.f32 0.0, %v3035
  %v3037 = vpop.f32.mrb[0].mxu0
  %3038 = vmatprep.mubr.f32.mxu0 0.0
  %3039 = vmatmul.mubr.f32.gmra.mrb[0].mxu0 %v2814
  %v3040 = vpop.f32.mrb[0].mxu0
  %v3041 = vadd.f32 0.0, %v3040
  %v3042 = vpop.f32.mrb[0].mxu0
  %3043 = vdwg.mxu0
  %v3044 = vadd.f32 %v2653, %v2886
  %v3045 = vadd.f32 %v2654, %v2891
  %v3046 = vadd.f32 %v2655, %v2896
  %v3047 = vadd.f32 %v2656, %v2901
  %v3048 = vadd.f32 %v2657, %v2906
  %v3049 = vadd.f32 %v2658, %v2911
  %v3050 = vadd.f32 %v2659, %v2916
  %v3051 = vadd.f32 %v2660, %v2921
  %v3052 = vadd.f32 %v2661, %v2926
  %v3053 = vadd.f32 %v2662, %v2931
  %v3054 = vadd.f32 %v2663, %v2936
  %v3055 = vadd.f32 %v2664, %v2941
  %v3056 = vadd.f32 %v2665, %v2946
  %v3057 = vadd.f32 %v2666, %v2951
  %v3058 = vadd.f32 %v2667, %v2956
  %v3059 = vadd.f32 %v2668, %v2961
  %v3060 = vadd.f32 %v2669, %v2966
  %v3061 = vadd.f32 %v2670, %v2971
  %v3062 = vadd.f32 %v2671, %v2976
  %v3063 = vadd.f32 %v2672, %v2981
  %v3064 = vadd.f32 %v2673, %v2986
  %v3065 = vadd.f32 %v2674, %v2991
  %v3066 = vadd.f32 %v2675, %v2996
  %v3067 = vadd.f32 %v2676, %v3001
  %v3068 = vadd.f32 %v2677, %v3006
  %v3069 = vadd.f32 %v2678, %v3011
  %v3070 = vadd.f32 %v2679, %v3016
  %v3071 = vadd.f32 %v2680, %v3021
  %v3072 = vadd.f32 %v2681, %v3026
  %v3073 = vadd.f32 %v2682, %v3031
  %v3074 = vadd.f32 %v2683, %v3036
  %v3075 = vadd.f32 %v2684, %v3041
  %v3076 = vld [vmem:[%s2294 + $0x1] sm:$0xff]
  %v3077 = vld [vmem:[%s2294 + $0x11] sm:$0xff]
  %v3078 = vld [vmem:[%s2294 + $0x21] sm:$0xff]
  %v3079 = vld [vmem:[%s2294 + $0x31] sm:$0xff]
  %v3080 = vld [vmem:[%s2294 + $0x41] sm:$0xff]
  %v3081 = vld [vmem:[%s2294 + $0x51] sm:$0xff]
  %v3082 = vld [vmem:[%s2294 + $0x61] sm:$0xff]
  %v3083 = vld [vmem:[%s2294 + $0x71] sm:$0xff]
  %v3084 = vld [vmem:[%s2294 + $0x81] sm:$0xff]
  %v3085 = vld [vmem:[%s2294 + $0x91] sm:$0xff]
  %v3086 = vld [vmem:[%s2294 + $0xa1] sm:$0xff]
  %v3087 = vld [vmem:[%s2294 + $0xb1] sm:$0xff]
  %v3088 = vld [vmem:[%s2294 + $0xc1] sm:$0xff]
  %v3089 = vld [vmem:[%s2294 + $0xd1] sm:$0xff]
  %v3090 = vld [vmem:[%s2294 + $0xe1] sm:$0xff]
  %v3091 = vld [vmem:[%s2294 + $0xf1] sm:$0xff]
  %v3092 = vld [vmem:[%s2294 + $0x121] sm:$0xff]
  %v3093 = vld [vmem:[%s2294 + $0x131] sm:$0xff]
  %v3094 = vld [vmem:[%s2294 + $0x141] sm:$0xff]
  %v3095 = vld [vmem:[%s2294 + $0x151] sm:$0xff]
  %v3096 = vld [vmem:[%s2294 + $0x161] sm:$0xff]
  %v3097 = vld [vmem:[%s2294 + $0x171] sm:$0xff]
  %v3098 = vld [vmem:[%s2294 + $0x181] sm:$0xff]
  %v3099 = vld [vmem:[%s2294 + $0x191] sm:$0xff]
  %v3100 = vld [vmem:[%s2294 + $0x1a1] sm:$0xff]
  %v3101 = vld [vmem:[%s2294 + $0x1b1] sm:$0xff]
  %v3102 = vld [vmem:[%s2294 + $0x1c1] sm:$0xff]
  %v3103 = vld [vmem:[%s2294 + $0x1d1] sm:$0xff]
  %v3104 = vld [vmem:[%s2294 + $0x1e1] sm:$0xff]
  %v3105 = vld [vmem:[%s2294 + $0x1f1] sm:$0xff]
  %v3106 = vld [vmem:[%s2294 + $0x201] sm:$0xff]
  %v3107 = vld [vmem:[%s2294 + $0x211] sm:$0xff]
  %s3108 = scalar_lea.vmem %s1, 32
  %v3109 = vld [vmem:[%s3108] sm:$0xf]
  %v3111 = vsel %vm82, %v3076, 0
  %v3114 = vsel %vm82, %v3077, 0
  %v3117 = vsel %vm82, %v3078, 0
  %v3120 = vsel %vm82, %v3079, 0
  %v3123 = vsel %vm82, %v3080, 0
  %v3126 = vsel %vm82, %v3081, 0
  %v3129 = vsel %vm82, %v3082, 0
  %v3132 = vsel %vm82, %v3083, 0
  %v3135 = vsel %vm82, %v3084, 0
  %v3138 = vsel %vm82, %v3085, 0
  %v3141 = vsel %vm82, %v3086, 0
  %v3144 = vsel %vm82, %v3087, 0
  %v3147 = vsel %vm82, %v3088, 0
  %v3150 = vsel %vm82, %v3089, 0
  %v3153 = vsel %vm82, %v3090, 0
  %v3156 = vsel %vm82, %v3091, 0
  %v3159 = vsel %vm82, %v3092, 0
  %v3162 = vsel %vm82, %v3093, 0
  %v3165 = vsel %vm82, %v3094, 0
  %v3168 = vsel %vm82, %v3095, 0
  %v3171 = vsel %vm82, %v3096, 0
  %v3174 = vsel %vm82, %v3097, 0
  %v3177 = vsel %vm82, %v3098, 0
  %v3180 = vsel %vm82, %v3099, 0
  %v3183 = vsel %vm82, %v3100, 0
  %v3186 = vsel %vm82, %v3101, 0
  %v3189 = vsel %vm82, %v3102, 0
  %v3192 = vsel %vm82, %v3103, 0
  %v3195 = vsel %vm82, %v3104, 0
  %v3198 = vsel %vm82, %v3105, 0
  %v3201 = vsel %vm82, %v3106, 0
  %v3204 = vsel %vm82, %v3107, 0
  %v3207 = vsel %vm179, %v3109, 0
  %3209 = vmatprep.subr.mxu0 0.0
  %3210 = vmatpush1.msra.mxu0 %v3207
  %3211 = vmatprep.subr.mxu0 0.0
  %3212 = vmatpush1.msra.mxu0 0.0
  %3213 = vmatprep.subr.mxu0 0.0
  %3214 = vmatpush1.msra.mxu0 0.0
  %3215 = vmatprep.subr.mxu0 0.0
  %3216 = vmatpush1.msra.mxu0 0.0
  %3217 = vmatprep.subr.mxu0 0.0
  %3218 = vmatpush1.msra.mxu0 0.0
  %3219 = vmatprep.subr.mxu0 0.0
  %3220 = vmatpush1.msra.mxu0 0.0
  %3221 = vmatprep.subr.mxu0 0.0
  %3222 = vmatpush1.msra.mxu0 0.0
  %3223 = vmatprep.subr.mxu0 0.0
  %3224 = vmatpush1.msra.mxu0 0.0
  %3225 = vmatprep.subr.mxu0 0.0
  %3226 = vmatpush1.msra.mxu0 0.0
  %3227 = vmatprep.subr.mxu0 0.0
  %3228 = vmatpush1.msra.mxu0 0.0
  %3229 = vmatprep.subr.mxu0 0.0
  %3230 = vmatpush1.msra.mxu0 0.0
  %3231 = vmatprep.subr.mxu0 0.0
  %3232 = vmatpush1.msra.mxu0 0.0
  %3233 = vmatprep.subr.mxu0 0.0
  %3234 = vmatpush1.msra.mxu0 0.0
  %3235 = vmatprep.subr.mxu0 0.0
  %3236 = vmatpush1.msra.mxu0 0.0
  %3237 = vmatprep.subr.mxu0 0.0
  %3238 = vmatpush1.msra.mxu0 0.0
  %3239 = vmatprep.subr.mxu0 0.0
  %3240 = vmatpush1.msra.mxu0 0.0
  %3241 = vmatprep.subr.mxu0 0.0
  %3242 = vmatpush1.msra.mxu0 0.0
  %3243 = vmatprep.subr.mxu0 0.0
  %3244 = vmatpush1.msra.mxu0 0.0
  %3245 = vmatprep.subr.mxu0 0.0
  %3246 = vmatpush1.msra.mxu0 0.0
  %3247 = vmatprep.subr.mxu0 0.0
  %3248 = vmatpush1.msra.mxu0 0.0
  %3249 = vmatprep.subr.mxu0 0.0
  %3250 = vmatpush1.msra.mxu0 0.0
  %3251 = vmatprep.subr.mxu0 0.0
  %3252 = vmatpush1.msra.mxu0 0.0
  %3253 = vmatprep.subr.mxu0 0.0
  %3254 = vmatpush1.msra.mxu0 0.0
  %3255 = vmatprep.subr.mxu0 0.0
  %3256 = vmatpush1.msra.mxu0 0.0
  %3257 = vmatprep.subr.mxu0 0.0
  %3258 = vmatpush1.msra.mxu0 0.0
  %3259 = vmatprep.subr.mxu0 0.0
  %3260 = vmatpush1.msra.mxu0 0.0
  %3261 = vmatprep.subr.mxu0 0.0
  %3262 = vmatpush1.msra.mxu0 0.0
  %3263 = vmatprep.subr.mxu0 0.0
  %3264 = vmatpush1.msra.mxu0 0.0
  %3265 = vmatprep.subr.mxu0 0.0
  %3266 = vmatpush1.msra.mxu0 0.0
  %3267 = vmatprep.subr.mxu0 0.0
  %3268 = vmatpush1.msra.mxu0 0.0
  %3269 = vmatprep.subr.mxu0 0.0
  %3270 = vmatpush1.msra.mxu0 0.0
  %3271 = vmatprep.subr.mxu0 0.0
  %3272 = vmatpush1.msra.mxu0 0.0
  %3273 = vmatprep.mubr.f32.mxu0 0.0
  %3274 = vmatmul.mubr.f32.gmra.mrb[0].mxu0 %v3111
  %v3275 = vpop.f32.mrb[0].mxu0
  %v3276 = vadd.f32 0.0, %v3275
  %v3277 = vpop.f32.mrb[0].mxu0
  %3278 = vmatprep.mubr.f32.mxu0 0.0
  %3279 = vmatmul.mubr.f32.gmra.mrb[0].mxu0 %v3114
  %v3280 = vpop.f32.mrb[0].mxu0
  %v3281 = vadd.f32 0.0, %v3280
  %v3282 = vpop.f32.mrb[0].mxu0
  %3283 = vmatprep.mubr.f32.mxu0 0.0
  %3284 = vmatmul.mubr.f32.gmra.mrb[0].mxu0 %v3117
  %v3285 = vpop.f32.mrb[0].mxu0
  %v3286 = vadd.f32 0.0, %v3285
  %v3287 = vpop.f32.mrb[0].mxu0
  %3288 = vmatprep.mubr.f32.mxu0 0.0
  %3289 = vmatmul.mubr.f32.gmra.mrb[0].mxu0 %v3120
  %v3290 = vpop.f32.mrb[0].mxu0
  %v3291 = vadd.f32 0.0, %v3290
  %v3292 = vpop.f32.mrb[0].mxu0
  %3293 = vmatprep.mubr.f32.mxu0 0.0
  %3294 = vmatmul.mubr.f32.gmra.mrb[0].mxu0 %v3123
  %v3295 = vpop.f32.mrb[0].mxu0
  %v3296 = vadd.f32 0.0, %v3295
  %v3297 = vpop.f32.mrb[0].mxu0
  %3298 = vmatprep.mubr.f32.mxu0 0.0
  %3299 = vmatmul.mubr.f32.gmra.mrb[0].mxu0 %v3126
  %v3300 = vpop.f32.mrb[0].mxu0
  %v3301 = vadd.f32 0.0, %v3300
  %v3302 = vpop.f32.mrb[0].mxu0
  %3303 = vmatprep.mubr.f32.mxu0 0.0
  %3304 = vmatmul.mubr.f32.gmra.mrb[0].mxu0 %v3129
  %v3305 = vpop.f32.mrb[0].mxu0
  %v3306 = vadd.f32 0.0, %v3305
  %v3307 = vpop.f32.mrb[0].mxu0
  %3308 = vmatprep.mubr.f32.mxu0 0.0
  %3309 = vmatmul.mubr.f32.gmra.mrb[0].mxu0 %v3132
  %v3310 = vpop.f32.mrb[0].mxu0
  %v3311 = vadd.f32 0.0, %v3310
  %v3312 = vpop.f32.mrb[0].mxu0
  %3313 = vmatprep.mubr.f32.mxu0 0.0
  %3314 = vmatmul.mubr.f32.gmra.mrb[0].mxu0 %v3135
  %v3315 = vpop.f32.mrb[0].mxu0
  %v3316 = vadd.f32 0.0, %v3315
  %v3317 = vpop.f32.mrb[0].mxu0
  %3318 = vmatprep.mubr.f32.mxu0 0.0
  %3319 = vmatmul.mubr.f32.gmra.mrb[0].mxu0 %v3138
  %v3320 = vpop.f32.mrb[0].mxu0
  %v3321 = vadd.f32 0.0, %v3320
  %v3322 = vpop.f32.mrb[0].mxu0
  %3323 = vmatprep.mubr.f32.mxu0 0.0
  %3324 = vmatmul.mubr.f32.gmra.mrb[0].mxu0 %v3141
  %v3325 = vpop.f32.mrb[0].mxu0
  %v3326 = vadd.f32 0.0, %v3325
  %v3327 = vpop.f32.mrb[0].mxu0
  %3328 = vmatprep.mubr.f32.mxu0 0.0
  %3329 = vmatmul.mubr.f32.gmra.mrb[0].mxu0 %v3144
  %v3330 = vpop.f32.mrb[0].mxu0
  %v3331 = vadd.f32 0.0, %v3330
  %v3332 = vpop.f32.mrb[0].mxu0
  %3333 = vmatprep.mubr.f32.mxu0 0.0
  %3334 = vmatmul.mubr.f32.gmra.mrb[0].mxu0 %v3147
  %v3335 = vpop.f32.mrb[0].mxu0
  %v3336 = vadd.f32 0.0, %v3335
  %v3337 = vpop.f32.mrb[0].mxu0
  %3338 = vmatprep.mubr.f32.mxu0 0.0
  %3339 = vmatmul.mubr.f32.gmra.mrb[0].mxu0 %v3150
  %v3340 = vpop.f32.mrb[0].mxu0
  %v3341 = vadd.f32 0.0, %v3340
  %v3342 = vpop.f32.mrb[0].mxu0
  %3343 = vmatprep.mubr.f32.mxu0 0.0
  %3344 = vmatmul.mubr.f32.gmra.mrb[0].mxu0 %v3153
  %v3345 = vpop.f32.mrb[0].mxu0
  %v3346 = vadd.f32 0.0, %v3345
  %v3347 = vpop.f32.mrb[0].mxu0
  %3348 = vmatprep.mubr.f32.mxu0 0.0
  %3349 = vmatmul.mubr.f32.gmra.mrb[0].mxu0 %v3156
  %v3350 = vpop.f32.mrb[0].mxu0
  %v3351 = vadd.f32 0.0, %v3350
  %v3352 = vpop.f32.mrb[0].mxu0
  %3353 = vmatprep.mubr.f32.mxu0 0.0
  %3354 = vmatmul.mubr.f32.gmra.mrb[0].mxu0 %v3159
  %v3355 = vpop.f32.mrb[0].mxu0
  %v3356 = vadd.f32 0.0, %v3355
  %v3357 = vpop.f32.mrb[0].mxu0
  %3358 = vmatprep.mubr.f32.mxu0 0.0
  %3359 = vmatmul.mubr.f32.gmra.mrb[0].mxu0 %v3162
  %v3360 = vpop.f32.mrb[0].mxu0
  %v3361 = vadd.f32 0.0, %v3360
  %v3362 = vpop.f32.mrb[0].mxu0
  %3363 = vmatprep.mubr.f32.mxu0 0.0
  %3364 = vmatmul.mubr.f32.gmra.mrb[0].mxu0 %v3165
  %v3365 = vpop.f32.mrb[0].mxu0
  %v3366 = vadd.f32 0.0, %v3365
  %v3367 = vpop.f32.mrb[0].mxu0
  %3368 = vmatprep.mubr.f32.mxu0 0.0
  %3369 = vmatmul.mubr.f32.gmra.mrb[0].mxu0 %v3168
  %v3370 = vpop.f32.mrb[0].mxu0
  %v3371 = vadd.f32 0.0, %v3370
  %v3372 = vpop.f32.mrb[0].mxu0
  %3373 = vmatprep.mubr.f32.mxu0 0.0
  %3374 = vmatmul.mubr.f32.gmra.mrb[0].mxu0 %v3171
  %v3375 = vpop.f32.mrb[0].mxu0
  %v3376 = vadd.f32 0.0, %v3375
  %v3377 = vpop.f32.mrb[0].mxu0
  %3378 = vmatprep.mubr.f32.mxu0 0.0
  %3379 = vmatmul.mubr.f32.gmra.mrb[0].mxu0 %v3174
  %v3380 = vpop.f32.mrb[0].mxu0
  %v3381 = vadd.f32 0.0, %v3380
  %v3382 = vpop.f32.mrb[0].mxu0
  %3383 = vmatprep.mubr.f32.mxu0 0.0
  %3384 = vmatmul.mubr.f32.gmra.mrb[0].mxu0 %v3177
  %v3385 = vpop.f32.mrb[0].mxu0
  %v3386 = vadd.f32 0.0, %v3385
  %v3387 = vpop.f32.mrb[0].mxu0
  %3388 = vmatprep.mubr.f32.mxu0 0.0
  %3389 = vmatmul.mubr.f32.gmra.mrb[0].mxu0 %v3180
  %v3390 = vpop.f32.mrb[0].mxu0
  %v3391 = vadd.f32 0.0, %v3390
  %v3392 = vpop.f32.mrb[0].mxu0
  %3393 = vmatprep.mubr.f32.mxu0 0.0
  %3394 = vmatmul.mubr.f32.gmra.mrb[0].mxu0 %v3183
  %v3395 = vpop.f32.mrb[0].mxu0
  %v3396 = vadd.f32 0.0, %v3395
  %v3397 = vpop.f32.mrb[0].mxu0
  %3398 = vmatprep.mubr.f32.mxu0 0.0
  %3399 = vmatmul.mubr.f32.gmra.mrb[0].mxu0 %v3186
  %v3400 = vpop.f32.mrb[0].mxu0
  %v3401 = vadd.f32 0.0, %v3400
  %v3402 = vpop.f32.mrb[0].mxu0
  %3403 = vmatprep.mubr.f32.mxu0 0.0
  %3404 = vmatmul.mubr.f32.gmra.mrb[0].mxu0 %v3189
  %v3405 = vpop.f32.mrb[0].mxu0
  %v3406 = vadd.f32 0.0, %v3405
  %v3407 = vpop.f32.mrb[0].mxu0
  %3408 = vmatprep.mubr.f32.mxu0 0.0
  %3409 = vmatmul.mubr.f32.gmra.mrb[0].mxu0 %v3192
  %v3410 = vpop.f32.mrb[0].mxu0
  %v3411 = vadd.f32 0.0, %v3410
  %v3412 = vpop.f32.mrb[0].mxu0
  %3413 = vmatprep.mubr.f32.mxu0 0.0
  %3414 = vmatmul.mubr.f32.gmra.mrb[0].mxu0 %v3195
  %v3415 = vpop.f32.mrb[0].mxu0
  %v3416 = vadd.f32 0.0, %v3415
  %v3417 = vpop.f32.mrb[0].mxu0
  %3418 = vmatprep.mubr.f32.mxu0 0.0
  %3419 = vmatmul.mubr.f32.gmra.mrb[0].mxu0 %v3198
  %v3420 = vpop.f32.mrb[0].mxu0
  %v3421 = vadd.f32 0.0, %v3420
  %v3422 = vpop.f32.mrb[0].mxu0
  %3423 = vmatprep.mubr.f32.mxu0 0.0
  %3424 = vmatmul.mubr.f32.gmra.mrb[0].mxu0 %v3201
  %v3425 = vpop.f32.mrb[0].mxu0
  %v3426 = vadd.f32 0.0, %v3425
  %v3427 = vpop.f32.mrb[0].mxu0
  %3428 = vmatprep.mubr.f32.mxu0 0.0
  %3429 = vmatmul.mubr.f32.gmra.mrb[0].mxu0 %v3204
  %v3430 = vpop.f32.mrb[0].mxu0
  %v3431 = vadd.f32 0.0, %v3430
  %v3432 = vpop.f32.mrb[0].mxu0
  %3433 = vdwg.mxu0
  %v3434 = vadd.f32 %v3044, %v3276
  %v3435 = vadd.f32 %v3045, %v3281
  %v3436 = vadd.f32 %v3046, %v3286
  %v3437 = vadd.f32 %v3047, %v3291
  %v3438 = vadd.f32 %v3048, %v3296
  %v3439 = vadd.f32 %v3049, %v3301
  %v3440 = vadd.f32 %v3050, %v3306
  %v3441 = vadd.f32 %v3051, %v3311
  %v3442 = vadd.f32 %v3052, %v3316
  %v3443 = vadd.f32 %v3053, %v3321
  %v3444 = vadd.f32 %v3054, %v3326
  %v3445 = vadd.f32 %v3055, %v3331
  %v3446 = vadd.f32 %v3056, %v3336
  %v3447 = vadd.f32 %v3057, %v3341
  %v3448 = vadd.f32 %v3058, %v3346
  %v3449 = vadd.f32 %v3059, %v3351
  %v3450 = vadd.f32 %v3060, %v3356
  %v3451 = vadd.f32 %v3061, %v3361
  %v3452 = vadd.f32 %v3062, %v3366
  %v3453 = vadd.f32 %v3063, %v3371
  %v3454 = vadd.f32 %v3064, %v3376
  %v3455 = vadd.f32 %v3065, %v3381
  %v3456 = vadd.f32 %v3066, %v3386
  %v3457 = vadd.f32 %v3067, %v3391
  %v3458 = vadd.f32 %v3068, %v3396
  %v3459 = vadd.f32 %v3069, %v3401
  %v3460 = vadd.f32 %v3070, %v3406
  %v3461 = vadd.f32 %v3071, %v3411
  %v3462 = vadd.f32 %v3072, %v3416
  %v3463 = vadd.f32 %v3073, %v3421
  %v3464 = vadd.f32 %v3074, %v3426
  %v3465 = vadd.f32 %v3075, %v3431
  %3466 = vmatprep.subr.mxu0 0.0
  %3467 = vmatpush1.msra.mxu0 %v181
  %3468 = vmatprep.subr.mxu0 0.0
  %3469 = vmatpush1.msra.mxu0 0.0
  %3470 = vmatprep.subr.mxu0 0.0
  %3471 = vmatpush1.msra.mxu0 0.0
  %3472 = vmatprep.subr.mxu0 0.0
  %3473 = vmatpush1.msra.mxu0 0.0
  %3474 = vmatprep.subr.mxu0 0.0
  %3475 = vmatpush1.msra.mxu0 0.0
  %3476 = vmatprep.subr.mxu0 0.0
  %3477 = vmatpush1.msra.mxu0 0.0
  %3478 = vmatprep.subr.mxu0 0.0
  %3479 = vmatpush1.msra.mxu0 0.0
  %3480 = vmatprep.subr.mxu0 0.0
  %3481 = vmatpush1.msra.mxu0 0.0
  %3482 = vmatprep.subr.mxu0 0.0
  %3483 = vmatpush1.msra.mxu0 0.0
  %3484 = vmatprep.subr.mxu0 0.0
  %3485 = vmatpush1.msra.mxu0 0.0
  %3486 = vmatprep.subr.mxu0 0.0
  %3487 = vmatpush1.msra.mxu0 0.0
  %3488 = vmatprep.subr.mxu0 0.0
  %3489 = vmatpush1.msra.mxu0 0.0
  %3490 = vmatprep.subr.mxu0 0.0
  %3491 = vmatpush1.msra.mxu0 0.0
  %3492 = vmatprep.subr.mxu0 0.0
  %3493 = vmatpush1.msra.mxu0 0.0
  %3494 = vmatprep.subr.mxu0 0.0
  %3495 = vmatpush1.msra.mxu0 0.0
  %3496 = vmatprep.subr.mxu0 0.0
  %3497 = vmatpush1.msra.mxu0 0.0
  %3498 = vmatprep.subr.mxu0 0.0
  %3499 = vmatpush1.msra.mxu0 0.0
  %3500 = vmatprep.subr.mxu0 0.0
  %3501 = vmatpush1.msra.mxu0 0.0
  %3502 = vmatprep.subr.mxu0 0.0
  %3503 = vmatpush1.msra.mxu0 0.0
  %3504 = vmatprep.subr.mxu0 0.0
  %3505 = vmatpush1.msra.mxu0 0.0
  %3506 = vmatprep.subr.mxu0 0.0
  %3507 = vmatpush1.msra.mxu0 0.0
  %3508 = vmatprep.subr.mxu0 0.0
  %3509 = vmatpush1.msra.mxu0 0.0
  %3510 = vmatprep.subr.mxu0 0.0
  %3511 = vmatpush1.msra.mxu0 0.0
  %3512 = vmatprep.subr.mxu0 0.0
  %3513 = vmatpush1.msra.mxu0 0.0
  %3514 = vmatprep.subr.mxu0 0.0
  %3515 = vmatpush1.msra.mxu0 0.0
  %3516 = vmatprep.subr.mxu0 0.0
  %3517 = vmatpush1.msra.mxu0 0.0
  %3518 = vmatprep.subr.mxu0 0.0
  %3519 = vmatpush1.msra.mxu0 0.0
  %3520 = vmatprep.subr.mxu0 0.0
  %3521 = vmatpush1.msra.mxu0 0.0
  %3522 = vmatprep.subr.mxu0 0.0
  %3523 = vmatpush1.msra.mxu0 0.0
  %3524 = vmatprep.subr.mxu0 0.0
  %3525 = vmatpush1.msra.mxu0 0.0
  %3526 = vmatprep.subr.mxu0 0.0
  %3527 = vmatpush1.msra.mxu0 0.0
  %3528 = vmatprep.subr.mxu0 0.0
  %3529 = vmatpush1.msra.mxu0 0.0
  %3530 = vmatprep.mubr.f32.mxu0 0.0
  %3531 = vmatmul.mubr.f32.gmra.mrb[0].mxu0 %v767
  %v3532 = vpop.f32.mrb[0].mxu0
  %v3533 = vadd.f32 0.0, %v3532
  %v3534 = vpop.f32.mrb[0].mxu0
  %3535 = vmatprep.mubr.f32.mxu0 0.0
  %3536 = vmatmul.mubr.f32.gmra.mrb[0].mxu0 %v770
  %v3537 = vpop.f32.mrb[0].mxu0
  %v3538 = vadd.f32 0.0, %v3537
  %v3539 = vpop.f32.mrb[0].mxu0
  %3540 = vmatprep.mubr.f32.mxu0 0.0
  %3541 = vmatmul.mubr.f32.gmra.mrb[0].mxu0 %v773
  %v3542 = vpop.f32.mrb[0].mxu0
  %v3543 = vadd.f32 0.0, %v3542
  %v3544 = vpop.f32.mrb[0].mxu0
  %3545 = vmatprep.mubr.f32.mxu0 0.0
  %3546 = vmatmul.mubr.f32.gmra.mrb[0].mxu0 %v776
  %v3547 = vpop.f32.mrb[0].mxu0
  %v3548 = vadd.f32 0.0, %v3547
  %v3549 = vpop.f32.mrb[0].mxu0
  %3550 = vmatprep.mubr.f32.mxu0 0.0
  %3551 = vmatmul.mubr.f32.gmra.mrb[0].mxu0 %v779
  %v3552 = vpop.f32.mrb[0].mxu0
  %v3553 = vadd.f32 0.0, %v3552
  %v3554 = vpop.f32.mrb[0].mxu0
  %3555 = vmatprep.mubr.f32.mxu0 0.0
  %3556 = vmatmul.mubr.f32.gmra.mrb[0].mxu0 %v782
  %v3557 = vpop.f32.mrb[0].mxu0
  %v3558 = vadd.f32 0.0, %v3557
  %v3559 = vpop.f32.mrb[0].mxu0
  %3560 = vmatprep.mubr.f32.mxu0 0.0
  %3561 = vmatmul.mubr.f32.gmra.mrb[0].mxu0 %v785
  %v3562 = vpop.f32.mrb[0].mxu0
  %v3563 = vadd.f32 0.0, %v3562
  %v3564 = vpop.f32.mrb[0].mxu0
  %3565 = vmatprep.mubr.f32.mxu0 0.0
  %3566 = vmatmul.mubr.f32.gmra.mrb[0].mxu0 %v788
  %v3567 = vpop.f32.mrb[0].mxu0
  %v3568 = vadd.f32 0.0, %v3567
  %v3569 = vpop.f32.mrb[0].mxu0
  %3570 = vmatprep.mubr.f32.mxu0 0.0
  %3571 = vmatmul.mubr.f32.gmra.mrb[0].mxu0 %v791
  %v3572 = vpop.f32.mrb[0].mxu0
  %v3573 = vadd.f32 0.0, %v3572
  %v3574 = vpop.f32.mrb[0].mxu0
  %3575 = vmatprep.mubr.f32.mxu0 0.0
  %3576 = vmatmul.mubr.f32.gmra.mrb[0].mxu0 %v794
  %v3577 = vpop.f32.mrb[0].mxu0
  %v3578 = vadd.f32 0.0, %v3577
  %v3579 = vpop.f32.mrb[0].mxu0
  %3580 = vmatprep.mubr.f32.mxu0 0.0
  %3581 = vmatmul.mubr.f32.gmra.mrb[0].mxu0 %v797
  %v3582 = vpop.f32.mrb[0].mxu0
  %v3583 = vadd.f32 0.0, %v3582
  %v3584 = vpop.f32.mrb[0].mxu0
  %3585 = vmatprep.mubr.f32.mxu0 0.0
  %3586 = vmatmul.mubr.f32.gmra.mrb[0].mxu0 %v800
  %v3587 = vpop.f32.mrb[0].mxu0
  %v3588 = vadd.f32 0.0, %v3587
  %v3589 = vpop.f32.mrb[0].mxu0
  %3590 = vmatprep.mubr.f32.mxu0 0.0
  %3591 = vmatmul.mubr.f32.gmra.mrb[0].mxu0 %v803
  %v3592 = vpop.f32.mrb[0].mxu0
  %v3593 = vadd.f32 0.0, %v3592
  %v3594 = vpop.f32.mrb[0].mxu0
  %3595 = vmatprep.mubr.f32.mxu0 0.0
  %3596 = vmatmul.mubr.f32.gmra.mrb[0].mxu0 %v806
  %v3597 = vpop.f32.mrb[0].mxu0
  %v3598 = vadd.f32 0.0, %v3597
  %v3599 = vpop.f32.mrb[0].mxu0
  %3600 = vmatprep.mubr.f32.mxu0 0.0
  %3601 = vmatmul.mubr.f32.gmra.mrb[0].mxu0 %v809
  %v3602 = vpop.f32.mrb[0].mxu0
  %v3603 = vadd.f32 0.0, %v3602
  %v3604 = vpop.f32.mrb[0].mxu0
  %3605 = vmatprep.mubr.f32.mxu0 0.0
  %3606 = vmatmul.mubr.f32.gmra.mrb[0].mxu0 %v812
  %v3607 = vpop.f32.mrb[0].mxu0
  %v3608 = vadd.f32 0.0, %v3607
  %v3609 = vpop.f32.mrb[0].mxu0
  %3610 = vmatprep.mubr.f32.mxu0 0.0
  %3611 = vmatmul.mubr.f32.gmra.mrb[0].mxu0 %v815
  %v3612 = vpop.f32.mrb[0].mxu0
  %v3613 = vadd.f32 0.0, %v3612
  %v3614 = vpop.f32.mrb[0].mxu0
  %3615 = vmatprep.mubr.f32.mxu0 0.0
  %3616 = vmatmul.mubr.f32.gmra.mrb[0].mxu0 %v818
  %v3617 = vpop.f32.mrb[0].mxu0
  %v3618 = vadd.f32 0.0, %v3617
  %v3619 = vpop.f32.mrb[0].mxu0
  %3620 = vmatprep.mubr.f32.mxu0 0.0
  %3621 = vmatmul.mubr.f32.gmra.mrb[0].mxu0 %v821
  %v3622 = vpop.f32.mrb[0].mxu0
  %v3623 = vadd.f32 0.0, %v3622
  %v3624 = vpop.f32.mrb[0].mxu0
  %3625 = vmatprep.mubr.f32.mxu0 0.0
  %3626 = vmatmul.mubr.f32.gmra.mrb[0].mxu0 %v824
  %v3627 = vpop.f32.mrb[0].mxu0
  %v3628 = vadd.f32 0.0, %v3627
  %v3629 = vpop.f32.mrb[0].mxu0
  %3630 = vmatprep.mubr.f32.mxu0 0.0
  %3631 = vmatmul.mubr.f32.gmra.mrb[0].mxu0 %v827
  %v3632 = vpop.f32.mrb[0].mxu0
  %v3633 = vadd.f32 0.0, %v3632
  %v3634 = vpop.f32.mrb[0].mxu0
  %3635 = vmatprep.mubr.f32.mxu0 0.0
  %3636 = vmatmul.mubr.f32.gmra.mrb[0].mxu0 %v830
  %v3637 = vpop.f32.mrb[0].mxu0
  %v3638 = vadd.f32 0.0, %v3637
  %v3639 = vpop.f32.mrb[0].mxu0
  %3640 = vmatprep.mubr.f32.mxu0 0.0
  %3641 = vmatmul.mubr.f32.gmra.mrb[0].mxu0 %v833
  %v3642 = vpop.f32.mrb[0].mxu0
  %v3643 = vadd.f32 0.0, %v3642
  %v3644 = vpop.f32.mrb[0].mxu0
  %3645 = vmatprep.mubr.f32.mxu0 0.0
  %3646 = vmatmul.mubr.f32.gmra.mrb[0].mxu0 %v836
  %v3647 = vpop.f32.mrb[0].mxu0
  %v3648 = vadd.f32 0.0, %v3647
  %v3649 = vpop.f32.mrb[0].mxu0
  %3650 = vmatprep.mubr.f32.mxu0 0.0
  %3651 = vmatmul.mubr.f32.gmra.mrb[0].mxu0 %v839
  %v3652 = vpop.f32.mrb[0].mxu0
  %v3653 = vadd.f32 0.0, %v3652
  %v3654 = vpop.f32.mrb[0].mxu0
  %3655 = vmatprep.mubr.f32.mxu0 0.0
  %3656 = vmatmul.mubr.f32.gmra.mrb[0].mxu0 %v842
  %v3657 = vpop.f32.mrb[0].mxu0
  %v3658 = vadd.f32 0.0, %v3657
  %v3659 = vpop.f32.mrb[0].mxu0
  %3660 = vmatprep.mubr.f32.mxu0 0.0
  %3661 = vmatmul.mubr.f32.gmra.mrb[0].mxu0 %v845
  %v3662 = vpop.f32.mrb[0].mxu0
  %v3663 = vadd.f32 0.0, %v3662
  %v3664 = vpop.f32.mrb[0].mxu0
  %3665 = vmatprep.mubr.f32.mxu0 0.0
  %3666 = vmatmul.mubr.f32.gmra.mrb[0].mxu0 %v848
  %v3667 = vpop.f32.mrb[0].mxu0
  %v3668 = vadd.f32 0.0, %v3667
  %v3669 = vpop.f32.mrb[0].mxu0
  %3670 = vmatprep.mubr.f32.mxu0 0.0
  %3671 = vmatmul.mubr.f32.gmra.mrb[0].mxu0 %v851
  %v3672 = vpop.f32.mrb[0].mxu0
  %v3673 = vadd.f32 0.0, %v3672
  %v3674 = vpop.f32.mrb[0].mxu0
  %3675 = vmatprep.mubr.f32.mxu0 0.0
  %3676 = vmatmul.mubr.f32.gmra.mrb[0].mxu0 %v854
  %v3677 = vpop.f32.mrb[0].mxu0
  %v3678 = vadd.f32 0.0, %v3677
  %v3679 = vpop.f32.mrb[0].mxu0
  %3680 = vmatprep.mubr.f32.mxu0 0.0
  %3681 = vmatmul.mubr.f32.gmra.mrb[0].mxu0 %v857
  %v3682 = vpop.f32.mrb[0].mxu0
  %v3683 = vadd.f32 0.0, %v3682
  %v3684 = vpop.f32.mrb[0].mxu0
  %3685 = vmatprep.mubr.f32.mxu0 0.0
  %3686 = vmatmul.mubr.f32.gmra.mrb[0].mxu0 %v860
  %v3687 = vpop.f32.mrb[0].mxu0
  %v3688 = vadd.f32 0.0, %v3687
  %v3689 = vpop.f32.mrb[0].mxu0
  %3690 = vdwg.mxu0
  %3691 = vmatprep.subr.mxu0 0.0
  %3692 = vmatpush1.msra.mxu0 %v505
  %3693 = vmatprep.subr.mxu0 0.0
  %3694 = vmatpush1.msra.mxu0 0.0
  %3695 = vmatprep.subr.mxu0 0.0
  %3696 = vmatpush1.msra.mxu0 0.0
  %3697 = vmatprep.subr.mxu0 0.0
  %3698 = vmatpush1.msra.mxu0 0.0
  %3699 = vmatprep.subr.mxu0 0.0
  %3700 = vmatpush1.msra.mxu0 0.0
  %3701 = vmatprep.subr.mxu0 0.0
  %3702 = vmatpush1.msra.mxu0 0.0
  %3703 = vmatprep.subr.mxu0 0.0
  %3704 = vmatpush1.msra.mxu0 0.0
  %3705 = vmatprep.subr.mxu0 0.0
  %3706 = vmatpush1.msra.mxu0 0.0
  %3707 = vmatprep.subr.mxu0 0.0
  %3708 = vmatpush1.msra.mxu0 0.0
  %3709 = vmatprep.subr.mxu0 0.0
  %3710 = vmatpush1.msra.mxu0 0.0
  %3711 = vmatprep.subr.mxu0 0.0
  %3712 = vmatpush1.msra.mxu0 0.0
  %3713 = vmatprep.subr.mxu0 0.0
  %3714 = vmatpush1.msra.mxu0 0.0
  %3715 = vmatprep.subr.mxu0 0.0
  %3716 = vmatpush1.msra.mxu0 0.0
  %3717 = vmatprep.subr.mxu0 0.0
  %3718 = vmatpush1.msra.mxu0 0.0
  %3719 = vmatprep.subr.mxu0 0.0
  %3720 = vmatpush1.msra.mxu0 0.0
  %3721 = vmatprep.subr.mxu0 0.0
  %3722 = vmatpush1.msra.mxu0 0.0
  %3723 = vmatprep.subr.mxu0 0.0
  %3724 = vmatpush1.msra.mxu0 0.0
  %3725 = vmatprep.subr.mxu0 0.0
  %3726 = vmatpush1.msra.mxu0 0.0
  %3727 = vmatprep.subr.mxu0 0.0
  %3728 = vmatpush1.msra.mxu0 0.0
  %3729 = vmatprep.subr.mxu0 0.0
  %3730 = vmatpush1.msra.mxu0 0.0
  %3731 = vmatprep.subr.mxu0 0.0
  %3732 = vmatpush1.msra.mxu0 0.0
  %3733 = vmatprep.subr.mxu0 0.0
  %3734 = vmatpush1.msra.mxu0 0.0
  %3735 = vmatprep.subr.mxu0 0.0
  %3736 = vmatpush1.msra.mxu0 0.0
  %3737 = vmatprep.subr.mxu0 0.0
  %3738 = vmatpush1.msra.mxu0 0.0
  %3739 = vmatprep.subr.mxu0 0.0
  %3740 = vmatpush1.msra.mxu0 0.0
  %3741 = vmatprep.subr.mxu0 0.0
  %3742 = vmatpush1.msra.mxu0 0.0
  %3743 = vmatprep.subr.mxu0 0.0
  %3744 = vmatpush1.msra.mxu0 0.0
  %3745 = vmatprep.subr.mxu0 0.0
  %3746 = vmatpush1.msra.mxu0 0.0
  %3747 = vmatprep.subr.mxu0 0.0
  %3748 = vmatpush1.msra.mxu0 0.0
  %3749 = vmatprep.subr.mxu0 0.0
  %3750 = vmatpush1.msra.mxu0 0.0
  %3751 = vmatprep.subr.mxu0 0.0
  %3752 = vmatpush1.msra.mxu0 0.0
  %3753 = vmatprep.subr.mxu0 0.0
  %3754 = vmatpush1.msra.mxu0 0.0
  %3755 = vmatprep.mubr.f32.mxu0 0.0
  %3756 = vmatmul.mubr.f32.gmra.mrb[0].mxu0 %v84
  %v3757 = vpop.f32.mrb[0].mxu0
  %v3758 = vadd.f32 %v3533, %v3757
  %v3759 = vpop.f32.mrb[0].mxu0
  %3760 = vmatprep.mubr.f32.mxu0 0.0
  %3761 = vmatmul.mubr.f32.gmra.mrb[0].mxu0 %v87
  %v3762 = vpop.f32.mrb[0].mxu0
  %v3763 = vadd.f32 %v3538, %v3762
  %v3764 = vpop.f32.mrb[0].mxu0
  %3765 = vmatprep.mubr.f32.mxu0 0.0
  %3766 = vmatmul.mubr.f32.gmra.mrb[0].mxu0 %v90
  %v3767 = vpop.f32.mrb[0].mxu0
  %v3768 = vadd.f32 %v3543, %v3767
  %v3769 = vpop.f32.mrb[0].mxu0
  %3770 = vmatprep.mubr.f32.mxu0 0.0
  %3771 = vmatmul.mubr.f32.gmra.mrb[0].mxu0 %v93
  %v3772 = vpop.f32.mrb[0].mxu0
  %v3773 = vadd.f32 %v3548, %v3772
  %v3774 = vpop.f32.mrb[0].mxu0
  %3775 = vmatprep.mubr.f32.mxu0 0.0
  %3776 = vmatmul.mubr.f32.gmra.mrb[0].mxu0 %v96
  %v3777 = vpop.f32.mrb[0].mxu0
  %v3778 = vadd.f32 %v3553, %v3777
  %v3779 = vpop.f32.mrb[0].mxu0
  %3780 = vmatprep.mubr.f32.mxu0 0.0
  %3781 = vmatmul.mubr.f32.gmra.mrb[0].mxu0 %v99
  %v3782 = vpop.f32.mrb[0].mxu0
  %v3783 = vadd.f32 %v3558, %v3782
  %v3784 = vpop.f32.mrb[0].mxu0
  %3785 = vmatprep.mubr.f32.mxu0 0.0
  %3786 = vmatmul.mubr.f32.gmra.mrb[0].mxu0 %v102
  %v3787 = vpop.f32.mrb[0].mxu0
  %v3788 = vadd.f32 %v3563, %v3787
  %v3789 = vpop.f32.mrb[0].mxu0
  %3790 = vmatprep.mubr.f32.mxu0 0.0
  %3791 = vmatmul.mubr.f32.gmra.mrb[0].mxu0 %v105
  %v3792 = vpop.f32.mrb[0].mxu0
  %v3793 = vadd.f32 %v3568, %v3792
  %v3794 = vpop.f32.mrb[0].mxu0
  %3795 = vmatprep.mubr.f32.mxu0 0.0
  %3796 = vmatmul.mubr.f32.gmra.mrb[0].mxu0 %v108
  %v3797 = vpop.f32.mrb[0].mxu0
  %v3798 = vadd.f32 %v3573, %v3797
  %v3799 = vpop.f32.mrb[0].mxu0
  %3800 = vmatprep.mubr.f32.mxu0 0.0
  %3801 = vmatmul.mubr.f32.gmra.mrb[0].mxu0 %v111
  %v3802 = vpop.f32.mrb[0].mxu0
  %v3803 = vadd.f32 %v3578, %v3802
  %v3804 = vpop.f32.mrb[0].mxu0
  %3805 = vmatprep.mubr.f32.mxu0 0.0
  %3806 = vmatmul.mubr.f32.gmra.mrb[0].mxu0 %v114
  %v3807 = vpop.f32.mrb[0].mxu0
  %v3808 = vadd.f32 %v3583, %v3807
  %v3809 = vpop.f32.mrb[0].mxu0
  %3810 = vmatprep.mubr.f32.mxu0 0.0
  %3811 = vmatmul.mubr.f32.gmra.mrb[0].mxu0 %v117
  %v3812 = vpop.f32.mrb[0].mxu0
  %v3813 = vadd.f32 %v3588, %v3812
  %v3814 = vpop.f32.mrb[0].mxu0
  %3815 = vmatprep.mubr.f32.mxu0 0.0
  %3816 = vmatmul.mubr.f32.gmra.mrb[0].mxu0 %v120
  %v3817 = vpop.f32.mrb[0].mxu0
  %v3818 = vadd.f32 %v3593, %v3817
  %v3819 = vpop.f32.mrb[0].mxu0
  %3820 = vmatprep.mubr.f32.mxu0 0.0
  %3821 = vmatmul.mubr.f32.gmra.mrb[0].mxu0 %v123
  %v3822 = vpop.f32.mrb[0].mxu0
  %v3823 = vadd.f32 %v3598, %v3822
  %v3824 = vpop.f32.mrb[0].mxu0
  %3825 = vmatprep.mubr.f32.mxu0 0.0
  %3826 = vmatmul.mubr.f32.gmra.mrb[0].mxu0 %v126
  %v3827 = vpop.f32.mrb[0].mxu0
  %v3828 = vadd.f32 %v3603, %v3827
  %v3829 = vpop.f32.mrb[0].mxu0
  %3830 = vmatprep.mubr.f32.mxu0 0.0
  %3831 = vmatmul.mubr.f32.gmra.mrb[0].mxu0 %v129
  %v3832 = vpop.f32.mrb[0].mxu0
  %v3833 = vadd.f32 %v3608, %v3832
  %v3834 = vpop.f32.mrb[0].mxu0
  %3835 = vmatprep.mubr.f32.mxu0 0.0
  %3836 = vmatmul.mubr.f32.gmra.mrb[0].mxu0 %v132
  %v3837 = vpop.f32.mrb[0].mxu0
  %v3838 = vadd.f32 %v3613, %v3837
  %v3839 = vpop.f32.mrb[0].mxu0
  %3840 = vmatprep.mubr.f32.mxu0 0.0
  %3841 = vmatmul.mubr.f32.gmra.mrb[0].mxu0 %v135
  %v3842 = vpop.f32.mrb[0].mxu0
  %v3843 = vadd.f32 %v3618, %v3842
  %v3844 = vpop.f32.mrb[0].mxu0
  %3845 = vmatprep.mubr.f32.mxu0 0.0
  %3846 = vmatmul.mubr.f32.gmra.mrb[0].mxu0 %v138
  %v3847 = vpop.f32.mrb[0].mxu0
  %v3848 = vadd.f32 %v3623, %v3847
  %v3849 = vpop.f32.mrb[0].mxu0
  %3850 = vmatprep.mubr.f32.mxu0 0.0
  %3851 = vmatmul.mubr.f32.gmra.mrb[0].mxu0 %v141
  %v3852 = vpop.f32.mrb[0].mxu0
  %v3853 = vadd.f32 %v3628, %v3852
  %v3854 = vpop.f32.mrb[0].mxu0
  %3855 = vmatprep.mubr.f32.mxu0 0.0
  %3856 = vmatmul.mubr.f32.gmra.mrb[0].mxu0 %v144
  %v3857 = vpop.f32.mrb[0].mxu0
  %v3858 = vadd.f32 %v3633, %v3857
  %v3859 = vpop.f32.mrb[0].mxu0
  %3860 = vmatprep.mubr.f32.mxu0 0.0
  %3861 = vmatmul.mubr.f32.gmra.mrb[0].mxu0 %v147
  %v3862 = vpop.f32.mrb[0].mxu0
  %v3863 = vadd.f32 %v3638, %v3862
  %v3864 = vpop.f32.mrb[0].mxu0
  %3865 = vmatprep.mubr.f32.mxu0 0.0
  %3866 = vmatmul.mubr.f32.gmra.mrb[0].mxu0 %v150
  %v3867 = vpop.f32.mrb[0].mxu0
  %v3868 = vadd.f32 %v3643, %v3867
  %v3869 = vpop.f32.mrb[0].mxu0
  %3870 = vmatprep.mubr.f32.mxu0 0.0
  %3871 = vmatmul.mubr.f32.gmra.mrb[0].mxu0 %v153
  %v3872 = vpop.f32.mrb[0].mxu0
  %v3873 = vadd.f32 %v3648, %v3872
  %v3874 = vpop.f32.mrb[0].mxu0
  %3875 = vmatprep.mubr.f32.mxu0 0.0
  %3876 = vmatmul.mubr.f32.gmra.mrb[0].mxu0 %v156
  %v3877 = vpop.f32.mrb[0].mxu0
  %v3878 = vadd.f32 %v3653, %v3877
  %v3879 = vpop.f32.mrb[0].mxu0
  %3880 = vmatprep.mubr.f32.mxu0 0.0
  %3881 = vmatmul.mubr.f32.gmra.mrb[0].mxu0 %v159
  %v3882 = vpop.f32.mrb[0].mxu0
  %v3883 = vadd.f32 %v3658, %v3882
  %v3884 = vpop.f32.mrb[0].mxu0
  %3885 = vmatprep.mubr.f32.mxu0 0.0
  %3886 = vmatmul.mubr.f32.gmra.mrb[0].mxu0 %v162
  %v3887 = vpop.f32.mrb[0].mxu0
  %v3888 = vadd.f32 %v3663, %v3887
  %v3889 = vpop.f32.mrb[0].mxu0
  %3890 = vmatprep.mubr.f32.mxu0 0.0
  %3891 = vmatmul.mubr.f32.gmra.mrb[0].mxu0 %v165
  %v3892 = vpop.f32.mrb[0].mxu0
  %v3893 = vadd.f32 %v3668, %v3892
  %v3894 = vpop.f32.mrb[0].mxu0
  %3895 = vmatprep.mubr.f32.mxu0 0.0
  %3896 = vmatmul.mubr.f32.gmra.mrb[0].mxu0 %v168
  %v3897 = vpop.f32.mrb[0].mxu0
  %v3898 = vadd.f32 %v3673, %v3897
  %v3899 = vpop.f32.mrb[0].mxu0
  %3900 = vmatprep.mubr.f32.mxu0 0.0
  %3901 = vmatmul.mubr.f32.gmra.mrb[0].mxu0 %v171
  %v3902 = vpop.f32.mrb[0].mxu0
  %v3903 = vadd.f32 %v3678, %v3902
  %v3904 = vpop.f32.mrb[0].mxu0
  %3905 = vmatprep.mubr.f32.mxu0 0.0
  %3906 = vmatmul.mubr.f32.gmra.mrb[0].mxu0 %v174
  %v3907 = vpop.f32.mrb[0].mxu0
  %v3908 = vadd.f32 %v3683, %v3907
  %v3909 = vpop.f32.mrb[0].mxu0
  %3910 = vmatprep.mubr.f32.mxu0 0.0
  %3911 = vmatmul.mubr.f32.gmra.mrb[0].mxu0 %v177
  %v3912 = vpop.f32.mrb[0].mxu0
  %v3913 = vadd.f32 %v3688, %v3912
  %v3914 = vpop.f32.mrb[0].mxu0
  %3915 = vdwg.mxu0
  %v3916 = vld [vmem:[%s47 + $0x1] sm:$0xff]
  %v3917 = vld [vmem:[%s47 + $0x11] sm:$0xff]
  %v3918 = vld [vmem:[%s47 + $0x21] sm:$0xff]
  %v3919 = vld [vmem:[%s47 + $0x31] sm:$0xff]
  %v3920 = vld [vmem:[%s47 + $0x41] sm:$0xff]
  %v3921 = vld [vmem:[%s47 + $0x51] sm:$0xff]
  %v3922 = vld [vmem:[%s47 + $0x61] sm:$0xff]
  %v3923 = vld [vmem:[%s47 + $0x71] sm:$0xff]
  %v3924 = vld [vmem:[%s47 + $0x81] sm:$0xff]
  %v3925 = vld [vmem:[%s47 + $0x91] sm:$0xff]
  %v3926 = vld [vmem:[%s47 + $0xa1] sm:$0xff]
  %v3927 = vld [vmem:[%s47 + $0xb1] sm:$0xff]
  %v3928 = vld [vmem:[%s47 + $0xc1] sm:$0xff]
  %v3929 = vld [vmem:[%s47 + $0xd1] sm:$0xff]
  %v3930 = vld [vmem:[%s47 + $0xe1] sm:$0xff]
  %v3931 = vld [vmem:[%s47 + $0xf1] sm:$0xff]
  %v3932 = vld [vmem:[%s47 + $0x121] sm:$0xff]
  %v3933 = vld [vmem:[%s47 + $0x131] sm:$0xff]
  %v3934 = vld [vmem:[%s47 + $0x141] sm:$0xff]
  %v3935 = vld [vmem:[%s47 + $0x151] sm:$0xff]
  %v3936 = vld [vmem:[%s47 + $0x161] sm:$0xff]
  %v3937 = vld [vmem:[%s47 + $0x171] sm:$0xff]
  %v3938 = vld [vmem:[%s47 + $0x181] sm:$0xff]
  %v3939 = vld [vmem:[%s47 + $0x191] sm:$0xff]
  %v3940 = vld [vmem:[%s47 + $0x1a1] sm:$0xff]
  %v3941 = vld [vmem:[%s47 + $0x1b1] sm:$0xff]
  %v3942 = vld [vmem:[%s47 + $0x1c1] sm:$0xff]
  %v3943 = vld [vmem:[%s47 + $0x1d1] sm:$0xff]
  %v3944 = vld [vmem:[%s47 + $0x1e1] sm:$0xff]
  %v3945 = vld [vmem:[%s47 + $0x1f1] sm:$0xff]
  %v3946 = vld [vmem:[%s47 + $0x201] sm:$0xff]
  %v3947 = vld [vmem:[%s47 + $0x211] sm:$0xff]
  %v3949 = vsel %vm82, %v3916, 0
  %v3952 = vsel %vm82, %v3917, 0
  %v3955 = vsel %vm82, %v3918, 0
  %v3958 = vsel %vm82, %v3919, 0
  %v3961 = vsel %vm82, %v3920, 0
  %v3964 = vsel %vm82, %v3921, 0
  %v3967 = vsel %vm82, %v3922, 0
  %v3970 = vsel %vm82, %v3923, 0
  %v3973 = vsel %vm82, %v3924, 0
  %v3976 = vsel %vm82, %v3925, 0
  %v3979 = vsel %vm82, %v3926, 0
  %v3982 = vsel %vm82, %v3927, 0
  %v3985 = vsel %vm82, %v3928, 0
  %v3988 = vsel %vm82, %v3929, 0
  %v3991 = vsel %vm82, %v3930, 0
  %v3994 = vsel %vm82, %v3931, 0
  %v3997 = vsel %vm82, %v3932, 0
  %v4000 = vsel %vm82, %v3933, 0
  %v4003 = vsel %vm82, %v3934, 0
  %v4006 = vsel %vm82, %v3935, 0
  %v4009 = vsel %vm82, %v3936, 0
  %v4012 = vsel %vm82, %v3937, 0
  %v4015 = vsel %vm82, %v3938, 0
  %v4018 = vsel %vm82, %v3939, 0
  %v4021 = vsel %vm82, %v3940, 0
  %v4024 = vsel %vm82, %v3941, 0
  %v4027 = vsel %vm82, %v3942, 0
  %v4030 = vsel %vm82, %v3943, 0
  %v4033 = vsel %vm82, %v3944, 0
  %v4036 = vsel %vm82, %v3945, 0
  %v4039 = vsel %vm82, %v3946, 0
  %v4042 = vsel %vm82, %v3947, 0
  %4044 = vmatprep.subr.mxu0 0.0
  %4045 = vmatpush1.msra.mxu0 %v863
  %4046 = vmatprep.subr.mxu0 0.0
  %4047 = vmatpush1.msra.mxu0 0.0
  %4048 = vmatprep.subr.mxu0 0.0
  %4049 = vmatpush1.msra.mxu0 0.0
  %4050 = vmatprep.subr.mxu0 0.0
  %4051 = vmatpush1.msra.mxu0 0.0
  %4052 = vmatprep.subr.mxu0 0.0
  %4053 = vmatpush1.msra.mxu0 0.0
  %4054 = vmatprep.subr.mxu0 0.0
  %4055 = vmatpush1.msra.mxu0 0.0
  %4056 = vmatprep.subr.mxu0 0.0
  %4057 = vmatpush1.msra.mxu0 0.0
  %4058 = vmatprep.subr.mxu0 0.0
  %4059 = vmatpush1.msra.mxu0 0.0
  %4060 = vmatprep.subr.mxu0 0.0
  %4061 = vmatpush1.msra.mxu0 0.0
  %4062 = vmatprep.subr.mxu0 0.0
  %4063 = vmatpush1.msra.mxu0 0.0
  %4064 = vmatprep.subr.mxu0 0.0
  %4065 = vmatpush1.msra.mxu0 0.0
  %4066 = vmatprep.subr.mxu0 0.0
  %4067 = vmatpush1.msra.mxu0 0.0
  %4068 = vmatprep.subr.mxu0 0.0
  %4069 = vmatpush1.msra.mxu0 0.0
  %4070 = vmatprep.subr.mxu0 0.0
  %4071 = vmatpush1.msra.mxu0 0.0
  %4072 = vmatprep.subr.mxu0 0.0
  %4073 = vmatpush1.msra.mxu0 0.0
  %4074 = vmatprep.subr.mxu0 0.0
  %4075 = vmatpush1.msra.mxu0 0.0
  %4076 = vmatprep.subr.mxu0 0.0
  %4077 = vmatpush1.msra.mxu0 0.0
  %4078 = vmatprep.subr.mxu0 0.0
  %4079 = vmatpush1.msra.mxu0 0.0
  %4080 = vmatprep.subr.mxu0 0.0
  %4081 = vmatpush1.msra.mxu0 0.0
  %4082 = vmatprep.subr.mxu0 0.0
  %4083 = vmatpush1.msra.mxu0 0.0
  %4084 = vmatprep.subr.mxu0 0.0
  %4085 = vmatpush1.msra.mxu0 0.0
  %4086 = vmatprep.subr.mxu0 0.0
  %4087 = vmatpush1.msra.mxu0 0.0
  %4088 = vmatprep.subr.mxu0 0.0
  %4089 = vmatpush1.msra.mxu0 0.0
  %4090 = vmatprep.subr.mxu0 0.0
  %4091 = vmatpush1.msra.mxu0 0.0
  %4092 = vmatprep.subr.mxu0 0.0
  %4093 = vmatpush1.msra.mxu0 0.0
  %4094 = vmatprep.subr.mxu0 0.0
  %4095 = vmatpush1.msra.mxu0 0.0
  %4096 = vmatprep.subr.mxu0 0.0
  %4097 = vmatpush1.msra.mxu0 0.0
  %4098 = vmatprep.subr.mxu0 0.0
  %4099 = vmatpush1.msra.mxu0 0.0
  %4100 = vmatprep.subr.mxu0 0.0
  %4101 = vmatpush1.msra.mxu0 0.0
  %4102 = vmatprep.subr.mxu0 0.0
  %4103 = vmatpush1.msra.mxu0 0.0
  %4104 = vmatprep.subr.mxu0 0.0
  %4105 = vmatpush1.msra.mxu0 0.0
  %4106 = vmatprep.subr.mxu0 0.0
  %4107 = vmatpush1.msra.mxu0 0.0
  %4108 = vmatprep.mubr.f32.mxu0 0.0
  %4109 = vmatmul.mubr.f32.gmra.mrb[0].mxu0 %v3949
  %v4110 = vpop.f32.mrb[0].mxu0
  %v4111 = vadd.f32 0.0, %v4110
  %v4112 = vpop.f32.mrb[0].mxu0
  %4113 = vmatprep.mubr.f32.mxu0 0.0
  %4114 = vmatmul.mubr.f32.gmra.mrb[0].mxu0 %v3952
  %v4115 = vpop.f32.mrb[0].mxu0
  %v4116 = vadd.f32 0.0, %v4115
  %v4117 = vpop.f32.mrb[0].mxu0
  %4118 = vmatprep.mubr.f32.mxu0 0.0
  %4119 = vmatmul.mubr.f32.gmra.mrb[0].mxu0 %v3955
  %v4120 = vpop.f32.mrb[0].mxu0
  %v4121 = vadd.f32 0.0, %v4120
  %v4122 = vpop.f32.mrb[0].mxu0
  %4123 = vmatprep.mubr.f32.mxu0 0.0
  %4124 = vmatmul.mubr.f32.gmra.mrb[0].mxu0 %v3958
  %v4125 = vpop.f32.mrb[0].mxu0
  %v4126 = vadd.f32 0.0, %v4125
  %v4127 = vpop.f32.mrb[0].mxu0
  %4128 = vmatprep.mubr.f32.mxu0 0.0
  %4129 = vmatmul.mubr.f32.gmra.mrb[0].mxu0 %v3961
  %v4130 = vpop.f32.mrb[0].mxu0
  %v4131 = vadd.f32 0.0, %v4130
  %v4132 = vpop.f32.mrb[0].mxu0
  %4133 = vmatprep.mubr.f32.mxu0 0.0
  %4134 = vmatmul.mubr.f32.gmra.mrb[0].mxu0 %v3964
  %v4135 = vpop.f32.mrb[0].mxu0
  %v4136 = vadd.f32 0.0, %v4135
  %v4137 = vpop.f32.mrb[0].mxu0
  %4138 = vmatprep.mubr.f32.mxu0 0.0
  %4139 = vmatmul.mubr.f32.gmra.mrb[0].mxu0 %v3967
  %v4140 = vpop.f32.mrb[0].mxu0
  %v4141 = vadd.f32 0.0, %v4140
  %v4142 = vpop.f32.mrb[0].mxu0
  %4143 = vmatprep.mubr.f32.mxu0 0.0
  %4144 = vmatmul.mubr.f32.gmra.mrb[0].mxu0 %v3970
  %v4145 = vpop.f32.mrb[0].mxu0
  %v4146 = vadd.f32 0.0, %v4145
  %v4147 = vpop.f32.mrb[0].mxu0
  %4148 = vmatprep.mubr.f32.mxu0 0.0
  %4149 = vmatmul.mubr.f32.gmra.mrb[0].mxu0 %v3973
  %v4150 = vpop.f32.mrb[0].mxu0
  %v4151 = vadd.f32 0.0, %v4150
  %v4152 = vpop.f32.mrb[0].mxu0
  %4153 = vmatprep.mubr.f32.mxu0 0.0
  %4154 = vmatmul.mubr.f32.gmra.mrb[0].mxu0 %v3976
  %v4155 = vpop.f32.mrb[0].mxu0
  %v4156 = vadd.f32 0.0, %v4155
  %v4157 = vpop.f32.mrb[0].mxu0
  %4158 = vmatprep.mubr.f32.mxu0 0.0
  %4159 = vmatmul.mubr.f32.gmra.mrb[0].mxu0 %v3979
  %v4160 = vpop.f32.mrb[0].mxu0
  %v4161 = vadd.f32 0.0, %v4160
  %v4162 = vpop.f32.mrb[0].mxu0
  %4163 = vmatprep.mubr.f32.mxu0 0.0
  %4164 = vmatmul.mubr.f32.gmra.mrb[0].mxu0 %v3982
  %v4165 = vpop.f32.mrb[0].mxu0
  %v4166 = vadd.f32 0.0, %v4165
  %v4167 = vpop.f32.mrb[0].mxu0
  %4168 = vmatprep.mubr.f32.mxu0 0.0
  %4169 = vmatmul.mubr.f32.gmra.mrb[0].mxu0 %v3985
  %v4170 = vpop.f32.mrb[0].mxu0
  %v4171 = vadd.f32 0.0, %v4170
  %v4172 = vpop.f32.mrb[0].mxu0
  %4173 = vmatprep.mubr.f32.mxu0 0.0
  %4174 = vmatmul.mubr.f32.gmra.mrb[0].mxu0 %v3988
  %v4175 = vpop.f32.mrb[0].mxu0
  %v4176 = vadd.f32 0.0, %v4175
  %v4177 = vpop.f32.mrb[0].mxu0
  %4178 = vmatprep.mubr.f32.mxu0 0.0
  %4179 = vmatmul.mubr.f32.gmra.mrb[0].mxu0 %v3991
  %v4180 = vpop.f32.mrb[0].mxu0
  %v4181 = vadd.f32 0.0, %v4180
  %v4182 = vpop.f32.mrb[0].mxu0
  %4183 = vmatprep.mubr.f32.mxu0 0.0
  %4184 = vmatmul.mubr.f32.gmra.mrb[0].mxu0 %v3994
  %v4185 = vpop.f32.mrb[0].mxu0
  %v4186 = vadd.f32 0.0, %v4185
  %v4187 = vpop.f32.mrb[0].mxu0
  %4188 = vmatprep.mubr.f32.mxu0 0.0
  %4189 = vmatmul.mubr.f32.gmra.mrb[0].mxu0 %v3997
  %v4190 = vpop.f32.mrb[0].mxu0
  %v4191 = vadd.f32 0.0, %v4190
  %v4192 = vpop.f32.mrb[0].mxu0
  %4193 = vmatprep.mubr.f32.mxu0 0.0
  %4194 = vmatmul.mubr.f32.gmra.mrb[0].mxu0 %v4000
  %v4195 = vpop.f32.mrb[0].mxu0
  %v4196 = vadd.f32 0.0, %v4195
  %v4197 = vpop.f32.mrb[0].mxu0
  %4198 = vmatprep.mubr.f32.mxu0 0.0
  %4199 = vmatmul.mubr.f32.gmra.mrb[0].mxu0 %v4003
  %v4200 = vpop.f32.mrb[0].mxu0
  %v4201 = vadd.f32 0.0, %v4200
  %v4202 = vpop.f32.mrb[0].mxu0
  %4203 = vmatprep.mubr.f32.mxu0 0.0
  %4204 = vmatmul.mubr.f32.gmra.mrb[0].mxu0 %v4006
  %v4205 = vpop.f32.mrb[0].mxu0
  %v4206 = vadd.f32 0.0, %v4205
  %v4207 = vpop.f32.mrb[0].mxu0
  %4208 = vmatprep.mubr.f32.mxu0 0.0
  %4209 = vmatmul.mubr.f32.gmra.mrb[0].mxu0 %v4009
  %v4210 = vpop.f32.mrb[0].mxu0
  %v4211 = vadd.f32 0.0, %v4210
  %v4212 = vpop.f32.mrb[0].mxu0
  %4213 = vmatprep.mubr.f32.mxu0 0.0
  %4214 = vmatmul.mubr.f32.gmra.mrb[0].mxu0 %v4012
  %v4215 = vpop.f32.mrb[0].mxu0
  %v4216 = vadd.f32 0.0, %v4215
  %v4217 = vpop.f32.mrb[0].mxu0
  %4218 = vmatprep.mubr.f32.mxu0 0.0
  %4219 = vmatmul.mubr.f32.gmra.mrb[0].mxu0 %v4015
  %v4220 = vpop.f32.mrb[0].mxu0
  %v4221 = vadd.f32 0.0, %v4220
  %v4222 = vpop.f32.mrb[0].mxu0
  %4223 = vmatprep.mubr.f32.mxu0 0.0
  %4224 = vmatmul.mubr.f32.gmra.mrb[0].mxu0 %v4018
  %v4225 = vpop.f32.mrb[0].mxu0
  %v4226 = vadd.f32 0.0, %v4225
  %v4227 = vpop.f32.mrb[0].mxu0
  %4228 = vmatprep.mubr.f32.mxu0 0.0
  %4229 = vmatmul.mubr.f32.gmra.mrb[0].mxu0 %v4021
  %v4230 = vpop.f32.mrb[0].mxu0
  %v4231 = vadd.f32 0.0, %v4230
  %v4232 = vpop.f32.mrb[0].mxu0
  %4233 = vmatprep.mubr.f32.mxu0 0.0
  %4234 = vmatmul.mubr.f32.gmra.mrb[0].mxu0 %v4024
  %v4235 = vpop.f32.mrb[0].mxu0
  %v4236 = vadd.f32 0.0, %v4235
  %v4237 = vpop.f32.mrb[0].mxu0
  %4238 = vmatprep.mubr.f32.mxu0 0.0
  %4239 = vmatmul.mubr.f32.gmra.mrb[0].mxu0 %v4027
  %v4240 = vpop.f32.mrb[0].mxu0
  %v4241 = vadd.f32 0.0, %v4240
  %v4242 = vpop.f32.mrb[0].mxu0
  %4243 = vmatprep.mubr.f32.mxu0 0.0
  %4244 = vmatmul.mubr.f32.gmra.mrb[0].mxu0 %v4030
  %v4245 = vpop.f32.mrb[0].mxu0
  %v4246 = vadd.f32 0.0, %v4245
  %v4247 = vpop.f32.mrb[0].mxu0
  %4248 = vmatprep.mubr.f32.mxu0 0.0
  %4249 = vmatmul.mubr.f32.gmra.mrb[0].mxu0 %v4033
  %v4250 = vpop.f32.mrb[0].mxu0
  %v4251 = vadd.f32 0.0, %v4250
  %v4252 = vpop.f32.mrb[0].mxu0
  %4253 = vmatprep.mubr.f32.mxu0 0.0
  %4254 = vmatmul.mubr.f32.gmra.mrb[0].mxu0 %v4036
  %v4255 = vpop.f32.mrb[0].mxu0
  %v4256 = vadd.f32 0.0, %v4255
  %v4257 = vpop.f32.mrb[0].mxu0
  %4258 = vmatprep.mubr.f32.mxu0 0.0
  %4259 = vmatmul.mubr.f32.gmra.mrb[0].mxu0 %v4039
  %v4260 = vpop.f32.mrb[0].mxu0
  %v4261 = vadd.f32 0.0, %v4260
  %v4262 = vpop.f32.mrb[0].mxu0
  %4263 = vmatprep.mubr.f32.mxu0 0.0
  %4264 = vmatmul.mubr.f32.gmra.mrb[0].mxu0 %v4042
  %v4265 = vpop.f32.mrb[0].mxu0
  %v4266 = vadd.f32 0.0, %v4265
  %v4267 = vpop.f32.mrb[0].mxu0
  %4268 = vdwg.mxu0
  %v4269 = vadd.f32 %v3758, %v4111
  %v4270 = vadd.f32 %v3763, %v4116
  %v4271 = vadd.f32 %v3768, %v4121
  %v4272 = vadd.f32 %v3773, %v4126
  %v4273 = vadd.f32 %v3778, %v4131
  %v4274 = vadd.f32 %v3783, %v4136
  %v4275 = vadd.f32 %v3788, %v4141
  %v4276 = vadd.f32 %v3793, %v4146
  %v4277 = vadd.f32 %v3798, %v4151
  %v4278 = vadd.f32 %v3803, %v4156
  %v4279 = vadd.f32 %v3808, %v4161
  %v4280 = vadd.f32 %v3813, %v4166
  %v4281 = vadd.f32 %v3818, %v4171
  %v4282 = vadd.f32 %v3823, %v4176
  %v4283 = vadd.f32 %v3828, %v4181
  %v4284 = vadd.f32 %v3833, %v4186
  %v4285 = vadd.f32 %v3838, %v4191
  %v4286 = vadd.f32 %v3843, %v4196
  %v4287 = vadd.f32 %v3848, %v4201
  %v4288 = vadd.f32 %v3853, %v4206
  %v4289 = vadd.f32 %v3858, %v4211
  %v4290 = vadd.f32 %v3863, %v4216
  %v4291 = vadd.f32 %v3868, %v4221
  %v4292 = vadd.f32 %v3873, %v4226
  %v4293 = vadd.f32 %v3878, %v4231
  %v4294 = vadd.f32 %v3883, %v4236
  %v4295 = vadd.f32 %v3888, %v4241
  %v4296 = vadd.f32 %v3893, %v4246
  %v4297 = vadd.f32 %v3898, %v4251
  %v4298 = vadd.f32 %v3903, %v4256
  %v4299 = vadd.f32 %v3908, %v4261
  %v4300 = vadd.f32 %v3913, %v4266
  %4301 = vmatprep.subr.mxu0 0.0
  %4302 = vmatpush1.msra.mxu0 %v1254
  %4303 = vmatprep.subr.mxu0 0.0
  %4304 = vmatpush1.msra.mxu0 0.0
  %4305 = vmatprep.subr.mxu0 0.0
  %4306 = vmatpush1.msra.mxu0 0.0
  %4307 = vmatprep.subr.mxu0 0.0
  %4308 = vmatpush1.msra.mxu0 0.0
  %4309 = vmatprep.subr.mxu0 0.0
  %4310 = vmatpush1.msra.mxu0 0.0
  %4311 = vmatprep.subr.mxu0 0.0
  %4312 = vmatpush1.msra.mxu0 0.0
  %4313 = vmatprep.subr.mxu0 0.0
  %4314 = vmatpush1.msra.mxu0 0.0
  %4315 = vmatprep.subr.mxu0 0.0
  %4316 = vmatpush1.msra.mxu0 0.0
  %4317 = vmatprep.subr.mxu0 0.0
  %4318 = vmatpush1.msra.mxu0 0.0
  %4319 = vmatprep.subr.mxu0 0.0
  %4320 = vmatpush1.msra.mxu0 0.0
  %4321 = vmatprep.subr.mxu0 0.0
  %4322 = vmatpush1.msra.mxu0 0.0
  %4323 = vmatprep.subr.mxu0 0.0
  %4324 = vmatpush1.msra.mxu0 0.0
  %4325 = vmatprep.subr.mxu0 0.0
  %4326 = vmatpush1.msra.mxu0 0.0
  %4327 = vmatprep.subr.mxu0 0.0
  %4328 = vmatpush1.msra.mxu0 0.0
  %4329 = vmatprep.subr.mxu0 0.0
  %4330 = vmatpush1.msra.mxu0 0.0
  %4331 = vmatprep.subr.mxu0 0.0
  %4332 = vmatpush1.msra.mxu0 0.0
  %4333 = vmatprep.subr.mxu0 0.0
  %4334 = vmatpush1.msra.mxu0 0.0
  %4335 = vmatprep.subr.mxu0 0.0
  %4336 = vmatpush1.msra.mxu0 0.0
  %4337 = vmatprep.subr.mxu0 0.0
  %4338 = vmatpush1.msra.mxu0 0.0
  %4339 = vmatprep.subr.mxu0 0.0
  %4340 = vmatpush1.msra.mxu0 0.0
  %4341 = vmatprep.subr.mxu0 0.0
  %4342 = vmatpush1.msra.mxu0 0.0
  %4343 = vmatprep.subr.mxu0 0.0
  %4344 = vmatpush1.msra.mxu0 0.0
  %4345 = vmatprep.subr.mxu0 0.0
  %4346 = vmatpush1.msra.mxu0 0.0
  %4347 = vmatprep.subr.mxu0 0.0
  %4348 = vmatpush1.msra.mxu0 0.0
  %4349 = vmatprep.subr.mxu0 0.0
  %4350 = vmatpush1.msra.mxu0 0.0
  %4351 = vmatprep.subr.mxu0 0.0
  %4352 = vmatpush1.msra.mxu0 0.0
  %4353 = vmatprep.subr.mxu0 0.0
  %4354 = vmatpush1.msra.mxu0 0.0
  %4355 = vmatprep.subr.mxu0 0.0
  %4356 = vmatpush1.msra.mxu0 0.0
  %4357 = vmatprep.subr.mxu0 0.0
  %4358 = vmatpush1.msra.mxu0 0.0
  %4359 = vmatprep.subr.mxu0 0.0
  %4360 = vmatpush1.msra.mxu0 0.0
  %4361 = vmatprep.subr.mxu0 0.0
  %4362 = vmatpush1.msra.mxu0 0.0
  %4363 = vmatprep.subr.mxu0 0.0
  %4364 = vmatpush1.msra.mxu0 0.0
  %4365 = vmatprep.mubr.f32.mxu0 0.0
  %4366 = vmatmul.mubr.f32.gmra.mrb[0].mxu0 %v1549
  %v4367 = vpop.f32.mrb[0].mxu0
  %v4368 = vadd.f32 0.0, %v4367
  %v4369 = vpop.f32.mrb[0].mxu0
  %4370 = vmatprep.mubr.f32.mxu0 0.0
  %4371 = vmatmul.mubr.f32.gmra.mrb[0].mxu0 %v1552
  %v4372 = vpop.f32.mrb[0].mxu0
  %v4373 = vadd.f32 0.0, %v4372
  %v4374 = vpop.f32.mrb[0].mxu0
  %4375 = vmatprep.mubr.f32.mxu0 0.0
  %4376 = vmatmul.mubr.f32.gmra.mrb[0].mxu0 %v1555
  %v4377 = vpop.f32.mrb[0].mxu0
  %v4378 = vadd.f32 0.0, %v4377
  %v4379 = vpop.f32.mrb[0].mxu0
  %4380 = vmatprep.mubr.f32.mxu0 0.0
  %4381 = vmatmul.mubr.f32.gmra.mrb[0].mxu0 %v1558
  %v4382 = vpop.f32.mrb[0].mxu0
  %v4383 = vadd.f32 0.0, %v4382
  %v4384 = vpop.f32.mrb[0].mxu0
  %4385 = vmatprep.mubr.f32.mxu0 0.0
  %4386 = vmatmul.mubr.f32.gmra.mrb[0].mxu0 %v1561
  %v4387 = vpop.f32.mrb[0].mxu0
  %v4388 = vadd.f32 0.0, %v4387
  %v4389 = vpop.f32.mrb[0].mxu0
  %4390 = vmatprep.mubr.f32.mxu0 0.0
  %4391 = vmatmul.mubr.f32.gmra.mrb[0].mxu0 %v1564
  %v4392 = vpop.f32.mrb[0].mxu0
  %v4393 = vadd.f32 0.0, %v4392
  %v4394 = vpop.f32.mrb[0].mxu0
  %4395 = vmatprep.mubr.f32.mxu0 0.0
  %4396 = vmatmul.mubr.f32.gmra.mrb[0].mxu0 %v1567
  %v4397 = vpop.f32.mrb[0].mxu0
  %v4398 = vadd.f32 0.0, %v4397
  %v4399 = vpop.f32.mrb[0].mxu0
  %4400 = vmatprep.mubr.f32.mxu0 0.0
  %4401 = vmatmul.mubr.f32.gmra.mrb[0].mxu0 %v1570
  %v4402 = vpop.f32.mrb[0].mxu0
  %v4403 = vadd.f32 0.0, %v4402
  %v4404 = vpop.f32.mrb[0].mxu0
  %4405 = vmatprep.mubr.f32.mxu0 0.0
  %4406 = vmatmul.mubr.f32.gmra.mrb[0].mxu0 %v1573
  %v4407 = vpop.f32.mrb[0].mxu0
  %v4408 = vadd.f32 0.0, %v4407
  %v4409 = vpop.f32.mrb[0].mxu0
  %4410 = vmatprep.mubr.f32.mxu0 0.0
  %4411 = vmatmul.mubr.f32.gmra.mrb[0].mxu0 %v1576
  %v4412 = vpop.f32.mrb[0].mxu0
  %v4413 = vadd.f32 0.0, %v4412
  %v4414 = vpop.f32.mrb[0].mxu0
  %4415 = vmatprep.mubr.f32.mxu0 0.0
  %4416 = vmatmul.mubr.f32.gmra.mrb[0].mxu0 %v1579
  %v4417 = vpop.f32.mrb[0].mxu0
  %v4418 = vadd.f32 0.0, %v4417
  %v4419 = vpop.f32.mrb[0].mxu0
  %4420 = vmatprep.mubr.f32.mxu0 0.0
  %4421 = vmatmul.mubr.f32.gmra.mrb[0].mxu0 %v1582
  %v4422 = vpop.f32.mrb[0].mxu0
  %v4423 = vadd.f32 0.0, %v4422
  %v4424 = vpop.f32.mrb[0].mxu0
  %4425 = vmatprep.mubr.f32.mxu0 0.0
  %4426 = vmatmul.mubr.f32.gmra.mrb[0].mxu0 %v1585
  %v4427 = vpop.f32.mrb[0].mxu0
  %v4428 = vadd.f32 0.0, %v4427
  %v4429 = vpop.f32.mrb[0].mxu0
  %4430 = vmatprep.mubr.f32.mxu0 0.0
  %4431 = vmatmul.mubr.f32.gmra.mrb[0].mxu0 %v1588
  %v4432 = vpop.f32.mrb[0].mxu0
  %v4433 = vadd.f32 0.0, %v4432
  %v4434 = vpop.f32.mrb[0].mxu0
  %4435 = vmatprep.mubr.f32.mxu0 0.0
  %4436 = vmatmul.mubr.f32.gmra.mrb[0].mxu0 %v1591
  %v4437 = vpop.f32.mrb[0].mxu0
  %v4438 = vadd.f32 0.0, %v4437
  %v4439 = vpop.f32.mrb[0].mxu0
  %4440 = vmatprep.mubr.f32.mxu0 0.0
  %4441 = vmatmul.mubr.f32.gmra.mrb[0].mxu0 %v1594
  %v4442 = vpop.f32.mrb[0].mxu0
  %v4443 = vadd.f32 0.0, %v4442
  %v4444 = vpop.f32.mrb[0].mxu0
  %4445 = vmatprep.mubr.f32.mxu0 0.0
  %4446 = vmatmul.mubr.f32.gmra.mrb[0].mxu0 %v1597
  %v4447 = vpop.f32.mrb[0].mxu0
  %v4448 = vadd.f32 0.0, %v4447
  %v4449 = vpop.f32.mrb[0].mxu0
  %4450 = vmatprep.mubr.f32.mxu0 0.0
  %4451 = vmatmul.mubr.f32.gmra.mrb[0].mxu0 %v1600
  %v4452 = vpop.f32.mrb[0].mxu0
  %v4453 = vadd.f32 0.0, %v4452
  %v4454 = vpop.f32.mrb[0].mxu0
  %4455 = vmatprep.mubr.f32.mxu0 0.0
  %4456 = vmatmul.mubr.f32.gmra.mrb[0].mxu0 %v1603
  %v4457 = vpop.f32.mrb[0].mxu0
  %v4458 = vadd.f32 0.0, %v4457
  %v4459 = vpop.f32.mrb[0].mxu0
  %4460 = vmatprep.mubr.f32.mxu0 0.0
  %4461 = vmatmul.mubr.f32.gmra.mrb[0].mxu0 %v1606
  %v4462 = vpop.f32.mrb[0].mxu0
  %v4463 = vadd.f32 0.0, %v4462
  %v4464 = vpop.f32.mrb[0].mxu0
  %4465 = vmatprep.mubr.f32.mxu0 0.0
  %4466 = vmatmul.mubr.f32.gmra.mrb[0].mxu0 %v1609
  %v4467 = vpop.f32.mrb[0].mxu0
  %v4468 = vadd.f32 0.0, %v4467
  %v4469 = vpop.f32.mrb[0].mxu0
  %4470 = vmatprep.mubr.f32.mxu0 0.0
  %4471 = vmatmul.mubr.f32.gmra.mrb[0].mxu0 %v1612
  %v4472 = vpop.f32.mrb[0].mxu0
  %v4473 = vadd.f32 0.0, %v4472
  %v4474 = vpop.f32.mrb[0].mxu0
  %4475 = vmatprep.mubr.f32.mxu0 0.0
  %4476 = vmatmul.mubr.f32.gmra.mrb[0].mxu0 %v1615
  %v4477 = vpop.f32.mrb[0].mxu0
  %v4478 = vadd.f32 0.0, %v4477
  %v4479 = vpop.f32.mrb[0].mxu0
  %4480 = vmatprep.mubr.f32.mxu0 0.0
  %4481 = vmatmul.mubr.f32.gmra.mrb[0].mxu0 %v1618
  %v4482 = vpop.f32.mrb[0].mxu0
  %v4483 = vadd.f32 0.0, %v4482
  %v4484 = vpop.f32.mrb[0].mxu0
  %4485 = vmatprep.mubr.f32.mxu0 0.0
  %4486 = vmatmul.mubr.f32.gmra.mrb[0].mxu0 %v1621
  %v4487 = vpop.f32.mrb[0].mxu0
  %v4488 = vadd.f32 0.0, %v4487
  %v4489 = vpop.f32.mrb[0].mxu0
  %4490 = vmatprep.mubr.f32.mxu0 0.0
  %4491 = vmatmul.mubr.f32.gmra.mrb[0].mxu0 %v1624
  %v4492 = vpop.f32.mrb[0].mxu0
  %v4493 = vadd.f32 0.0, %v4492
  %v4494 = vpop.f32.mrb[0].mxu0
  %4495 = vmatprep.mubr.f32.mxu0 0.0
  %4496 = vmatmul.mubr.f32.gmra.mrb[0].mxu0 %v1627
  %v4497 = vpop.f32.mrb[0].mxu0
  %v4498 = vadd.f32 0.0, %v4497
  %v4499 = vpop.f32.mrb[0].mxu0
  %4500 = vmatprep.mubr.f32.mxu0 0.0
  %4501 = vmatmul.mubr.f32.gmra.mrb[0].mxu0 %v1630
  %v4502 = vpop.f32.mrb[0].mxu0
  %v4503 = vadd.f32 0.0, %v4502
  %v4504 = vpop.f32.mrb[0].mxu0
  %4505 = vmatprep.mubr.f32.mxu0 0.0
  %4506 = vmatmul.mubr.f32.gmra.mrb[0].mxu0 %v1633
  %v4507 = vpop.f32.mrb[0].mxu0
  %v4508 = vadd.f32 0.0, %v4507
  %v4509 = vpop.f32.mrb[0].mxu0
  %4510 = vmatprep.mubr.f32.mxu0 0.0
  %4511 = vmatmul.mubr.f32.gmra.mrb[0].mxu0 %v1636
  %v4512 = vpop.f32.mrb[0].mxu0
  %v4513 = vadd.f32 0.0, %v4512
  %v4514 = vpop.f32.mrb[0].mxu0
  %4515 = vmatprep.mubr.f32.mxu0 0.0
  %4516 = vmatmul.mubr.f32.gmra.mrb[0].mxu0 %v1639
  %v4517 = vpop.f32.mrb[0].mxu0
  %v4518 = vadd.f32 0.0, %v4517
  %v4519 = vpop.f32.mrb[0].mxu0
  %4520 = vmatprep.mubr.f32.mxu0 0.0
  %4521 = vmatmul.mubr.f32.gmra.mrb[0].mxu0 %v1642
  %v4522 = vpop.f32.mrb[0].mxu0
  %v4523 = vadd.f32 0.0, %v4522
  %v4524 = vpop.f32.mrb[0].mxu0
  %4525 = vdwg.mxu0
  %v4526 = vadd.f32 %v4269, %v4368
  %v4527 = vadd.f32 %v4270, %v4373
  %v4528 = vadd.f32 %v4271, %v4378
  %v4529 = vadd.f32 %v4272, %v4383
  %v4530 = vadd.f32 %v4273, %v4388
  %v4531 = vadd.f32 %v4274, %v4393
  %v4532 = vadd.f32 %v4275, %v4398
  %v4533 = vadd.f32 %v4276, %v4403
  %v4534 = vadd.f32 %v4277, %v4408
  %v4535 = vadd.f32 %v4278, %v4413
  %v4536 = vadd.f32 %v4279, %v4418
  %v4537 = vadd.f32 %v4280, %v4423
  %v4538 = vadd.f32 %v4281, %v4428
  %v4539 = vadd.f32 %v4282, %v4433
  %v4540 = vadd.f32 %v4283, %v4438
  %v4541 = vadd.f32 %v4284, %v4443
  %v4542 = vadd.f32 %v4285, %v4448
  %v4543 = vadd.f32 %v4286, %v4453
  %v4544 = vadd.f32 %v4287, %v4458
  %v4545 = vadd.f32 %v4288, %v4463
  %v4546 = vadd.f32 %v4289, %v4468
  %v4547 = vadd.f32 %v4290, %v4473
  %v4548 = vadd.f32 %v4291, %v4478
  %v4549 = vadd.f32 %v4292, %v4483
  %v4550 = vadd.f32 %v4293, %v4488
  %v4551 = vadd.f32 %v4294, %v4493
  %v4552 = vadd.f32 %v4295, %v4498
  %v4553 = vadd.f32 %v4296, %v4503
  %v4554 = vadd.f32 %v4297, %v4508
  %v4555 = vadd.f32 %v4298, %v4513
  %v4556 = vadd.f32 %v4299, %v4518
  %v4557 = vadd.f32 %v4300, %v4523
  %4558 = vmatprep.subr.mxu0 0.0
  %4559 = vmatpush1.msra.mxu0 %v1645
  %4560 = vmatprep.subr.mxu0 0.0
  %4561 = vmatpush1.msra.mxu0 0.0
  %4562 = vmatprep.subr.mxu0 0.0
  %4563 = vmatpush1.msra.mxu0 0.0
  %4564 = vmatprep.subr.mxu0 0.0
  %4565 = vmatpush1.msra.mxu0 0.0
  %4566 = vmatprep.subr.mxu0 0.0
  %4567 = vmatpush1.msra.mxu0 0.0
  %4568 = vmatprep.subr.mxu0 0.0
  %4569 = vmatpush1.msra.mxu0 0.0
  %4570 = vmatprep.subr.mxu0 0.0
  %4571 = vmatpush1.msra.mxu0 0.0
  %4572 = vmatprep.subr.mxu0 0.0
  %4573 = vmatpush1.msra.mxu0 0.0
  %4574 = vmatprep.subr.mxu0 0.0
  %4575 = vmatpush1.msra.mxu0 0.0
  %4576 = vmatprep.subr.mxu0 0.0
  %4577 = vmatpush1.msra.mxu0 0.0
  %4578 = vmatprep.subr.mxu0 0.0
  %4579 = vmatpush1.msra.mxu0 0.0
  %4580 = vmatprep.subr.mxu0 0.0
  %4581 = vmatpush1.msra.mxu0 0.0
  %4582 = vmatprep.subr.mxu0 0.0
  %4583 = vmatpush1.msra.mxu0 0.0
  %4584 = vmatprep.subr.mxu0 0.0
  %4585 = vmatpush1.msra.mxu0 0.0
  %4586 = vmatprep.subr.mxu0 0.0
  %4587 = vmatpush1.msra.mxu0 0.0
  %4588 = vmatprep.subr.mxu0 0.0
  %4589 = vmatpush1.msra.mxu0 0.0
  %4590 = vmatprep.subr.mxu0 0.0
  %4591 = vmatpush1.msra.mxu0 0.0
  %4592 = vmatprep.subr.mxu0 0.0
  %4593 = vmatpush1.msra.mxu0 0.0
  %4594 = vmatprep.subr.mxu0 0.0
  %4595 = vmatpush1.msra.mxu0 0.0
  %4596 = vmatprep.subr.mxu0 0.0
  %4597 = vmatpush1.msra.mxu0 0.0
  %4598 = vmatprep.subr.mxu0 0.0
  %4599 = vmatpush1.msra.mxu0 0.0
  %4600 = vmatprep.subr.mxu0 0.0
  %4601 = vmatpush1.msra.mxu0 0.0
  %4602 = vmatprep.subr.mxu0 0.0
  %4603 = vmatpush1.msra.mxu0 0.0
  %4604 = vmatprep.subr.mxu0 0.0
  %4605 = vmatpush1.msra.mxu0 0.0
  %4606 = vmatprep.subr.mxu0 0.0
  %4607 = vmatpush1.msra.mxu0 0.0
  %4608 = vmatprep.subr.mxu0 0.0
  %4609 = vmatpush1.msra.mxu0 0.0
  %4610 = vmatprep.subr.mxu0 0.0
  %4611 = vmatpush1.msra.mxu0 0.0
  %4612 = vmatprep.subr.mxu0 0.0
  %4613 = vmatpush1.msra.mxu0 0.0
  %4614 = vmatprep.subr.mxu0 0.0
  %4615 = vmatpush1.msra.mxu0 0.0
  %4616 = vmatprep.subr.mxu0 0.0
  %4617 = vmatpush1.msra.mxu0 0.0
  %4618 = vmatprep.subr.mxu0 0.0
  %4619 = vmatpush1.msra.mxu0 0.0
  %4620 = vmatprep.subr.mxu0 0.0
  %4621 = vmatpush1.msra.mxu0 0.0
  %4622 = vmatprep.mubr.f32.mxu0 0.0
  %4623 = vmatmul.mubr.f32.gmra.mrb[0].mxu0 %v1939
  %v4624 = vpop.f32.mrb[0].mxu0
  %v4625 = vadd.f32 0.0, %v4624
  %v4626 = vpop.f32.mrb[0].mxu0
  %4627 = vmatprep.mubr.f32.mxu0 0.0
  %4628 = vmatmul.mubr.f32.gmra.mrb[0].mxu0 %v1942
  %v4629 = vpop.f32.mrb[0].mxu0
  %v4630 = vadd.f32 0.0, %v4629
  %v4631 = vpop.f32.mrb[0].mxu0
  %4632 = vmatprep.mubr.f32.mxu0 0.0
  %4633 = vmatmul.mubr.f32.gmra.mrb[0].mxu0 %v1945
  %v4634 = vpop.f32.mrb[0].mxu0
  %v4635 = vadd.f32 0.0, %v4634
  %v4636 = vpop.f32.mrb[0].mxu0
  %4637 = vmatprep.mubr.f32.mxu0 0.0
  %4638 = vmatmul.mubr.f32.gmra.mrb[0].mxu0 %v1948
  %v4639 = vpop.f32.mrb[0].mxu0
  %v4640 = vadd.f32 0.0, %v4639
  %v4641 = vpop.f32.mrb[0].mxu0
  %4642 = vmatprep.mubr.f32.mxu0 0.0
  %4643 = vmatmul.mubr.f32.gmra.mrb[0].mxu0 %v1951
  %v4644 = vpop.f32.mrb[0].mxu0
  %v4645 = vadd.f32 0.0, %v4644
  %v4646 = vpop.f32.mrb[0].mxu0
  %4647 = vmatprep.mubr.f32.mxu0 0.0
  %4648 = vmatmul.mubr.f32.gmra.mrb[0].mxu0 %v1954
  %v4649 = vpop.f32.mrb[0].mxu0
  %v4650 = vadd.f32 0.0, %v4649
  %v4651 = vpop.f32.mrb[0].mxu0
  %4652 = vmatprep.mubr.f32.mxu0 0.0
  %4653 = vmatmul.mubr.f32.gmra.mrb[0].mxu0 %v1957
  %v4654 = vpop.f32.mrb[0].mxu0
  %v4655 = vadd.f32 0.0, %v4654
  %v4656 = vpop.f32.mrb[0].mxu0
  %4657 = vmatprep.mubr.f32.mxu0 0.0
  %4658 = vmatmul.mubr.f32.gmra.mrb[0].mxu0 %v1960
  %v4659 = vpop.f32.mrb[0].mxu0
  %v4660 = vadd.f32 0.0, %v4659
  %v4661 = vpop.f32.mrb[0].mxu0
  %4662 = vmatprep.mubr.f32.mxu0 0.0
  %4663 = vmatmul.mubr.f32.gmra.mrb[0].mxu0 %v1963
  %v4664 = vpop.f32.mrb[0].mxu0
  %v4665 = vadd.f32 0.0, %v4664
  %v4666 = vpop.f32.mrb[0].mxu0
  %4667 = vmatprep.mubr.f32.mxu0 0.0
  %4668 = vmatmul.mubr.f32.gmra.mrb[0].mxu0 %v1966
  %v4669 = vpop.f32.mrb[0].mxu0
  %v4670 = vadd.f32 0.0, %v4669
  %v4671 = vpop.f32.mrb[0].mxu0
  %4672 = vmatprep.mubr.f32.mxu0 0.0
  %4673 = vmatmul.mubr.f32.gmra.mrb[0].mxu0 %v1969
  %v4674 = vpop.f32.mrb[0].mxu0
  %v4675 = vadd.f32 0.0, %v4674
  %v4676 = vpop.f32.mrb[0].mxu0
  %4677 = vmatprep.mubr.f32.mxu0 0.0
  %4678 = vmatmul.mubr.f32.gmra.mrb[0].mxu0 %v1972
  %v4679 = vpop.f32.mrb[0].mxu0
  %v4680 = vadd.f32 0.0, %v4679
  %v4681 = vpop.f32.mrb[0].mxu0
  %4682 = vmatprep.mubr.f32.mxu0 0.0
  %4683 = vmatmul.mubr.f32.gmra.mrb[0].mxu0 %v1975
  %v4684 = vpop.f32.mrb[0].mxu0
  %v4685 = vadd.f32 0.0, %v4684
  %v4686 = vpop.f32.mrb[0].mxu0
  %4687 = vmatprep.mubr.f32.mxu0 0.0
  %4688 = vmatmul.mubr.f32.gmra.mrb[0].mxu0 %v1978
  %v4689 = vpop.f32.mrb[0].mxu0
  %v4690 = vadd.f32 0.0, %v4689
  %v4691 = vpop.f32.mrb[0].mxu0
  %4692 = vmatprep.mubr.f32.mxu0 0.0
  %4693 = vmatmul.mubr.f32.gmra.mrb[0].mxu0 %v1981
  %v4694 = vpop.f32.mrb[0].mxu0
  %v4695 = vadd.f32 0.0, %v4694
  %v4696 = vpop.f32.mrb[0].mxu0
  %4697 = vmatprep.mubr.f32.mxu0 0.0
  %4698 = vmatmul.mubr.f32.gmra.mrb[0].mxu0 %v1984
  %v4699 = vpop.f32.mrb[0].mxu0
  %v4700 = vadd.f32 0.0, %v4699
  %v4701 = vpop.f32.mrb[0].mxu0
  %4702 = vmatprep.mubr.f32.mxu0 0.0
  %4703 = vmatmul.mubr.f32.gmra.mrb[0].mxu0 %v1987
  %v4704 = vpop.f32.mrb[0].mxu0
  %v4705 = vadd.f32 0.0, %v4704
  %v4706 = vpop.f32.mrb[0].mxu0
  %4707 = vmatprep.mubr.f32.mxu0 0.0
  %4708 = vmatmul.mubr.f32.gmra.mrb[0].mxu0 %v1990
  %v4709 = vpop.f32.mrb[0].mxu0
  %v4710 = vadd.f32 0.0, %v4709
  %v4711 = vpop.f32.mrb[0].mxu0
  %4712 = vmatprep.mubr.f32.mxu0 0.0
  %4713 = vmatmul.mubr.f32.gmra.mrb[0].mxu0 %v1993
  %v4714 = vpop.f32.mrb[0].mxu0
  %v4715 = vadd.f32 0.0, %v4714
  %v4716 = vpop.f32.mrb[0].mxu0
  %4717 = vmatprep.mubr.f32.mxu0 0.0
  %4718 = vmatmul.mubr.f32.gmra.mrb[0].mxu0 %v1996
  %v4719 = vpop.f32.mrb[0].mxu0
  %v4720 = vadd.f32 0.0, %v4719
  %v4721 = vpop.f32.mrb[0].mxu0
  %4722 = vmatprep.mubr.f32.mxu0 0.0
  %4723 = vmatmul.mubr.f32.gmra.mrb[0].mxu0 %v1999
  %v4724 = vpop.f32.mrb[0].mxu0
  %v4725 = vadd.f32 0.0, %v4724
  %v4726 = vpop.f32.mrb[0].mxu0
  %4727 = vmatprep.mubr.f32.mxu0 0.0
  %4728 = vmatmul.mubr.f32.gmra.mrb[0].mxu0 %v2002
  %v4729 = vpop.f32.mrb[0].mxu0
  %v4730 = vadd.f32 0.0, %v4729
  %v4731 = vpop.f32.mrb[0].mxu0
  %4732 = vmatprep.mubr.f32.mxu0 0.0
  %4733 = vmatmul.mubr.f32.gmra.mrb[0].mxu0 %v2005
  %v4734 = vpop.f32.mrb[0].mxu0
  %v4735 = vadd.f32 0.0, %v4734
  %v4736 = vpop.f32.mrb[0].mxu0
  %4737 = vmatprep.mubr.f32.mxu0 0.0
  %4738 = vmatmul.mubr.f32.gmra.mrb[0].mxu0 %v2008
  %v4739 = vpop.f32.mrb[0].mxu0
  %v4740 = vadd.f32 0.0, %v4739
  %v4741 = vpop.f32.mrb[0].mxu0
  %4742 = vmatprep.mubr.f32.mxu0 0.0
  %4743 = vmatmul.mubr.f32.gmra.mrb[0].mxu0 %v2011
  %v4744 = vpop.f32.mrb[0].mxu0
  %v4745 = vadd.f32 0.0, %v4744
  %v4746 = vpop.f32.mrb[0].mxu0
  %4747 = vmatprep.mubr.f32.mxu0 0.0
  %4748 = vmatmul.mubr.f32.gmra.mrb[0].mxu0 %v2014
  %v4749 = vpop.f32.mrb[0].mxu0
  %v4750 = vadd.f32 0.0, %v4749
  %v4751 = vpop.f32.mrb[0].mxu0
  %4752 = vmatprep.mubr.f32.mxu0 0.0
  %4753 = vmatmul.mubr.f32.gmra.mrb[0].mxu0 %v2017
  %v4754 = vpop.f32.mrb[0].mxu0
  %v4755 = vadd.f32 0.0, %v4754
  %v4756 = vpop.f32.mrb[0].mxu0
  %4757 = vmatprep.mubr.f32.mxu0 0.0
  %4758 = vmatmul.mubr.f32.gmra.mrb[0].mxu0 %v2020
  %v4759 = vpop.f32.mrb[0].mxu0
  %v4760 = vadd.f32 0.0, %v4759
  %v4761 = vpop.f32.mrb[0].mxu0
  %4762 = vmatprep.mubr.f32.mxu0 0.0
  %4763 = vmatmul.mubr.f32.gmra.mrb[0].mxu0 %v2023
  %v4764 = vpop.f32.mrb[0].mxu0
  %v4765 = vadd.f32 0.0, %v4764
  %v4766 = vpop.f32.mrb[0].mxu0
  %4767 = vmatprep.mubr.f32.mxu0 0.0
  %4768 = vmatmul.mubr.f32.gmra.mrb[0].mxu0 %v2026
  %v4769 = vpop.f32.mrb[0].mxu0
  %v4770 = vadd.f32 0.0, %v4769
  %v4771 = vpop.f32.mrb[0].mxu0
  %4772 = vmatprep.mubr.f32.mxu0 0.0
  %4773 = vmatmul.mubr.f32.gmra.mrb[0].mxu0 %v2029
  %v4774 = vpop.f32.mrb[0].mxu0
  %v4775 = vadd.f32 0.0, %v4774
  %v4776 = vpop.f32.mrb[0].mxu0
  %4777 = vmatprep.mubr.f32.mxu0 0.0
  %4778 = vmatmul.mubr.f32.gmra.mrb[0].mxu0 %v2032
  %v4779 = vpop.f32.mrb[0].mxu0
  %v4780 = vadd.f32 0.0, %v4779
  %v4781 = vpop.f32.mrb[0].mxu0
  %4782 = vdwg.mxu0
  %v4783 = vadd.f32 %v4526, %v4625
  %v4784 = vadd.f32 %v4527, %v4630
  %v4785 = vadd.f32 %v4528, %v4635
  %v4786 = vadd.f32 %v4529, %v4640
  %v4787 = vadd.f32 %v4530, %v4645
  %v4788 = vadd.f32 %v4531, %v4650
  %v4789 = vadd.f32 %v4532, %v4655
  %v4790 = vadd.f32 %v4533, %v4660
  %v4791 = vadd.f32 %v4534, %v4665
  %v4792 = vadd.f32 %v4535, %v4670
  %v4793 = vadd.f32 %v4536, %v4675
  %v4794 = vadd.f32 %v4537, %v4680
  %v4795 = vadd.f32 %v4538, %v4685
  %v4796 = vadd.f32 %v4539, %v4690
  %v4797 = vadd.f32 %v4540, %v4695
  %v4798 = vadd.f32 %v4541, %v4700
  %v4799 = vadd.f32 %v4542, %v4705
  %v4800 = vadd.f32 %v4543, %v4710
  %v4801 = vadd.f32 %v4544, %v4715
  %v4802 = vadd.f32 %v4545, %v4720
  %v4803 = vadd.f32 %v4546, %v4725
  %v4804 = vadd.f32 %v4547, %v4730
  %v4805 = vadd.f32 %v4548, %v4735
  %v4806 = vadd.f32 %v4549, %v4740
  %v4807 = vadd.f32 %v4550, %v4745
  %v4808 = vadd.f32 %v4551, %v4750
  %v4809 = vadd.f32 %v4552, %v4755
  %v4810 = vadd.f32 %v4553, %v4760
  %v4811 = vadd.f32 %v4554, %v4765
  %v4812 = vadd.f32 %v4555, %v4770
  %v4813 = vadd.f32 %v4556, %v4775
  %v4814 = vadd.f32 %v4557, %v4780
  %v4815 = vld [vmem:[%s1513 + $0x1] sm:$0xff]
  %v4816 = vld [vmem:[%s1513 + $0x11] sm:$0xff]
  %v4817 = vld [vmem:[%s1513 + $0x21] sm:$0xff]
  %v4818 = vld [vmem:[%s1513 + $0x31] sm:$0xff]
  %v4819 = vld [vmem:[%s1513 + $0x41] sm:$0xff]
  %v4820 = vld [vmem:[%s1513 + $0x51] sm:$0xff]
  %v4821 = vld [vmem:[%s1513 + $0x61] sm:$0xff]
  %v4822 = vld [vmem:[%s1513 + $0x71] sm:$0xff]
  %v4823 = vld [vmem:[%s1513 + $0x81] sm:$0xff]
  %v4824 = vld [vmem:[%s1513 + $0x91] sm:$0xff]
  %v4825 = vld [vmem:[%s1513 + $0xa1] sm:$0xff]
  %v4826 = vld [vmem:[%s1513 + $0xb1] sm:$0xff]
  %v4827 = vld [vmem:[%s1513 + $0xc1] sm:$0xff]
  %v4828 = vld [vmem:[%s1513 + $0xd1] sm:$0xff]
  %v4829 = vld [vmem:[%s1513 + $0xe1] sm:$0xff]
  %v4830 = vld [vmem:[%s1513 + $0xf1] sm:$0xff]
  %v4831 = vld [vmem:[%s1513 + $0x121] sm:$0xff]
  %v4832 = vld [vmem:[%s1513 + $0x131] sm:$0xff]
  %v4833 = vld [vmem:[%s1513 + $0x141] sm:$0xff]
  %v4834 = vld [vmem:[%s1513 + $0x151] sm:$0xff]
  %v4835 = vld [vmem:[%s1513 + $0x161] sm:$0xff]
  %v4836 = vld [vmem:[%s1513 + $0x171] sm:$0xff]
  %v4837 = vld [vmem:[%s1513 + $0x181] sm:$0xff]
  %v4838 = vld [vmem:[%s1513 + $0x191] sm:$0xff]
  %v4839 = vld [vmem:[%s1513 + $0x1a1] sm:$0xff]
  %v4840 = vld [vmem:[%s1513 + $0x1b1] sm:$0xff]
  %v4841 = vld [vmem:[%s1513 + $0x1c1] sm:$0xff]
  %v4842 = vld [vmem:[%s1513 + $0x1d1] sm:$0xff]
  %v4843 = vld [vmem:[%s1513 + $0x1e1] sm:$0xff]
  %v4844 = vld [vmem:[%s1513 + $0x1f1] sm:$0xff]
  %v4845 = vld [vmem:[%s1513 + $0x201] sm:$0xff]
  %v4846 = vld [vmem:[%s1513 + $0x211] sm:$0xff]
  %v4848 = vsel %vm82, %v4815, 0
  %v4851 = vsel %vm82, %v4816, 0
  %v4854 = vsel %vm82, %v4817, 0
  %v4857 = vsel %vm82, %v4818, 0
  %v4860 = vsel %vm82, %v4819, 0
  %v4863 = vsel %vm82, %v4820, 0
  %v4866 = vsel %vm82, %v4821, 0
  %v4869 = vsel %vm82, %v4822, 0
  %v4872 = vsel %vm82, %v4823, 0
  %v4875 = vsel %vm82, %v4824, 0
  %v4878 = vsel %vm82, %v4825, 0
  %v4881 = vsel %vm82, %v4826, 0
  %v4884 = vsel %vm82, %v4827, 0
  %v4887 = vsel %vm82, %v4828, 0
  %v4890 = vsel %vm82, %v4829, 0
  %v4893 = vsel %vm82, %v4830, 0
  %v4896 = vsel %vm82, %v4831, 0
  %v4899 = vsel %vm82, %v4832, 0
  %v4902 = vsel %vm82, %v4833, 0
  %v4905 = vsel %vm82, %v4834, 0
  %v4908 = vsel %vm82, %v4835, 0
  %v4911 = vsel %vm82, %v4836, 0
  %v4914 = vsel %vm82, %v4837, 0
  %v4917 = vsel %vm82, %v4838, 0
  %v4920 = vsel %vm82, %v4839, 0
  %v4923 = vsel %vm82, %v4840, 0
  %v4926 = vsel %vm82, %v4841, 0
  %v4929 = vsel %vm82, %v4842, 0
  %v4932 = vsel %vm82, %v4843, 0
  %v4935 = vsel %vm82, %v4844, 0
  %v4938 = vsel %vm82, %v4845, 0
  %v4941 = vsel %vm82, %v4846, 0
  %4943 = vmatprep.subr.mxu0 0.0
  %4944 = vmatpush1.msra.mxu0 %v2035
  %4945 = vmatprep.subr.mxu0 0.0
  %4946 = vmatpush1.msra.mxu0 0.0
  %4947 = vmatprep.subr.mxu0 0.0
  %4948 = vmatpush1.msra.mxu0 0.0
  %4949 = vmatprep.subr.mxu0 0.0
  %4950 = vmatpush1.msra.mxu0 0.0
  %4951 = vmatprep.subr.mxu0 0.0
  %4952 = vmatpush1.msra.mxu0 0.0
  %4953 = vmatprep.subr.mxu0 0.0
  %4954 = vmatpush1.msra.mxu0 0.0
  %4955 = vmatprep.subr.mxu0 0.0
  %4956 = vmatpush1.msra.mxu0 0.0
  %4957 = vmatprep.subr.mxu0 0.0
  %4958 = vmatpush1.msra.mxu0 0.0
  %4959 = vmatprep.subr.mxu0 0.0
  %4960 = vmatpush1.msra.mxu0 0.0
  %4961 = vmatprep.subr.mxu0 0.0
  %4962 = vmatpush1.msra.mxu0 0.0
  %4963 = vmatprep.subr.mxu0 0.0
  %4964 = vmatpush1.msra.mxu0 0.0
  %4965 = vmatprep.subr.mxu0 0.0
  %4966 = vmatpush1.msra.mxu0 0.0
  %4967 = vmatprep.subr.mxu0 0.0
  %4968 = vmatpush1.msra.mxu0 0.0
  %4969 = vmatprep.subr.mxu0 0.0
  %4970 = vmatpush1.msra.mxu0 0.0
  %4971 = vmatprep.subr.mxu0 0.0
  %4972 = vmatpush1.msra.mxu0 0.0
  %4973 = vmatprep.subr.mxu0 0.0
  %4974 = vmatpush1.msra.mxu0 0.0
  %4975 = vmatprep.subr.mxu0 0.0
  %4976 = vmatpush1.msra.mxu0 0.0
  %4977 = vmatprep.subr.mxu0 0.0
  %4978 = vmatpush1.msra.mxu0 0.0
  %4979 = vmatprep.subr.mxu0 0.0
  %4980 = vmatpush1.msra.mxu0 0.0
  %4981 = vmatprep.subr.mxu0 0.0
  %4982 = vmatpush1.msra.mxu0 0.0
  %4983 = vmatprep.subr.mxu0 0.0
  %4984 = vmatpush1.msra.mxu0 0.0
  %4985 = vmatprep.subr.mxu0 0.0
  %4986 = vmatpush1.msra.mxu0 0.0
  %4987 = vmatprep.subr.mxu0 0.0
  %4988 = vmatpush1.msra.mxu0 0.0
  %4989 = vmatprep.subr.mxu0 0.0
  %4990 = vmatpush1.msra.mxu0 0.0
  %4991 = vmatprep.subr.mxu0 0.0
  %4992 = vmatpush1.msra.mxu0 0.0
  %4993 = vmatprep.subr.mxu0 0.0
  %4994 = vmatpush1.msra.mxu0 0.0
  %4995 = vmatprep.subr.mxu0 0.0
  %4996 = vmatpush1.msra.mxu0 0.0
  %4997 = vmatprep.subr.mxu0 0.0
  %4998 = vmatpush1.msra.mxu0 0.0
  %4999 = vmatprep.subr.mxu0 0.0
  %5000 = vmatpush1.msra.mxu0 0.0
  %5001 = vmatprep.subr.mxu0 0.0
  %5002 = vmatpush1.msra.mxu0 0.0
  %5003 = vmatprep.subr.mxu0 0.0
  %5004 = vmatpush1.msra.mxu0 0.0
  %5005 = vmatprep.subr.mxu0 0.0
  %5006 = vmatpush1.msra.mxu0 0.0
  %5007 = vmatprep.mubr.f32.mxu0 0.0
  %5008 = vmatmul.mubr.f32.gmra.mrb[0].mxu0 %v4848
  %v5009 = vpop.f32.mrb[0].mxu0
  %v5010 = vadd.f32 0.0, %v5009
  %v5011 = vpop.f32.mrb[0].mxu0
  %5012 = vmatprep.mubr.f32.mxu0 0.0
  %5013 = vmatmul.mubr.f32.gmra.mrb[0].mxu0 %v4851
  %v5014 = vpop.f32.mrb[0].mxu0
  %v5015 = vadd.f32 0.0, %v5014
  %v5016 = vpop.f32.mrb[0].mxu0
  %5017 = vmatprep.mubr.f32.mxu0 0.0
  %5018 = vmatmul.mubr.f32.gmra.mrb[0].mxu0 %v4854
  %v5019 = vpop.f32.mrb[0].mxu0
  %v5020 = vadd.f32 0.0, %v5019
  %v5021 = vpop.f32.mrb[0].mxu0
  %5022 = vmatprep.mubr.f32.mxu0 0.0
  %5023 = vmatmul.mubr.f32.gmra.mrb[0].mxu0 %v4857
  %v5024 = vpop.f32.mrb[0].mxu0
  %v5025 = vadd.f32 0.0, %v5024
  %v5026 = vpop.f32.mrb[0].mxu0
  %5027 = vmatprep.mubr.f32.mxu0 0.0
  %5028 = vmatmul.mubr.f32.gmra.mrb[0].mxu0 %v4860
  %v5029 = vpop.f32.mrb[0].mxu0
  %v5030 = vadd.f32 0.0, %v5029
  %v5031 = vpop.f32.mrb[0].mxu0
  %5032 = vmatprep.mubr.f32.mxu0 0.0
  %5033 = vmatmul.mubr.f32.gmra.mrb[0].mxu0 %v4863
  %v5034 = vpop.f32.mrb[0].mxu0
  %v5035 = vadd.f32 0.0, %v5034
  %v5036 = vpop.f32.mrb[0].mxu0
  %5037 = vmatprep.mubr.f32.mxu0 0.0
  %5038 = vmatmul.mubr.f32.gmra.mrb[0].mxu0 %v4866
  %v5039 = vpop.f32.mrb[0].mxu0
  %v5040 = vadd.f32 0.0, %v5039
  %v5041 = vpop.f32.mrb[0].mxu0
  %5042 = vmatprep.mubr.f32.mxu0 0.0
  %5043 = vmatmul.mubr.f32.gmra.mrb[0].mxu0 %v4869
  %v5044 = vpop.f32.mrb[0].mxu0
  %v5045 = vadd.f32 0.0, %v5044
  %v5046 = vpop.f32.mrb[0].mxu0
  %5047 = vmatprep.mubr.f32.mxu0 0.0
  %5048 = vmatmul.mubr.f32.gmra.mrb[0].mxu0 %v4872
  %v5049 = vpop.f32.mrb[0].mxu0
  %v5050 = vadd.f32 0.0, %v5049
  %v5051 = vpop.f32.mrb[0].mxu0
  %5052 = vmatprep.mubr.f32.mxu0 0.0
  %5053 = vmatmul.mubr.f32.gmra.mrb[0].mxu0 %v4875
  %v5054 = vpop.f32.mrb[0].mxu0
  %v5055 = vadd.f32 0.0, %v5054
  %v5056 = vpop.f32.mrb[0].mxu0
  %5057 = vmatprep.mubr.f32.mxu0 0.0
  %5058 = vmatmul.mubr.f32.gmra.mrb[0].mxu0 %v4878
  %v5059 = vpop.f32.mrb[0].mxu0
  %v5060 = vadd.f32 0.0, %v5059
  %v5061 = vpop.f32.mrb[0].mxu0
  %5062 = vmatprep.mubr.f32.mxu0 0.0
  %5063 = vmatmul.mubr.f32.gmra.mrb[0].mxu0 %v4881
  %v5064 = vpop.f32.mrb[0].mxu0
  %v5065 = vadd.f32 0.0, %v5064
  %v5066 = vpop.f32.mrb[0].mxu0
  %5067 = vmatprep.mubr.f32.mxu0 0.0
  %5068 = vmatmul.mubr.f32.gmra.mrb[0].mxu0 %v4884
  %v5069 = vpop.f32.mrb[0].mxu0
  %v5070 = vadd.f32 0.0, %v5069
  %v5071 = vpop.f32.mrb[0].mxu0
  %5072 = vmatprep.mubr.f32.mxu0 0.0
  %5073 = vmatmul.mubr.f32.gmra.mrb[0].mxu0 %v4887
  %v5074 = vpop.f32.mrb[0].mxu0
  %v5075 = vadd.f32 0.0, %v5074
  %v5076 = vpop.f32.mrb[0].mxu0
  %5077 = vmatprep.mubr.f32.mxu0 0.0
  %5078 = vmatmul.mubr.f32.gmra.mrb[0].mxu0 %v4890
  %v5079 = vpop.f32.mrb[0].mxu0
  %v5080 = vadd.f32 0.0, %v5079
  %v5081 = vpop.f32.mrb[0].mxu0
  %5082 = vmatprep.mubr.f32.mxu0 0.0
  %5083 = vmatmul.mubr.f32.gmra.mrb[0].mxu0 %v4893
  %v5084 = vpop.f32.mrb[0].mxu0
  %v5085 = vadd.f32 0.0, %v5084
  %v5086 = vpop.f32.mrb[0].mxu0
  %5087 = vmatprep.mubr.f32.mxu0 0.0
  %5088 = vmatmul.mubr.f32.gmra.mrb[0].mxu0 %v4896
  %v5089 = vpop.f32.mrb[0].mxu0
  %v5090 = vadd.f32 0.0, %v5089
  %v5091 = vpop.f32.mrb[0].mxu0
  %5092 = vmatprep.mubr.f32.mxu0 0.0
  %5093 = vmatmul.mubr.f32.gmra.mrb[0].mxu0 %v4899
  %v5094 = vpop.f32.mrb[0].mxu0
  %v5095 = vadd.f32 0.0, %v5094
  %v5096 = vpop.f32.mrb[0].mxu0
  %5097 = vmatprep.mubr.f32.mxu0 0.0
  %5098 = vmatmul.mubr.f32.gmra.mrb[0].mxu0 %v4902
  %v5099 = vpop.f32.mrb[0].mxu0
  %v5100 = vadd.f32 0.0, %v5099
  %v5101 = vpop.f32.mrb[0].mxu0
  %5102 = vmatprep.mubr.f32.mxu0 0.0
  %5103 = vmatmul.mubr.f32.gmra.mrb[0].mxu0 %v4905
  %v5104 = vpop.f32.mrb[0].mxu0
  %v5105 = vadd.f32 0.0, %v5104
  %v5106 = vpop.f32.mrb[0].mxu0
  %5107 = vmatprep.mubr.f32.mxu0 0.0
  %5108 = vmatmul.mubr.f32.gmra.mrb[0].mxu0 %v4908
  %v5109 = vpop.f32.mrb[0].mxu0
  %v5110 = vadd.f32 0.0, %v5109
  %v5111 = vpop.f32.mrb[0].mxu0
  %5112 = vmatprep.mubr.f32.mxu0 0.0
  %5113 = vmatmul.mubr.f32.gmra.mrb[0].mxu0 %v4911
  %v5114 = vpop.f32.mrb[0].mxu0
  %v5115 = vadd.f32 0.0, %v5114
  %v5116 = vpop.f32.mrb[0].mxu0
  %5117 = vmatprep.mubr.f32.mxu0 0.0
  %5118 = vmatmul.mubr.f32.gmra.mrb[0].mxu0 %v4914
  %v5119 = vpop.f32.mrb[0].mxu0
  %v5120 = vadd.f32 0.0, %v5119
  %v5121 = vpop.f32.mrb[0].mxu0
  %5122 = vmatprep.mubr.f32.mxu0 0.0
  %5123 = vmatmul.mubr.f32.gmra.mrb[0].mxu0 %v4917
  %v5124 = vpop.f32.mrb[0].mxu0
  %v5125 = vadd.f32 0.0, %v5124
  %v5126 = vpop.f32.mrb[0].mxu0
  %5127 = vmatprep.mubr.f32.mxu0 0.0
  %5128 = vmatmul.mubr.f32.gmra.mrb[0].mxu0 %v4920
  %v5129 = vpop.f32.mrb[0].mxu0
  %v5130 = vadd.f32 0.0, %v5129
  %v5131 = vpop.f32.mrb[0].mxu0
  %5132 = vmatprep.mubr.f32.mxu0 0.0
  %5133 = vmatmul.mubr.f32.gmra.mrb[0].mxu0 %v4923
  %v5134 = vpop.f32.mrb[0].mxu0
  %v5135 = vadd.f32 0.0, %v5134
  %v5136 = vpop.f32.mrb[0].mxu0
  %5137 = vmatprep.mubr.f32.mxu0 0.0
  %5138 = vmatmul.mubr.f32.gmra.mrb[0].mxu0 %v4926
  %v5139 = vpop.f32.mrb[0].mxu0
  %v5140 = vadd.f32 0.0, %v5139
  %v5141 = vpop.f32.mrb[0].mxu0
  %5142 = vmatprep.mubr.f32.mxu0 0.0
  %5143 = vmatmul.mubr.f32.gmra.mrb[0].mxu0 %v4929
  %v5144 = vpop.f32.mrb[0].mxu0
  %v5145 = vadd.f32 0.0, %v5144
  %v5146 = vpop.f32.mrb[0].mxu0
  %5147 = vmatprep.mubr.f32.mxu0 0.0
  %5148 = vmatmul.mubr.f32.gmra.mrb[0].mxu0 %v4932
  %v5149 = vpop.f32.mrb[0].mxu0
  %v5150 = vadd.f32 0.0, %v5149
  %v5151 = vpop.f32.mrb[0].mxu0
  %5152 = vmatprep.mubr.f32.mxu0 0.0
  %5153 = vmatmul.mubr.f32.gmra.mrb[0].mxu0 %v4935
  %v5154 = vpop.f32.mrb[0].mxu0
  %v5155 = vadd.f32 0.0, %v5154
  %v5156 = vpop.f32.mrb[0].mxu0
  %5157 = vmatprep.mubr.f32.mxu0 0.0
  %5158 = vmatmul.mubr.f32.gmra.mrb[0].mxu0 %v4938
  %v5159 = vpop.f32.mrb[0].mxu0
  %v5160 = vadd.f32 0.0, %v5159
  %v5161 = vpop.f32.mrb[0].mxu0
  %5162 = vmatprep.mubr.f32.mxu0 0.0
  %5163 = vmatmul.mubr.f32.gmra.mrb[0].mxu0 %v4941
  %v5164 = vpop.f32.mrb[0].mxu0
  %v5165 = vadd.f32 0.0, %v5164
  %v5166 = vpop.f32.mrb[0].mxu0
  %5167 = vdwg.mxu0
  %v5168 = vadd.f32 %v4783, %v5010
  %v5169 = vadd.f32 %v4784, %v5015
  %v5170 = vadd.f32 %v4785, %v5020
  %v5171 = vadd.f32 %v4786, %v5025
  %v5172 = vadd.f32 %v4787, %v5030
  %v5173 = vadd.f32 %v4788, %v5035
  %v5174 = vadd.f32 %v4789, %v5040
  %v5175 = vadd.f32 %v4790, %v5045
  %v5176 = vadd.f32 %v4791, %v5050
  %v5177 = vadd.f32 %v4792, %v5055
  %v5178 = vadd.f32 %v4793, %v5060
  %v5179 = vadd.f32 %v4794, %v5065
  %v5180 = vadd.f32 %v4795, %v5070
  %v5181 = vadd.f32 %v4796, %v5075
  %v5182 = vadd.f32 %v4797, %v5080
  %v5183 = vadd.f32 %v4798, %v5085
  %v5184 = vadd.f32 %v4799, %v5090
  %v5185 = vadd.f32 %v4800, %v5095
  %v5186 = vadd.f32 %v4801, %v5100
  %v5187 = vadd.f32 %v4802, %v5105
  %v5188 = vadd.f32 %v4803, %v5110
  %v5189 = vadd.f32 %v4804, %v5115
  %v5190 = vadd.f32 %v4805, %v5120
  %v5191 = vadd.f32 %v4806, %v5125
  %v5192 = vadd.f32 %v4807, %v5130
  %v5193 = vadd.f32 %v4808, %v5135
  %v5194 = vadd.f32 %v4809, %v5140
  %v5195 = vadd.f32 %v4810, %v5145
  %v5196 = vadd.f32 %v4811, %v5150
  %v5197 = vadd.f32 %v4812, %v5155
  %v5198 = vadd.f32 %v4813, %v5160
  %v5199 = vadd.f32 %v4814, %v5165
  %5200 = vmatprep.subr.mxu0 0.0
  %5201 = vmatpush1.msra.mxu0 %v2426
  %5202 = vmatprep.subr.mxu0 0.0
  %5203 = vmatpush1.msra.mxu0 0.0
  %5204 = vmatprep.subr.mxu0 0.0
  %5205 = vmatpush1.msra.mxu0 0.0
  %5206 = vmatprep.subr.mxu0 0.0
  %5207 = vmatpush1.msra.mxu0 0.0
  %5208 = vmatprep.subr.mxu0 0.0
  %5209 = vmatpush1.msra.mxu0 0.0
  %5210 = vmatprep.subr.mxu0 0.0
  %5211 = vmatpush1.msra.mxu0 0.0
  %5212 = vmatprep.subr.mxu0 0.0
  %5213 = vmatpush1.msra.mxu0 0.0
  %5214 = vmatprep.subr.mxu0 0.0
  %5215 = vmatpush1.msra.mxu0 0.0
  %5216 = vmatprep.subr.mxu0 0.0
  %5217 = vmatpush1.msra.mxu0 0.0
  %5218 = vmatprep.subr.mxu0 0.0
  %5219 = vmatpush1.msra.mxu0 0.0
  %5220 = vmatprep.subr.mxu0 0.0
  %5221 = vmatpush1.msra.mxu0 0.0
  %5222 = vmatprep.subr.mxu0 0.0
  %5223 = vmatpush1.msra.mxu0 0.0
  %5224 = vmatprep.subr.mxu0 0.0
  %5225 = vmatpush1.msra.mxu0 0.0
  %5226 = vmatprep.subr.mxu0 0.0
  %5227 = vmatpush1.msra.mxu0 0.0
  %5228 = vmatprep.subr.mxu0 0.0
  %5229 = vmatpush1.msra.mxu0 0.0
  %5230 = vmatprep.subr.mxu0 0.0
  %5231 = vmatpush1.msra.mxu0 0.0
  %5232 = vmatprep.subr.mxu0 0.0
  %5233 = vmatpush1.msra.mxu0 0.0
  %5234 = vmatprep.subr.mxu0 0.0
  %5235 = vmatpush1.msra.mxu0 0.0
  %5236 = vmatprep.subr.mxu0 0.0
  %5237 = vmatpush1.msra.mxu0 0.0
  %5238 = vmatprep.subr.mxu0 0.0
  %5239 = vmatpush1.msra.mxu0 0.0
  %5240 = vmatprep.subr.mxu0 0.0
  %5241 = vmatpush1.msra.mxu0 0.0
  %5242 = vmatprep.subr.mxu0 0.0
  %5243 = vmatpush1.msra.mxu0 0.0
  %5244 = vmatprep.subr.mxu0 0.0
  %5245 = vmatpush1.msra.mxu0 0.0
  %5246 = vmatprep.subr.mxu0 0.0
  %5247 = vmatpush1.msra.mxu0 0.0
  %5248 = vmatprep.subr.mxu0 0.0
  %5249 = vmatpush1.msra.mxu0 0.0
  %5250 = vmatprep.subr.mxu0 0.0
  %5251 = vmatpush1.msra.mxu0 0.0
  %5252 = vmatprep.subr.mxu0 0.0
  %5253 = vmatpush1.msra.mxu0 0.0
  %5254 = vmatprep.subr.mxu0 0.0
  %5255 = vmatpush1.msra.mxu0 0.0
  %5256 = vmatprep.subr.mxu0 0.0
  %5257 = vmatpush1.msra.mxu0 0.0
  %5258 = vmatprep.subr.mxu0 0.0
  %5259 = vmatpush1.msra.mxu0 0.0
  %5260 = vmatprep.subr.mxu0 0.0
  %5261 = vmatpush1.msra.mxu0 0.0
  %5262 = vmatprep.subr.mxu0 0.0
  %5263 = vmatpush1.msra.mxu0 0.0
  %5264 = vmatprep.mubr.f32.mxu0 0.0
  %5265 = vmatmul.mubr.f32.gmra.mrb[0].mxu0 %v2721
  %v5266 = vpop.f32.mrb[0].mxu0
  %v5267 = vadd.f32 0.0, %v5266
  %v5268 = vpop.f32.mrb[0].mxu0
  %5269 = vmatprep.mubr.f32.mxu0 0.0
  %5270 = vmatmul.mubr.f32.gmra.mrb[0].mxu0 %v2724
  %v5271 = vpop.f32.mrb[0].mxu0
  %v5272 = vadd.f32 0.0, %v5271
  %v5273 = vpop.f32.mrb[0].mxu0
  %5274 = vmatprep.mubr.f32.mxu0 0.0
  %5275 = vmatmul.mubr.f32.gmra.mrb[0].mxu0 %v2727
  %v5276 = vpop.f32.mrb[0].mxu0
  %v5277 = vadd.f32 0.0, %v5276
  %v5278 = vpop.f32.mrb[0].mxu0
  %5279 = vmatprep.mubr.f32.mxu0 0.0
  %5280 = vmatmul.mubr.f32.gmra.mrb[0].mxu0 %v2730
  %v5281 = vpop.f32.mrb[0].mxu0
  %v5282 = vadd.f32 0.0, %v5281
  %v5283 = vpop.f32.mrb[0].mxu0
  %5284 = vmatprep.mubr.f32.mxu0 0.0
  %5285 = vmatmul.mubr.f32.gmra.mrb[0].mxu0 %v2733
  %v5286 = vpop.f32.mrb[0].mxu0
  %v5287 = vadd.f32 0.0, %v5286
  %v5288 = vpop.f32.mrb[0].mxu0
  %5289 = vmatprep.mubr.f32.mxu0 0.0
  %5290 = vmatmul.mubr.f32.gmra.mrb[0].mxu0 %v2736
  %v5291 = vpop.f32.mrb[0].mxu0
  %v5292 = vadd.f32 0.0, %v5291
  %v5293 = vpop.f32.mrb[0].mxu0
  %5294 = vmatprep.mubr.f32.mxu0 0.0
  %5295 = vmatmul.mubr.f32.gmra.mrb[0].mxu0 %v2739
  %v5296 = vpop.f32.mrb[0].mxu0
  %v5297 = vadd.f32 0.0, %v5296
  %v5298 = vpop.f32.mrb[0].mxu0
  %5299 = vmatprep.mubr.f32.mxu0 0.0
  %5300 = vmatmul.mubr.f32.gmra.mrb[0].mxu0 %v2742
  %v5301 = vpop.f32.mrb[0].mxu0
  %v5302 = vadd.f32 0.0, %v5301
  %v5303 = vpop.f32.mrb[0].mxu0
  %5304 = vmatprep.mubr.f32.mxu0 0.0
  %5305 = vmatmul.mubr.f32.gmra.mrb[0].mxu0 %v2745
  %v5306 = vpop.f32.mrb[0].mxu0
  %v5307 = vadd.f32 0.0, %v5306
  %v5308 = vpop.f32.mrb[0].mxu0
  %5309 = vmatprep.mubr.f32.mxu0 0.0
  %5310 = vmatmul.mubr.f32.gmra.mrb[0].mxu0 %v2748
  %v5311 = vpop.f32.mrb[0].mxu0
  %v5312 = vadd.f32 0.0, %v5311
  %v5313 = vpop.f32.mrb[0].mxu0
  %5314 = vmatprep.mubr.f32.mxu0 0.0
  %5315 = vmatmul.mubr.f32.gmra.mrb[0].mxu0 %v2751
  %v5316 = vpop.f32.mrb[0].mxu0
  %v5317 = vadd.f32 0.0, %v5316
  %v5318 = vpop.f32.mrb[0].mxu0
  %5319 = vmatprep.mubr.f32.mxu0 0.0
  %5320 = vmatmul.mubr.f32.gmra.mrb[0].mxu0 %v2754
  %v5321 = vpop.f32.mrb[0].mxu0
  %v5322 = vadd.f32 0.0, %v5321
  %v5323 = vpop.f32.mrb[0].mxu0
  %5324 = vmatprep.mubr.f32.mxu0 0.0
  %5325 = vmatmul.mubr.f32.gmra.mrb[0].mxu0 %v2757
  %v5326 = vpop.f32.mrb[0].mxu0
  %v5327 = vadd.f32 0.0, %v5326
  %v5328 = vpop.f32.mrb[0].mxu0
  %5329 = vmatprep.mubr.f32.mxu0 0.0
  %5330 = vmatmul.mubr.f32.gmra.mrb[0].mxu0 %v2760
  %v5331 = vpop.f32.mrb[0].mxu0
  %v5332 = vadd.f32 0.0, %v5331
  %v5333 = vpop.f32.mrb[0].mxu0
  %5334 = vmatprep.mubr.f32.mxu0 0.0
  %5335 = vmatmul.mubr.f32.gmra.mrb[0].mxu0 %v2763
  %v5336 = vpop.f32.mrb[0].mxu0
  %v5337 = vadd.f32 0.0, %v5336
  %v5338 = vpop.f32.mrb[0].mxu0
  %5339 = vmatprep.mubr.f32.mxu0 0.0
  %5340 = vmatmul.mubr.f32.gmra.mrb[0].mxu0 %v2766
  %v5341 = vpop.f32.mrb[0].mxu0
  %v5342 = vadd.f32 0.0, %v5341
  %v5343 = vpop.f32.mrb[0].mxu0
  %5344 = vmatprep.mubr.f32.mxu0 0.0
  %5345 = vmatmul.mubr.f32.gmra.mrb[0].mxu0 %v2769
  %v5346 = vpop.f32.mrb[0].mxu0
  %v5347 = vadd.f32 0.0, %v5346
  %v5348 = vpop.f32.mrb[0].mxu0
  %5349 = vmatprep.mubr.f32.mxu0 0.0
  %5350 = vmatmul.mubr.f32.gmra.mrb[0].mxu0 %v2772
  %v5351 = vpop.f32.mrb[0].mxu0
  %v5352 = vadd.f32 0.0, %v5351
  %v5353 = vpop.f32.mrb[0].mxu0
  %5354 = vmatprep.mubr.f32.mxu0 0.0
  %5355 = vmatmul.mubr.f32.gmra.mrb[0].mxu0 %v2775
  %v5356 = vpop.f32.mrb[0].mxu0
  %v5357 = vadd.f32 0.0, %v5356
  %v5358 = vpop.f32.mrb[0].mxu0
  %5359 = vmatprep.mubr.f32.mxu0 0.0
  %5360 = vmatmul.mubr.f32.gmra.mrb[0].mxu0 %v2778
  %v5361 = vpop.f32.mrb[0].mxu0
  %v5362 = vadd.f32 0.0, %v5361
  %v5363 = vpop.f32.mrb[0].mxu0
  %5364 = vmatprep.mubr.f32.mxu0 0.0
  %5365 = vmatmul.mubr.f32.gmra.mrb[0].mxu0 %v2781
  %v5366 = vpop.f32.mrb[0].mxu0
  %v5367 = vadd.f32 0.0, %v5366
  %v5368 = vpop.f32.mrb[0].mxu0
  %5369 = vmatprep.mubr.f32.mxu0 0.0
  %5370 = vmatmul.mubr.f32.gmra.mrb[0].mxu0 %v2784
  %v5371 = vpop.f32.mrb[0].mxu0
  %v5372 = vadd.f32 0.0, %v5371
  %v5373 = vpop.f32.mrb[0].mxu0
  %5374 = vmatprep.mubr.f32.mxu0 0.0
  %5375 = vmatmul.mubr.f32.gmra.mrb[0].mxu0 %v2787
  %v5376 = vpop.f32.mrb[0].mxu0
  %v5377 = vadd.f32 0.0, %v5376
  %v5378 = vpop.f32.mrb[0].mxu0
  %5379 = vmatprep.mubr.f32.mxu0 0.0
  %5380 = vmatmul.mubr.f32.gmra.mrb[0].mxu0 %v2790
  %v5381 = vpop.f32.mrb[0].mxu0
  %v5382 = vadd.f32 0.0, %v5381
  %v5383 = vpop.f32.mrb[0].mxu0
  %5384 = vmatprep.mubr.f32.mxu0 0.0
  %5385 = vmatmul.mubr.f32.gmra.mrb[0].mxu0 %v2793
  %v5386 = vpop.f32.mrb[0].mxu0
  %v5387 = vadd.f32 0.0, %v5386
  %v5388 = vpop.f32.mrb[0].mxu0
  %5389 = vmatprep.mubr.f32.mxu0 0.0
  %5390 = vmatmul.mubr.f32.gmra.mrb[0].mxu0 %v2796
  %v5391 = vpop.f32.mrb[0].mxu0
  %v5392 = vadd.f32 0.0, %v5391
  %v5393 = vpop.f32.mrb[0].mxu0
  %5394 = vmatprep.mubr.f32.mxu0 0.0
  %5395 = vmatmul.mubr.f32.gmra.mrb[0].mxu0 %v2799
  %v5396 = vpop.f32.mrb[0].mxu0
  %v5397 = vadd.f32 0.0, %v5396
  %v5398 = vpop.f32.mrb[0].mxu0
  %5399 = vmatprep.mubr.f32.mxu0 0.0
  %5400 = vmatmul.mubr.f32.gmra.mrb[0].mxu0 %v2802
  %v5401 = vpop.f32.mrb[0].mxu0
  %v5402 = vadd.f32 0.0, %v5401
  %v5403 = vpop.f32.mrb[0].mxu0
  %5404 = vmatprep.mubr.f32.mxu0 0.0
  %5405 = vmatmul.mubr.f32.gmra.mrb[0].mxu0 %v2805
  %v5406 = vpop.f32.mrb[0].mxu0
  %v5407 = vadd.f32 0.0, %v5406
  %v5408 = vpop.f32.mrb[0].mxu0
  %5409 = vmatprep.mubr.f32.mxu0 0.0
  %5410 = vmatmul.mubr.f32.gmra.mrb[0].mxu0 %v2808
  %v5411 = vpop.f32.mrb[0].mxu0
  %v5412 = vadd.f32 0.0, %v5411
  %v5413 = vpop.f32.mrb[0].mxu0
  %5414 = vmatprep.mubr.f32.mxu0 0.0
  %5415 = vmatmul.mubr.f32.gmra.mrb[0].mxu0 %v2811
  %v5416 = vpop.f32.mrb[0].mxu0
  %v5417 = vadd.f32 0.0, %v5416
  %v5418 = vpop.f32.mrb[0].mxu0
  %5419 = vmatprep.mubr.f32.mxu0 0.0
  %5420 = vmatmul.mubr.f32.gmra.mrb[0].mxu0 %v2814
  %v5421 = vpop.f32.mrb[0].mxu0
  %v5422 = vadd.f32 0.0, %v5421
  %v5423 = vpop.f32.mrb[0].mxu0
  %5424 = vdwg.mxu0
  %v5425 = vadd.f32 %v5168, %v5267
  %v5426 = vadd.f32 %v5169, %v5272
  %v5427 = vadd.f32 %v5170, %v5277
  %v5428 = vadd.f32 %v5171, %v5282
  %v5429 = vadd.f32 %v5172, %v5287
  %v5430 = vadd.f32 %v5173, %v5292
  %v5431 = vadd.f32 %v5174, %v5297
  %v5432 = vadd.f32 %v5175, %v5302
  %v5433 = vadd.f32 %v5176, %v5307
  %v5434 = vadd.f32 %v5177, %v5312
  %v5435 = vadd.f32 %v5178, %v5317
  %v5436 = vadd.f32 %v5179, %v5322
  %v5437 = vadd.f32 %v5180, %v5327
  %v5438 = vadd.f32 %v5181, %v5332
  %v5439 = vadd.f32 %v5182, %v5337
  %v5440 = vadd.f32 %v5183, %v5342
  %v5441 = vadd.f32 %v5184, %v5347
  %v5442 = vadd.f32 %v5185, %v5352
  %v5443 = vadd.f32 %v5186, %v5357
  %v5444 = vadd.f32 %v5187, %v5362
  %v5445 = vadd.f32 %v5188, %v5367
  %v5446 = vadd.f32 %v5189, %v5372
  %v5447 = vadd.f32 %v5190, %v5377
  %v5448 = vadd.f32 %v5191, %v5382
  %v5449 = vadd.f32 %v5192, %v5387
  %v5450 = vadd.f32 %v5193, %v5392
  %v5451 = vadd.f32 %v5194, %v5397
  %v5452 = vadd.f32 %v5195, %v5402
  %v5453 = vadd.f32 %v5196, %v5407
  %v5454 = vadd.f32 %v5197, %v5412
  %v5455 = vadd.f32 %v5198, %v5417
  %v5456 = vadd.f32 %v5199, %v5422
  %5457 = vmatprep.subr.mxu0 0.0
  %5458 = vmatpush1.msra.mxu0 %v2817
  %5459 = vmatprep.subr.mxu0 0.0
  %5460 = vmatpush1.msra.mxu0 0.0
  %5461 = vmatprep.subr.mxu0 0.0
  %5462 = vmatpush1.msra.mxu0 0.0
  %5463 = vmatprep.subr.mxu0 0.0
  %5464 = vmatpush1.msra.mxu0 0.0
  %5465 = vmatprep.subr.mxu0 0.0
  %5466 = vmatpush1.msra.mxu0 0.0
  %5467 = vmatprep.subr.mxu0 0.0
  %5468 = vmatpush1.msra.mxu0 0.0
  %5469 = vmatprep.subr.mxu0 0.0
  %5470 = vmatpush1.msra.mxu0 0.0
  %5471 = vmatprep.subr.mxu0 0.0
  %5472 = vmatpush1.msra.mxu0 0.0
  %5473 = vmatprep.subr.mxu0 0.0
  %5474 = vmatpush1.msra.mxu0 0.0
  %5475 = vmatprep.subr.mxu0 0.0
  %5476 = vmatpush1.msra.mxu0 0.0
  %5477 = vmatprep.subr.mxu0 0.0
  %5478 = vmatpush1.msra.mxu0 0.0
  %5479 = vmatprep.subr.mxu0 0.0
  %5480 = vmatpush1.msra.mxu0 0.0
  %5481 = vmatprep.subr.mxu0 0.0
  %5482 = vmatpush1.msra.mxu0 0.0
  %5483 = vmatprep.subr.mxu0 0.0
  %5484 = vmatpush1.msra.mxu0 0.0
  %5485 = vmatprep.subr.mxu0 0.0
  %5486 = vmatpush1.msra.mxu0 0.0
  %5487 = vmatprep.subr.mxu0 0.0
  %5488 = vmatpush1.msra.mxu0 0.0
  %5489 = vmatprep.subr.mxu0 0.0
  %5490 = vmatpush1.msra.mxu0 0.0
  %5491 = vmatprep.subr.mxu0 0.0
  %5492 = vmatpush1.msra.mxu0 0.0
  %5493 = vmatprep.subr.mxu0 0.0
  %5494 = vmatpush1.msra.mxu0 0.0
  %5495 = vmatprep.subr.mxu0 0.0
  %5496 = vmatpush1.msra.mxu0 0.0
  %5497 = vmatprep.subr.mxu0 0.0
  %5498 = vmatpush1.msra.mxu0 0.0
  %5499 = vmatprep.subr.mxu0 0.0
  %5500 = vmatpush1.msra.mxu0 0.0
  %5501 = vmatprep.subr.mxu0 0.0
  %5502 = vmatpush1.msra.mxu0 0.0
  %5503 = vmatprep.subr.mxu0 0.0
  %5504 = vmatpush1.msra.mxu0 0.0
  %5505 = vmatprep.subr.mxu0 0.0
  %5506 = vmatpush1.msra.mxu0 0.0
  %5507 = vmatprep.subr.mxu0 0.0
  %5508 = vmatpush1.msra.mxu0 0.0
  %5509 = vmatprep.subr.mxu0 0.0
  %5510 = vmatpush1.msra.mxu0 0.0
  %5511 = vmatprep.subr.mxu0 0.0
  %5512 = vmatpush1.msra.mxu0 0.0
  %5513 = vmatprep.subr.mxu0 0.0
  %5514 = vmatpush1.msra.mxu0 0.0
  %5515 = vmatprep.subr.mxu0 0.0
  %5516 = vmatpush1.msra.mxu0 0.0
  %5517 = vmatprep.subr.mxu0 0.0
  %5518 = vmatpush1.msra.mxu0 0.0
  %5519 = vmatprep.subr.mxu0 0.0
  %5520 = vmatpush1.msra.mxu0 0.0
  %5521 = vmatprep.mubr.f32.mxu0 0.0
  %5522 = vmatmul.mubr.f32.gmra.mrb[0].mxu0 %v3111
  %v5523 = vpop.f32.mrb[0].mxu0
  %v5524 = vadd.f32 0.0, %v5523
  %v5525 = vpop.f32.mrb[0].mxu0
  %5526 = vmatprep.mubr.f32.mxu0 0.0
  %5527 = vmatmul.mubr.f32.gmra.mrb[0].mxu0 %v3114
  %v5528 = vpop.f32.mrb[0].mxu0
  %v5529 = vadd.f32 0.0, %v5528
  %v5530 = vpop.f32.mrb[0].mxu0
  %5531 = vmatprep.mubr.f32.mxu0 0.0
  %5532 = vmatmul.mubr.f32.gmra.mrb[0].mxu0 %v3117
  %v5533 = vpop.f32.mrb[0].mxu0
  %v5534 = vadd.f32 0.0, %v5533
  %v5535 = vpop.f32.mrb[0].mxu0
  %5536 = vmatprep.mubr.f32.mxu0 0.0
  %5537 = vmatmul.mubr.f32.gmra.mrb[0].mxu0 %v3120
  %v5538 = vpop.f32.mrb[0].mxu0
  %v5539 = vadd.f32 0.0, %v5538
  %v5540 = vpop.f32.mrb[0].mxu0
  %5541 = vmatprep.mubr.f32.mxu0 0.0
  %5542 = vmatmul.mubr.f32.gmra.mrb[0].mxu0 %v3123
  %v5543 = vpop.f32.mrb[0].mxu0
  %v5544 = vadd.f32 0.0, %v5543
  %v5545 = vpop.f32.mrb[0].mxu0
  %5546 = vmatprep.mubr.f32.mxu0 0.0
  %5547 = vmatmul.mubr.f32.gmra.mrb[0].mxu0 %v3126
  %v5548 = vpop.f32.mrb[0].mxu0
  %v5549 = vadd.f32 0.0, %v5548
  %v5550 = vpop.f32.mrb[0].mxu0
  %5551 = vmatprep.mubr.f32.mxu0 0.0
  %5552 = vmatmul.mubr.f32.gmra.mrb[0].mxu0 %v3129
  %v5553 = vpop.f32.mrb[0].mxu0
  %v5554 = vadd.f32 0.0, %v5553
  %v5555 = vpop.f32.mrb[0].mxu0
  %5556 = vmatprep.mubr.f32.mxu0 0.0
  %5557 = vmatmul.mubr.f32.gmra.mrb[0].mxu0 %v3132
  %v5558 = vpop.f32.mrb[0].mxu0
  %v5559 = vadd.f32 0.0, %v5558
  %v5560 = vpop.f32.mrb[0].mxu0
  %5561 = vmatprep.mubr.f32.mxu0 0.0
  %5562 = vmatmul.mubr.f32.gmra.mrb[0].mxu0 %v3135
  %v5563 = vpop.f32.mrb[0].mxu0
  %v5564 = vadd.f32 0.0, %v5563
  %v5565 = vpop.f32.mrb[0].mxu0
  %5566 = vmatprep.mubr.f32.mxu0 0.0
  %5567 = vmatmul.mubr.f32.gmra.mrb[0].mxu0 %v3138
  %v5568 = vpop.f32.mrb[0].mxu0
  %v5569 = vadd.f32 0.0, %v5568
  %v5570 = vpop.f32.mrb[0].mxu0
  %5571 = vmatprep.mubr.f32.mxu0 0.0
  %5572 = vmatmul.mubr.f32.gmra.mrb[0].mxu0 %v3141
  %v5573 = vpop.f32.mrb[0].mxu0
  %v5574 = vadd.f32 0.0, %v5573
  %v5575 = vpop.f32.mrb[0].mxu0
  %5576 = vmatprep.mubr.f32.mxu0 0.0
  %5577 = vmatmul.mubr.f32.gmra.mrb[0].mxu0 %v3144
  %v5578 = vpop.f32.mrb[0].mxu0
  %v5579 = vadd.f32 0.0, %v5578
  %v5580 = vpop.f32.mrb[0].mxu0
  %5581 = vmatprep.mubr.f32.mxu0 0.0
  %5582 = vmatmul.mubr.f32.gmra.mrb[0].mxu0 %v3147
  %v5583 = vpop.f32.mrb[0].mxu0
  %v5584 = vadd.f32 0.0, %v5583
  %v5585 = vpop.f32.mrb[0].mxu0
  %5586 = vmatprep.mubr.f32.mxu0 0.0
  %5587 = vmatmul.mubr.f32.gmra.mrb[0].mxu0 %v3150
  %v5588 = vpop.f32.mrb[0].mxu0
  %v5589 = vadd.f32 0.0, %v5588
  %v5590 = vpop.f32.mrb[0].mxu0
  %5591 = vmatprep.mubr.f32.mxu0 0.0
  %5592 = vmatmul.mubr.f32.gmra.mrb[0].mxu0 %v3153
  %v5593 = vpop.f32.mrb[0].mxu0
  %v5594 = vadd.f32 0.0, %v5593
  %v5595 = vpop.f32.mrb[0].mxu0
  %5596 = vmatprep.mubr.f32.mxu0 0.0
  %5597 = vmatmul.mubr.f32.gmra.mrb[0].mxu0 %v3156
  %v5598 = vpop.f32.mrb[0].mxu0
  %v5599 = vadd.f32 0.0, %v5598
  %v5600 = vpop.f32.mrb[0].mxu0
  %5601 = vmatprep.mubr.f32.mxu0 0.0
  %5602 = vmatmul.mubr.f32.gmra.mrb[0].mxu0 %v3159
  %v5603 = vpop.f32.mrb[0].mxu0
  %v5604 = vadd.f32 0.0, %v5603
  %v5605 = vpop.f32.mrb[0].mxu0
  %5606 = vmatprep.mubr.f32.mxu0 0.0
  %5607 = vmatmul.mubr.f32.gmra.mrb[0].mxu0 %v3162
  %v5608 = vpop.f32.mrb[0].mxu0
  %v5609 = vadd.f32 0.0, %v5608
  %v5610 = vpop.f32.mrb[0].mxu0
  %5611 = vmatprep.mubr.f32.mxu0 0.0
  %5612 = vmatmul.mubr.f32.gmra.mrb[0].mxu0 %v3165
  %v5613 = vpop.f32.mrb[0].mxu0
  %v5614 = vadd.f32 0.0, %v5613
  %v5615 = vpop.f32.mrb[0].mxu0
  %5616 = vmatprep.mubr.f32.mxu0 0.0
  %5617 = vmatmul.mubr.f32.gmra.mrb[0].mxu0 %v3168
  %v5618 = vpop.f32.mrb[0].mxu0
  %v5619 = vadd.f32 0.0, %v5618
  %v5620 = vpop.f32.mrb[0].mxu0
  %5621 = vmatprep.mubr.f32.mxu0 0.0
  %5622 = vmatmul.mubr.f32.gmra.mrb[0].mxu0 %v3171
  %v5623 = vpop.f32.mrb[0].mxu0
  %v5624 = vadd.f32 0.0, %v5623
  %v5625 = vpop.f32.mrb[0].mxu0
  %5626 = vmatprep.mubr.f32.mxu0 0.0
  %5627 = vmatmul.mubr.f32.gmra.mrb[0].mxu0 %v3174
  %v5628 = vpop.f32.mrb[0].mxu0
  %v5629 = vadd.f32 0.0, %v5628
  %v5630 = vpop.f32.mrb[0].mxu0
  %5631 = vmatprep.mubr.f32.mxu0 0.0
  %5632 = vmatmul.mubr.f32.gmra.mrb[0].mxu0 %v3177
  %v5633 = vpop.f32.mrb[0].mxu0
  %v5634 = vadd.f32 0.0, %v5633
  %v5635 = vpop.f32.mrb[0].mxu0
  %5636 = vmatprep.mubr.f32.mxu0 0.0
  %5637 = vmatmul.mubr.f32.gmra.mrb[0].mxu0 %v3180
  %v5638 = vpop.f32.mrb[0].mxu0
  %v5639 = vadd.f32 0.0, %v5638
  %v5640 = vpop.f32.mrb[0].mxu0
  %5641 = vmatprep.mubr.f32.mxu0 0.0
  %5642 = vmatmul.mubr.f32.gmra.mrb[0].mxu0 %v3183
  %v5643 = vpop.f32.mrb[0].mxu0
  %v5644 = vadd.f32 0.0, %v5643
  %v5645 = vpop.f32.mrb[0].mxu0
  %5646 = vmatprep.mubr.f32.mxu0 0.0
  %5647 = vmatmul.mubr.f32.gmra.mrb[0].mxu0 %v3186
  %v5648 = vpop.f32.mrb[0].mxu0
  %v5649 = vadd.f32 0.0, %v5648
  %v5650 = vpop.f32.mrb[0].mxu0
  %5651 = vmatprep.mubr.f32.mxu0 0.0
  %5652 = vmatmul.mubr.f32.gmra.mrb[0].mxu0 %v3189
  %v5653 = vpop.f32.mrb[0].mxu0
  %v5654 = vadd.f32 0.0, %v5653
  %v5655 = vpop.f32.mrb[0].mxu0
  %5656 = vmatprep.mubr.f32.mxu0 0.0
  %5657 = vmatmul.mubr.f32.gmra.mrb[0].mxu0 %v3192
  %v5658 = vpop.f32.mrb[0].mxu0
  %v5659 = vadd.f32 0.0, %v5658
  %v5660 = vpop.f32.mrb[0].mxu0
  %5661 = vmatprep.mubr.f32.mxu0 0.0
  %5662 = vmatmul.mubr.f32.gmra.mrb[0].mxu0 %v3195
  %v5663 = vpop.f32.mrb[0].mxu0
  %v5664 = vadd.f32 0.0, %v5663
  %v5665 = vpop.f32.mrb[0].mxu0
  %5666 = vmatprep.mubr.f32.mxu0 0.0
  %5667 = vmatmul.mubr.f32.gmra.mrb[0].mxu0 %v3198
  %v5668 = vpop.f32.mrb[0].mxu0
  %v5669 = vadd.f32 0.0, %v5668
  %v5670 = vpop.f32.mrb[0].mxu0
  %5671 = vmatprep.mubr.f32.mxu0 0.0
  %5672 = vmatmul.mubr.f32.gmra.mrb[0].mxu0 %v3201
  %v5673 = vpop.f32.mrb[0].mxu0
  %v5674 = vadd.f32 0.0, %v5673
  %v5675 = vpop.f32.mrb[0].mxu0
  %5676 = vmatprep.mubr.f32.mxu0 0.0
  %5677 = vmatmul.mubr.f32.gmra.mrb[0].mxu0 %v3204
  %v5678 = vpop.f32.mrb[0].mxu0
  %v5679 = vadd.f32 0.0, %v5678
  %v5680 = vpop.f32.mrb[0].mxu0
  %5681 = vdwg.mxu0
  %v5682 = vadd.f32 %v5425, %v5524
  %v5683 = vadd.f32 %v5426, %v5529
  %v5684 = vadd.f32 %v5427, %v5534
  %v5685 = vadd.f32 %v5428, %v5539
  %v5686 = vadd.f32 %v5429, %v5544
  %v5687 = vadd.f32 %v5430, %v5549
  %v5688 = vadd.f32 %v5431, %v5554
  %v5689 = vadd.f32 %v5432, %v5559
  %v5690 = vadd.f32 %v5433, %v5564
  %v5691 = vadd.f32 %v5434, %v5569
  %v5692 = vadd.f32 %v5435, %v5574
  %v5693 = vadd.f32 %v5436, %v5579
  %v5694 = vadd.f32 %v5437, %v5584
  %v5695 = vadd.f32 %v5438, %v5589
  %v5696 = vadd.f32 %v5439, %v5594
  %v5697 = vadd.f32 %v5440, %v5599
  %v5698 = vadd.f32 %v5441, %v5604
  %v5699 = vadd.f32 %v5442, %v5609
  %v5700 = vadd.f32 %v5443, %v5614
  %v5701 = vadd.f32 %v5444, %v5619
  %v5702 = vadd.f32 %v5445, %v5624
  %v5703 = vadd.f32 %v5446, %v5629
  %v5704 = vadd.f32 %v5447, %v5634
  %v5705 = vadd.f32 %v5448, %v5639
  %v5706 = vadd.f32 %v5449, %v5644
  %v5707 = vadd.f32 %v5450, %v5649
  %v5708 = vadd.f32 %v5451, %v5654
  %v5709 = vadd.f32 %v5452, %v5659
  %v5710 = vadd.f32 %v5453, %v5664
  %v5711 = vadd.f32 %v5454, %v5669
  %v5712 = vadd.f32 %v5455, %v5674
  %v5713 = vadd.f32 %v5456, %v5679
  %v5714 = vld [vmem:[%s2685 + $0x1] sm:$0xff]
  %v5715 = vld [vmem:[%s2685 + $0x11] sm:$0xff]
  %v5716 = vld [vmem:[%s2685 + $0x21] sm:$0xff]
  %v5717 = vld [vmem:[%s2685 + $0x31] sm:$0xff]
  %v5718 = vld [vmem:[%s2685 + $0x41] sm:$0xff]
  %v5719 = vld [vmem:[%s2685 + $0x51] sm:$0xff]
  %v5720 = vld [vmem:[%s2685 + $0x61] sm:$0xff]
  %v5721 = vld [vmem:[%s2685 + $0x71] sm:$0xff]
  %v5722 = vld [vmem:[%s2685 + $0x81] sm:$0xff]
  %v5723 = vld [vmem:[%s2685 + $0x91] sm:$0xff]
  %v5724 = vld [vmem:[%s2685 + $0xa1] sm:$0xff]
  %v5725 = vld [vmem:[%s2685 + $0xb1] sm:$0xff]
  %v5726 = vld [vmem:[%s2685 + $0xc1] sm:$0xff]
  %v5727 = vld [vmem:[%s2685 + $0xd1] sm:$0xff]
  %v5728 = vld [vmem:[%s2685 + $0xe1] sm:$0xff]
  %v5729 = vld [vmem:[%s2685 + $0xf1] sm:$0xff]
  %v5730 = vld [vmem:[%s2685 + $0x121] sm:$0xff]
  %v5731 = vld [vmem:[%s2685 + $0x131] sm:$0xff]
  %v5732 = vld [vmem:[%s2685 + $0x141] sm:$0xff]
  %v5733 = vld [vmem:[%s2685 + $0x151] sm:$0xff]
  %v5734 = vld [vmem:[%s2685 + $0x161] sm:$0xff]
  %v5735 = vld [vmem:[%s2685 + $0x171] sm:$0xff]
  %v5736 = vld [vmem:[%s2685 + $0x181] sm:$0xff]
  %v5737 = vld [vmem:[%s2685 + $0x191] sm:$0xff]
  %v5738 = vld [vmem:[%s2685 + $0x1a1] sm:$0xff]
  %v5739 = vld [vmem:[%s2685 + $0x1b1] sm:$0xff]
  %v5740 = vld [vmem:[%s2685 + $0x1c1] sm:$0xff]
  %v5741 = vld [vmem:[%s2685 + $0x1d1] sm:$0xff]
  %v5742 = vld [vmem:[%s2685 + $0x1e1] sm:$0xff]
  %v5743 = vld [vmem:[%s2685 + $0x1f1] sm:$0xff]
  %v5744 = vld [vmem:[%s2685 + $0x201] sm:$0xff]
  %v5745 = vld [vmem:[%s2685 + $0x211] sm:$0xff]
  %v5747 = vsel %vm82, %v5714, 0
  %v5750 = vsel %vm82, %v5715, 0
  %v5753 = vsel %vm82, %v5716, 0
  %v5756 = vsel %vm82, %v5717, 0
  %v5759 = vsel %vm82, %v5718, 0
  %v5762 = vsel %vm82, %v5719, 0
  %v5765 = vsel %vm82, %v5720, 0
  %v5768 = vsel %vm82, %v5721, 0
  %v5771 = vsel %vm82, %v5722, 0
  %v5774 = vsel %vm82, %v5723, 0
  %v5777 = vsel %vm82, %v5724, 0
  %v5780 = vsel %vm82, %v5725, 0
  %v5783 = vsel %vm82, %v5726, 0
  %v5786 = vsel %vm82, %v5727, 0
  %v5789 = vsel %vm82, %v5728, 0
  %v5792 = vsel %vm82, %v5729, 0
  %v5795 = vsel %vm82, %v5730, 0
  %v5798 = vsel %vm82, %v5731, 0
  %v5801 = vsel %vm82, %v5732, 0
  %v5804 = vsel %vm82, %v5733, 0
  %v5807 = vsel %vm82, %v5734, 0
  %v5810 = vsel %vm82, %v5735, 0
  %v5813 = vsel %vm82, %v5736, 0
  %v5816 = vsel %vm82, %v5737, 0
  %v5819 = vsel %vm82, %v5738, 0
  %v5822 = vsel %vm82, %v5739, 0
  %v5825 = vsel %vm82, %v5740, 0
  %v5828 = vsel %vm82, %v5741, 0
  %v5831 = vsel %vm82, %v5742, 0
  %v5834 = vsel %vm82, %v5743, 0
  %v5837 = vsel %vm82, %v5744, 0
  %v5840 = vsel %vm82, %v5745, 0
  %5842 = vmatprep.subr.mxu0 0.0
  %5843 = vmatpush1.msra.mxu0 %v3207
  %5844 = vmatprep.subr.mxu0 0.0
  %5845 = vmatpush1.msra.mxu0 0.0
  %5846 = vmatprep.subr.mxu0 0.0
  %5847 = vmatpush1.msra.mxu0 0.0
  %5848 = vmatprep.subr.mxu0 0.0
  %5849 = vmatpush1.msra.mxu0 0.0
  %5850 = vmatprep.subr.mxu0 0.0
  %5851 = vmatpush1.msra.mxu0 0.0
  %5852 = vmatprep.subr.mxu0 0.0
  %5853 = vmatpush1.msra.mxu0 0.0
  %5854 = vmatprep.subr.mxu0 0.0
  %5855 = vmatpush1.msra.mxu0 0.0
  %5856 = vmatprep.subr.mxu0 0.0
  %5857 = vmatpush1.msra.mxu0 0.0
  %5858 = vmatprep.subr.mxu0 0.0
  %5859 = vmatpush1.msra.mxu0 0.0
  %5860 = vmatprep.subr.mxu0 0.0
  %5861 = vmatpush1.msra.mxu0 0.0
  %5862 = vmatprep.subr.mxu0 0.0
  %5863 = vmatpush1.msra.mxu0 0.0
  %5864 = vmatprep.subr.mxu0 0.0
  %5865 = vmatpush1.msra.mxu0 0.0
  %5866 = vmatprep.subr.mxu0 0.0
  %5867 = vmatpush1.msra.mxu0 0.0
  %5868 = vmatprep.subr.mxu0 0.0
  %5869 = vmatpush1.msra.mxu0 0.0
  %5870 = vmatprep.subr.mxu0 0.0
  %5871 = vmatpush1.msra.mxu0 0.0
  %5872 = vmatprep.subr.mxu0 0.0
  %5873 = vmatpush1.msra.mxu0 0.0
  %5874 = vmatprep.subr.mxu0 0.0
  %5875 = vmatpush1.msra.mxu0 0.0
  %5876 = vmatprep.subr.mxu0 0.0
  %5877 = vmatpush1.msra.mxu0 0.0
  %5878 = vmatprep.subr.mxu0 0.0
  %5879 = vmatpush1.msra.mxu0 0.0
  %5880 = vmatprep.subr.mxu0 0.0
  %5881 = vmatpush1.msra.mxu0 0.0
  %5882 = vmatprep.subr.mxu0 0.0
  %5883 = vmatpush1.msra.mxu0 0.0
  %5884 = vmatprep.subr.mxu0 0.0
  %5885 = vmatpush1.msra.mxu0 0.0
  %5886 = vmatprep.subr.mxu0 0.0
  %5887 = vmatpush1.msra.mxu0 0.0
  %5888 = vmatprep.subr.mxu0 0.0
  %5889 = vmatpush1.msra.mxu0 0.0
  %5890 = vmatprep.subr.mxu0 0.0
  %5891 = vmatpush1.msra.mxu0 0.0
  %5892 = vmatprep.subr.mxu0 0.0
  %5893 = vmatpush1.msra.mxu0 0.0
  %5894 = vmatprep.subr.mxu0 0.0
  %5895 = vmatpush1.msra.mxu0 0.0
  %5896 = vmatprep.subr.mxu0 0.0
  %5897 = vmatpush1.msra.mxu0 0.0
  %5898 = vmatprep.subr.mxu0 0.0
  %5899 = vmatpush1.msra.mxu0 0.0
  %5900 = vmatprep.subr.mxu0 0.0
  %5901 = vmatpush1.msra.mxu0 0.0
  %5902 = vmatprep.subr.mxu0 0.0
  %5903 = vmatpush1.msra.mxu0 0.0
  %5904 = vmatprep.subr.mxu0 0.0
  %5905 = vmatpush1.msra.mxu0 0.0
  %5906 = vmatprep.mubr.f32.mxu0 0.0
  %5907 = vmatmul.mubr.f32.gmra.mrb[0].mxu0 %v5747
  %v5908 = vpop.f32.mrb[0].mxu0
  %v5909 = vadd.f32 0.0, %v5908
  %v5910 = vpop.f32.mrb[0].mxu0
  %5911 = vmatprep.mubr.f32.mxu0 0.0
  %5912 = vmatmul.mubr.f32.gmra.mrb[0].mxu0 %v5750
  %v5913 = vpop.f32.mrb[0].mxu0
  %v5914 = vadd.f32 0.0, %v5913
  %v5915 = vpop.f32.mrb[0].mxu0
  %5916 = vmatprep.mubr.f32.mxu0 0.0
  %5917 = vmatmul.mubr.f32.gmra.mrb[0].mxu0 %v5753
  %v5918 = vpop.f32.mrb[0].mxu0
  %v5919 = vadd.f32 0.0, %v5918
  %v5920 = vpop.f32.mrb[0].mxu0
  %5921 = vmatprep.mubr.f32.mxu0 0.0
  %5922 = vmatmul.mubr.f32.gmra.mrb[0].mxu0 %v5756
  %v5923 = vpop.f32.mrb[0].mxu0
  %v5924 = vadd.f32 0.0, %v5923
  %v5925 = vpop.f32.mrb[0].mxu0
  %5926 = vmatprep.mubr.f32.mxu0 0.0
  %5927 = vmatmul.mubr.f32.gmra.mrb[0].mxu0 %v5759
  %v5928 = vpop.f32.mrb[0].mxu0
  %v5929 = vadd.f32 0.0, %v5928
  %v5930 = vpop.f32.mrb[0].mxu0
  %5931 = vmatprep.mubr.f32.mxu0 0.0
  %5932 = vmatmul.mubr.f32.gmra.mrb[0].mxu0 %v5762
  %v5933 = vpop.f32.mrb[0].mxu0
  %v5934 = vadd.f32 0.0, %v5933
  %v5935 = vpop.f32.mrb[0].mxu0
  %5936 = vmatprep.mubr.f32.mxu0 0.0
  %5937 = vmatmul.mubr.f32.gmra.mrb[0].mxu0 %v5765
  %v5938 = vpop.f32.mrb[0].mxu0
  %v5939 = vadd.f32 0.0, %v5938
  %v5940 = vpop.f32.mrb[0].mxu0
  %5941 = vmatprep.mubr.f32.mxu0 0.0
  %5942 = vmatmul.mubr.f32.gmra.mrb[0].mxu0 %v5768
  %v5943 = vpop.f32.mrb[0].mxu0
  %v5944 = vadd.f32 0.0, %v5943
  %v5945 = vpop.f32.mrb[0].mxu0
  %5946 = vmatprep.mubr.f32.mxu0 0.0
  %5947 = vmatmul.mubr.f32.gmra.mrb[0].mxu0 %v5771
  %v5948 = vpop.f32.mrb[0].mxu0
  %v5949 = vadd.f32 0.0, %v5948
  %v5950 = vpop.f32.mrb[0].mxu0
  %5951 = vmatprep.mubr.f32.mxu0 0.0
  %5952 = vmatmul.mubr.f32.gmra.mrb[0].mxu0 %v5774
  %v5953 = vpop.f32.mrb[0].mxu0
  %v5954 = vadd.f32 0.0, %v5953
  %v5955 = vpop.f32.mrb[0].mxu0
  %5956 = vmatprep.mubr.f32.mxu0 0.0
  %5957 = vmatmul.mubr.f32.gmra.mrb[0].mxu0 %v5777
  %v5958 = vpop.f32.mrb[0].mxu0
  %v5959 = vadd.f32 0.0, %v5958
  %v5960 = vpop.f32.mrb[0].mxu0
  %5961 = vmatprep.mubr.f32.mxu0 0.0
  %5962 = vmatmul.mubr.f32.gmra.mrb[0].mxu0 %v5780
  %v5963 = vpop.f32.mrb[0].mxu0
  %v5964 = vadd.f32 0.0, %v5963
  %v5965 = vpop.f32.mrb[0].mxu0
  %5966 = vmatprep.mubr.f32.mxu0 0.0
  %5967 = vmatmul.mubr.f32.gmra.mrb[0].mxu0 %v5783
  %v5968 = vpop.f32.mrb[0].mxu0
  %v5969 = vadd.f32 0.0, %v5968
  %v5970 = vpop.f32.mrb[0].mxu0
  %5971 = vmatprep.mubr.f32.mxu0 0.0
  %5972 = vmatmul.mubr.f32.gmra.mrb[0].mxu0 %v5786
  %v5973 = vpop.f32.mrb[0].mxu0
  %v5974 = vadd.f32 0.0, %v5973
  %v5975 = vpop.f32.mrb[0].mxu0
  %5976 = vmatprep.mubr.f32.mxu0 0.0
  %5977 = vmatmul.mubr.f32.gmra.mrb[0].mxu0 %v5789
  %v5978 = vpop.f32.mrb[0].mxu0
  %v5979 = vadd.f32 0.0, %v5978
  %v5980 = vpop.f32.mrb[0].mxu0
  %5981 = vmatprep.mubr.f32.mxu0 0.0
  %5982 = vmatmul.mubr.f32.gmra.mrb[0].mxu0 %v5792
  %v5983 = vpop.f32.mrb[0].mxu0
  %v5984 = vadd.f32 0.0, %v5983
  %v5985 = vpop.f32.mrb[0].mxu0
  %5986 = vmatprep.mubr.f32.mxu0 0.0
  %5987 = vmatmul.mubr.f32.gmra.mrb[0].mxu0 %v5795
  %v5988 = vpop.f32.mrb[0].mxu0
  %v5989 = vadd.f32 0.0, %v5988
  %v5990 = vpop.f32.mrb[0].mxu0
  %5991 = vmatprep.mubr.f32.mxu0 0.0
  %5992 = vmatmul.mubr.f32.gmra.mrb[0].mxu0 %v5798
  %v5993 = vpop.f32.mrb[0].mxu0
  %v5994 = vadd.f32 0.0, %v5993
  %v5995 = vpop.f32.mrb[0].mxu0
  %5996 = vmatprep.mubr.f32.mxu0 0.0
  %5997 = vmatmul.mubr.f32.gmra.mrb[0].mxu0 %v5801
  %v5998 = vpop.f32.mrb[0].mxu0
  %v5999 = vadd.f32 0.0, %v5998
  %v6000 = vpop.f32.mrb[0].mxu0
  %6001 = vmatprep.mubr.f32.mxu0 0.0
  %6002 = vmatmul.mubr.f32.gmra.mrb[0].mxu0 %v5804
  %v6003 = vpop.f32.mrb[0].mxu0
  %v6004 = vadd.f32 0.0, %v6003
  %v6005 = vpop.f32.mrb[0].mxu0
  %6006 = vmatprep.mubr.f32.mxu0 0.0
  %6007 = vmatmul.mubr.f32.gmra.mrb[0].mxu0 %v5807
  %v6008 = vpop.f32.mrb[0].mxu0
  %v6009 = vadd.f32 0.0, %v6008
  %v6010 = vpop.f32.mrb[0].mxu0
  %6011 = vmatprep.mubr.f32.mxu0 0.0
  %6012 = vmatmul.mubr.f32.gmra.mrb[0].mxu0 %v5810
  %v6013 = vpop.f32.mrb[0].mxu0
  %v6014 = vadd.f32 0.0, %v6013
  %v6015 = vpop.f32.mrb[0].mxu0
  %6016 = vmatprep.mubr.f32.mxu0 0.0
  %6017 = vmatmul.mubr.f32.gmra.mrb[0].mxu0 %v5813
  %v6018 = vpop.f32.mrb[0].mxu0
  %v6019 = vadd.f32 0.0, %v6018
  %v6020 = vpop.f32.mrb[0].mxu0
  %6021 = vmatprep.mubr.f32.mxu0 0.0
  %6022 = vmatmul.mubr.f32.gmra.mrb[0].mxu0 %v5816
  %v6023 = vpop.f32.mrb[0].mxu0
  %v6024 = vadd.f32 0.0, %v6023
  %v6025 = vpop.f32.mrb[0].mxu0
  %6026 = vmatprep.mubr.f32.mxu0 0.0
  %6027 = vmatmul.mubr.f32.gmra.mrb[0].mxu0 %v5819
  %v6028 = vpop.f32.mrb[0].mxu0
  %v6029 = vadd.f32 0.0, %v6028
  %v6030 = vpop.f32.mrb[0].mxu0
  %6031 = vmatprep.mubr.f32.mxu0 0.0
  %6032 = vmatmul.mubr.f32.gmra.mrb[0].mxu0 %v5822
  %v6033 = vpop.f32.mrb[0].mxu0
  %v6034 = vadd.f32 0.0, %v6033
  %v6035 = vpop.f32.mrb[0].mxu0
  %6036 = vmatprep.mubr.f32.mxu0 0.0
  %6037 = vmatmul.mubr.f32.gmra.mrb[0].mxu0 %v5825
  %v6038 = vpop.f32.mrb[0].mxu0
  %v6039 = vadd.f32 0.0, %v6038
  %v6040 = vpop.f32.mrb[0].mxu0
  %6041 = vmatprep.mubr.f32.mxu0 0.0
  %6042 = vmatmul.mubr.f32.gmra.mrb[0].mxu0 %v5828
  %v6043 = vpop.f32.mrb[0].mxu0
  %v6044 = vadd.f32 0.0, %v6043
  %v6045 = vpop.f32.mrb[0].mxu0
  %6046 = vmatprep.mubr.f32.mxu0 0.0
  %6047 = vmatmul.mubr.f32.gmra.mrb[0].mxu0 %v5831
  %v6048 = vpop.f32.mrb[0].mxu0
  %v6049 = vadd.f32 0.0, %v6048
  %v6050 = vpop.f32.mrb[0].mxu0
  %6051 = vmatprep.mubr.f32.mxu0 0.0
  %6052 = vmatmul.mubr.f32.gmra.mrb[0].mxu0 %v5834
  %v6053 = vpop.f32.mrb[0].mxu0
  %v6054 = vadd.f32 0.0, %v6053
  %v6055 = vpop.f32.mrb[0].mxu0
  %6056 = vmatprep.mubr.f32.mxu0 0.0
  %6057 = vmatmul.mubr.f32.gmra.mrb[0].mxu0 %v5837
  %v6058 = vpop.f32.mrb[0].mxu0
  %v6059 = vadd.f32 0.0, %v6058
  %v6060 = vpop.f32.mrb[0].mxu0
  %6061 = vmatprep.mubr.f32.mxu0 0.0
  %6062 = vmatmul.mubr.f32.gmra.mrb[0].mxu0 %v5840
  %v6063 = vpop.f32.mrb[0].mxu0
  %v6064 = vadd.f32 0.0, %v6063
  %v6065 = vpop.f32.mrb[0].mxu0
  %6066 = vdwg.mxu0
  %v6067 = vadd.f32 %v5682, %v5909
  %v6068 = vadd.f32 %v5683, %v5914
  %v6069 = vadd.f32 %v5684, %v5919
  %v6070 = vadd.f32 %v5685, %v5924
  %v6071 = vadd.f32 %v5686, %v5929
  %v6072 = vadd.f32 %v5687, %v5934
  %v6073 = vadd.f32 %v5688, %v5939
  %v6074 = vadd.f32 %v5689, %v5944
  %v6075 = vadd.f32 %v5690, %v5949
  %v6076 = vadd.f32 %v5691, %v5954
  %v6077 = vadd.f32 %v5692, %v5959
  %v6078 = vadd.f32 %v5693, %v5964
  %v6079 = vadd.f32 %v5694, %v5969
  %v6080 = vadd.f32 %v5695, %v5974
  %v6081 = vadd.f32 %v5696, %v5979
  %v6082 = vadd.f32 %v5697, %v5984
  %v6083 = vadd.f32 %v5698, %v5989
  %v6084 = vadd.f32 %v5699, %v5994
  %v6085 = vadd.f32 %v5700, %v5999
  %v6086 = vadd.f32 %v5701, %v6004
  %v6087 = vadd.f32 %v5702, %v6009
  %v6088 = vadd.f32 %v5703, %v6014
  %v6089 = vadd.f32 %v5704, %v6019
  %v6090 = vadd.f32 %v5705, %v6024
  %v6091 = vadd.f32 %v5706, %v6029
  %v6092 = vadd.f32 %v5707, %v6034
  %v6093 = vadd.f32 %v5708, %v6039
  %v6094 = vadd.f32 %v5709, %v6044
  %v6095 = vadd.f32 %v5710, %v6049
  %v6096 = vadd.f32 %v5711, %v6054
  %v6097 = vadd.f32 %v5712, %v6059
  %v6098 = vadd.f32 %v5713, %v6064
  %v6099 = vmax.f32 %v3434, %v6067
  %v6100 = vmax.f32 %v3435, %v6068
  %v6101 = vmax.f32 %v3436, %v6069
  %v6102 = vmax.f32 %v3437, %v6070
  %v6103 = vmax.f32 %v3438, %v6071
  %v6104 = vmax.f32 %v3439, %v6072
  %v6105 = vmax.f32 %v3440, %v6073
  %v6106 = vmax.f32 %v3441, %v6074
  %v6107 = vmax.f32 %v3442, %v6075
  %v6108 = vmax.f32 %v3443, %v6076
  %v6109 = vmax.f32 %v3444, %v6077
  %v6110 = vmax.f32 %v3445, %v6078
  %v6111 = vmax.f32 %v3446, %v6079
  %v6112 = vmax.f32 %v3447, %v6080
  %v6113 = vmax.f32 %v3448, %v6081
  %v6114 = vmax.f32 %v3449, %v6082
  %v6115 = vmax.f32 %v3450, %v6083
  %v6116 = vmax.f32 %v3451, %v6084
  %v6117 = vmax.f32 %v3452, %v6085
  %v6118 = vmax.f32 %v3453, %v6086
  %v6119 = vmax.f32 %v3454, %v6087
  %v6120 = vmax.f32 %v3455, %v6088
  %v6121 = vmax.f32 %v3456, %v6089
  %v6122 = vmax.f32 %v3457, %v6090
  %v6123 = vmax.f32 %v3458, %v6091
  %v6124 = vmax.f32 %v3459, %v6092
  %v6125 = vmax.f32 %v3460, %v6093
  %v6126 = vmax.f32 %v3461, %v6094
  %v6127 = vmax.f32 %v3462, %v6095
  %v6128 = vmax.f32 %v3463, %v6096
  %v6129 = vmax.f32 %v3464, %v6097
  %v6130 = vmax.f32 %v3465, %v6098
  %v6131 = vmax.f32 %v6099, %v6100
  %v6132 = vmax.f32 %v6101, %v6102
  %v6133 = vmax.f32 %v6103, %v6104
  %v6134 = vmax.f32 %v6105, %v6106
  %v6135 = vmax.f32 %v6107, %v6108
  %v6136 = vmax.f32 %v6109, %v6110
  %v6137 = vmax.f32 %v6111, %v6112
  %v6138 = vmax.f32 %v6113, %v6114
  %v6139 = vmax.f32 %v6115, %v6116
  %v6140 = vmax.f32 %v6117, %v6118
  %v6141 = vmax.f32 %v6119, %v6120
  %v6142 = vmax.f32 %v6121, %v6122
  %v6143 = vmax.f32 %v6123, %v6124
  %v6144 = vmax.f32 %v6125, %v6126
  %v6145 = vmax.f32 %v6127, %v6128
  %v6146 = vmax.f32 %v6129, %v6130
  %v6147 = vld [vmem:[%s2] sm:$0x1]
  %v6149 = vlaneseq
  %v6150 = vshrl.u32 %v6149, 7
  %v6151 = vsub.s32 0, %v6150
  %v6152 = vrot.slane %v6147, %v6151
  %v6154 = vadd.f32 %v6131, %v6152
  %v6155 = vadd.f32 %v6132, %v6152
  %v6156 = vadd.f32 %v6133, %v6152
  %v6157 = vadd.f32 %v6134, %v6152
  %v6158 = vadd.f32 %v6135, %v6152
  %v6159 = vadd.f32 %v6136, %v6152
  %v6160 = vadd.f32 %v6137, %v6152
  %v6161 = vadd.f32 %v6138, %v6152
  %v6162 = vadd.f32 %v6139, %v6152
  %v6163 = vadd.f32 %v6140, %v6152
  %v6164 = vadd.f32 %v6141, %v6152
  %v6165 = vadd.f32 %v6142, %v6152
  %v6166 = vadd.f32 %v6143, %v6152
  %v6167 = vadd.f32 %v6144, %v6152
  %v6168 = vadd.f32 %v6145, %v6152
  %v6169 = vadd.f32 %v6146, %v6152
  %v6170 = vmax.f32 %v6154, 0.0
  %v6171 = vmax.f32 %v6155, 0.0
  %v6172 = vmax.f32 %v6156, 0.0
  %v6173 = vmax.f32 %v6157, 0.0
  %v6174 = vmax.f32 %v6158, 0.0
  %v6175 = vmax.f32 %v6159, 0.0
  %v6176 = vmax.f32 %v6160, 0.0
  %v6177 = vmax.f32 %v6161, 0.0
  %v6178 = vmax.f32 %v6162, 0.0
  %v6179 = vmax.f32 %v6163, 0.0
  %v6180 = vmax.f32 %v6164, 0.0
  %v6181 = vmax.f32 %v6165, 0.0
  %v6182 = vmax.f32 %v6166, 0.0
  %v6183 = vmax.f32 %v6167, 0.0
  %v6184 = vmax.f32 %v6168, 0.0
  %v6185 = vmax.f32 %v6169, 0.0
  %vm6186 = vcmask 64512
  %6187 = vst.msk [vmem:[%s3] sm:$0xff] %vm6186, %v6170
  %6188 = vst.msk [vmem:[%s3 + $0x8] sm:$0xff] %vm6186, %v6171
  %6189 = vst.msk [vmem:[%s3 + $0x10] sm:$0xff] %vm6186, %v6172
  %6190 = vst.msk [vmem:[%s3 + $0x18] sm:$0xff] %vm6186, %v6173
  %6191 = vst.msk [vmem:[%s3 + $0x20] sm:$0xff] %vm6186, %v6174
  %6192 = vst.msk [vmem:[%s3 + $0x28] sm:$0xff] %vm6186, %v6175
  %6193 = vst.msk [vmem:[%s3 + $0x30] sm:$0xff] %vm6186, %v6176
  %6194 = vst.msk [vmem:[%s3 + $0x38] sm:$0xff] %vm6186, %v6177
  %6195 = vst.msk [vmem:[%s3 + $0x40] sm:$0xff] %vm6186, %v6178
  %6196 = vst.msk [vmem:[%s3 + $0x48] sm:$0xff] %vm6186, %v6179
  %6197 = vst.msk [vmem:[%s3 + $0x50] sm:$0xff] %vm6186, %v6180
  %6198 = vst.msk [vmem:[%s3 + $0x58] sm:$0xff] %vm6186, %v6181
  %6199 = vst.msk [vmem:[%s3 + $0x60] sm:$0xff] %vm6186, %v6182
  %6200 = vst.msk [vmem:[%s3 + $0x68] sm:$0xff] %vm6186, %v6183
  %6201 = vst.msk [vmem:[%s3 + $0x70] sm:$0xff] %vm6186, %v6184
  %6202 = vst.msk [vmem:[%s3 + $0x78] sm:$0xff] %vm6186, %v6185
  // Predicated region
  $region14: #{conv_block_down.1} parent=0 // pred_check
    _
  $region15: #{conv_block_down.1} parent=0 // pred_check_branch
    %6204 = sbr.rel (0) target = $region17
  $region16: #{conv_block_down.1} parent=0 // pred_region
    _
  $region17: #{conv_block_down.1} parent=0 // pred_fallthru
    _
  // Predicated region
  $region18: #{conv_block_down.1} parent=0 // pred_check
    _
  $region19: #{conv_block_down.1} parent=0 // pred_check_branch
    %6206 = sbr.rel (0) target = $region21
  $region20: #{conv_block_down.1} parent=0 // pred_region
    _
  $region21: #{conv_block_down.1} parent=0 // pred_fallthru
    _

</llo_original>
